<compile_context>
chip_gen: v7x
topology: tpu7x:2x2x1
jax: 0.10.0
libtpu: 0.0.40
codegen_flags: <defaults>
</compile_context>

<pallas_src>
import math

import jax
import jax.numpy as jnp
from jax.experimental import pallas as pl
from jax.experimental.pallas import tpu as pltpu


# ----------------------------------------------------------------------------
# Fused PerceiverIO kernel (one batch element per grid step, everything in VMEM)
# ----------------------------------------------------------------------------
def _make_kernel(pidx):
    """pidx maps parameter name -> position in the packed parameter tuple."""

    def kernel(x_ref, *refs):
        out_ref = refs[-1]
        prm = refs[:-1]

        def P(name):
            return prm[pidx[name]][...].astype(jnp.float32)

        # ---- in-kernel building blocks (all operate on 2-D f32 arrays) ----
        def layernorm(x, name):
            mu = jnp.mean(x, axis=-1, keepdims=True)
            var = jnp.mean((x - mu) ** 2, axis=-1, keepdims=True)
            return (x - mu) * jax.lax.rsqrt(var + 1e-5) * P(name + "_g") + P(name + "_b")

        def dense(x, name, act=None):
            y = jnp.dot(x, P(name + "_w"),
                        preferred_element_type=jnp.float32) + P(name + "_b")
            if act == "gelu":
                # TODO(synk): PyTorch nn.GELU defaults to exact erf; tanh approx here.
                y = jax.nn.gelu(y)
            return y

        def sdpa(q, k, v):
            scale = 1.0 / math.sqrt(q.shape[-1])
            s = jnp.dot(q, k.T, preferred_element_type=jnp.float32) * scale
            m = jnp.max(s, axis=-1, keepdims=True)
            e = jnp.exp(s - m)
            l = jnp.sum(e, axis=-1, keepdims=True)
            o = jnp.dot(e, v, preferred_element_type=jnp.float32)
            return o * pl.reciprocal(l, approx=True)   # EUP rcp, keeps VALU free

        def cross_attn(xq, xkv, name):
            q = dense(xq, name + "_q")
            kv = dense(xkv, name + "_kv")              # fused K|V projection
            dh = kv.shape[-1] // 2
            o = sdpa(q, kv[:, :dh], kv[:, dh:])
            return dense(o, name + "_o")

        def self_attn(x, name):
            qkv = dense(x, name + "_qkv")              # fused Q|K|V projection
            dh = qkv.shape[-1] // 3
            o = sdpa(qkv[:, :dh], qkv[:, dh:2 * dh], qkv[:, 2 * dh:])
            return dense(o, name + "_o")

        def mlp(x, name):
            h = layernorm(x, name + "_ln")
            return dense(dense(h, name + "_fc1", act="gelu"), name + "_fc2")

        # ---- one batch element ----
        x = x_ref[0].astype(jnp.float32)               # (M, C_in)

        # encoder: latents cross-attend to inputs, then latent self-attention
        lat = P("latents")                             # (N, D)
        lat = lat + cross_attn(layernorm(lat, "enc_ca_lnq"),
                               layernorm(x, "enc_ca_lnkv"), "enc_ca")
        lat = lat + mlp(lat, "enc_ca_mlp")
        lat = lat + self_attn(layernorm(lat, "enc_sa_ln"), "enc_sa")
        lat = lat + mlp(lat, "enc_sa_mlp")

        # query generator: transformer block with sinusoidal positional encoding
        xq = x + P("qg_pe")
        xq = xq + self_attn(layernorm(xq, "qg_ln"), "qg_sa")
        xq = xq + mlp(xq, "qg_mlp")
        query = dense(xq, "qg_out")                    # (M, Dq)

        # decoder: queries cross-attend to latents + output projection
        y = query + cross_attn(layernorm(query, "dec_lnq"),
                               layernorm(lat, "dec_lnkv"), "dec_ca")
        y = dense(y, "dec_out")                        # (M, D_out)

        out_ref[0] = y.astype(out_ref.dtype)

    return kernel


def build_forward(pidx, d_out):
    kernel = _make_kernel(pidx)

    @jax.jit
    def forward(inputs, params):
        B, M, C = inputs.shape
        in_specs = [pl.BlockSpec((1, M, C), lambda b: (b, 0, 0))]
        # every packed parameter is a small 2-D array, kept whole in VMEM
        in_specs += [pl.BlockSpec(p.shape, lambda b: (0, 0)) for p in params]
        return pl.pallas_call(
            kernel,
            out_shape=jax.ShapeDtypeStruct((B, M, d_out), inputs.dtype),
            grid=(B,),
            in_specs=in_specs,
            out_specs=pl.BlockSpec((1, M, d_out), lambda b: (b, 0, 0)),
            compiler_params=pltpu.CompilerParams(
                dimension_semantics=("parallel",)),   # batch across TCs on v7x
        )(inputs, *params)

    return forward


# ----------------------------------------------------------------------------
# Parameter init (deterministic, synthetic) — mirrors the PyTorch module layout
# ----------------------------------------------------------------------------
def init_params(key, *, n_latents, d, d_in, d_q, d_out, mlp_mult=4):
    p = {}

    def nxt():
        nonlocal key
        key, sub = jax.random.split(key)
        return sub

    def dense(name, din, dout):
        p[name + "_w"] = 0.02 * jax.random.normal(nxt(), (din, dout), jnp.float32)
        p[name + "_b"] = jnp.zeros((dout,), jnp.float32)

    def ln(name, dim):
        p[name + "_g"] = jnp.ones((dim,), jnp.float32)
        p[name + "_b"] = jnp.zeros((dim,), jnp.float32)

    def attn(name, dq_in, dkv_in, dh, dq_out):
        dense(name + "_q", dq_in, dh)
        dense(name + "_k", dkv_in, dh)
        dense(name + "_v", dkv_in, dh)
        dense(name + "_o", dh, dq_out)

    def mlp(name, dim):
        ln(name + "_ln", dim)
        dense(name + "_fc1", dim, mlp_mult * dim)
        dense(name + "_fc2", mlp_mult * dim, dim)

    # encoder
    p["latents"] = 0.02 * jax.random.normal(nxt(), (n_latents, d), jnp.float32)
    ln("enc_ca_lnq", d)
    ln("enc_ca_lnkv", d_in)
    attn("enc_ca", d, d_in, d, d)
    mlp("enc_ca_mlp", d)
    ln("enc_sa_ln", d)
    attn("enc_sa", d, d, d, d)
    mlp("enc_sa_mlp", d)

    # query generator (transformer + positional encoding)
    ln("qg_ln", d_in)
    attn("qg_sa", d_in, d_in, d_in, d_in)
    mlp("qg_mlp", d_in)
    dense("qg_out", d_in, d_q)

    # decoder
    ln("dec_lnq", d_q)
    ln("dec_lnkv", d)
    attn("dec_ca", d_q, d, d, d_q)
    dense("dec_out", d_q, d_out)
    return p


def sinusoid_pe(length, dim):
    pos = jnp.arange(length, dtype=jnp.float32)[:, None]
    i = jnp.arange(dim // 2, dtype=jnp.float32)[None, :]
    angle = pos / jnp.power(10000.0, 2.0 * i / dim)
    return jnp.concatenate([jnp.sin(angle), jnp.cos(angle)], axis=-1)  # (L, dim)


def pack_params(p, seq_len, c_in):
    """Fuse K|V and Q|K|V weights, promote 1-D params to (1, d) lane rows,
    bake in the sinusoidal PE, and return an ordered tuple + name->index map."""
    names, arrays = [], []

    def add(name, arr):
        names.append(name)
        arrays.append(jnp.asarray(arr, jnp.float32))

    def add_row(name):                       # 1-D param -> (1, d)
        add(name, p[name].reshape(1, -1))

    def add_ln(name):
        add_row(name + "_g")
        add_row(name + "_b")

    def add_dense(name):
        add(name + "_w", p[name + "_w"])
        add_row(name + "_b")

    def add_fused(dst, srcs):
        add(dst + "_w", jnp.concatenate([p[s + "_w"] for s in srcs], axis=1))
        add(dst + "_b",
            jnp.concatenate([p[s + "_b"] for s in srcs], axis=0).reshape(1, -1))

    def add_mlp(name):
        add_ln(name + "_ln")
        add_dense(name + "_fc1")
        add_dense(name + "_fc2")

    add("latents", p["latents"])
    add_ln("enc_ca_lnq")
    add_ln("enc_ca_lnkv")
    add_dense("enc_ca_q")
    add_fused("enc_ca_kv", ["enc_ca_k", "enc_ca_v"])
    add_dense("enc_ca_o")
    add_mlp("enc_ca_mlp")
    add_ln("enc_sa_ln")
    add_fused("enc_sa_qkv", ["enc_sa_q", "enc_sa_k", "enc_sa_v"])
    add_dense("enc_sa_o")
    add_mlp("enc_sa_mlp")

    add("qg_pe", sinusoid_pe(seq_len, c_in))
    add_ln("qg_ln")
    add_fused("qg_sa_qkv", ["qg_sa_q", "qg_sa_k", "qg_sa_v"])
    add_dense("qg_sa_o")
    add_mlp("qg_mlp")
    add_dense("qg_out")

    add_ln("dec_lnq")
    add_ln("dec_lnkv")
    add_dense("dec_ca_q")
    add_fused("dec_ca_kv", ["dec_ca_k", "dec_ca_v"])
    add_dense("dec_ca_o")
    add_dense("dec_out")

    pidx = {n: i for i, n in enumerate(names)}
    return tuple(arrays), pidx


# ----------------------------------------------------------------------------
if __name__ == "__main__":
    B, M, C_IN = 2, 16, 32          # batch, input positions, input channels
    N_LAT, D_LAT = 8, 32            # latent array
    D_Q, D_OUT = 32, 32             # decoder query dim / output dim

    key = jax.random.PRNGKey(0)
    k_param, k_in = jax.random.split(key)
    raw_params = init_params(k_param, n_latents=N_LAT, d=D_LAT, d_in=C_IN,
                             d_q=D_Q, d_out=D_OUT)
    params, pidx = pack_params(raw_params, M, C_IN)
    inputs = jax.random.normal(k_in, (B, M, C_IN), jnp.float32)

    forward = build_forward(pidx, D_OUT)
    out = forward(inputs, params)
    out = jax.block_until_ready(out)
    assert out.shape == (B, M, D_OUT), out.shape
    assert bool(jnp.all(jnp.isfinite(out)))
    print("KERNEL_OK")
</pallas_src>

<mosaic_0001>
module attributes {stable_mosaic.version = 11 : i64} {
  func.func @kernel(%arg0: i32, %arg1: memref<1x16x32xf32, #tpu.memory_space<vmem>>, %arg2: memref<8x32xf32, #tpu.memory_space<vmem>>, %arg3: memref<1x32xf32, #tpu.memory_space<vmem>>, %arg4: memref<1x32xf32, #tpu.memory_space<vmem>>, %arg5: memref<1x32xf32, #tpu.memory_space<vmem>>, %arg6: memref<1x32xf32, #tpu.memory_space<vmem>>, %arg7: memref<32x32xf32, #tpu.memory_space<vmem>>, %arg8: memref<1x32xf32, #tpu.memory_space<vmem>>, %arg9: memref<32x64xf32, #tpu.memory_space<vmem>>, %arg10: memref<1x64xf32, #tpu.memory_space<vmem>>, %arg11: memref<32x32xf32, #tpu.memory_space<vmem>>, %arg12: memref<1x32xf32, #tpu.memory_space<vmem>>, %arg13: memref<1x32xf32, #tpu.memory_space<vmem>>, %arg14: memref<1x32xf32, #tpu.memory_space<vmem>>, %arg15: memref<32x128xf32, #tpu.memory_space<vmem>>, %arg16: memref<1x128xf32, #tpu.memory_space<vmem>>, %arg17: memref<128x32xf32, #tpu.memory_space<vmem>>, %arg18: memref<1x32xf32, #tpu.memory_space<vmem>>, %arg19: memref<1x32xf32, #tpu.memory_space<vmem>>, %arg20: memref<1x32xf32, #tpu.memory_space<vmem>>, %arg21: memref<32x96xf32, #tpu.memory_space<vmem>>, %arg22: memref<1x96xf32, #tpu.memory_space<vmem>>, %arg23: memref<32x32xf32, #tpu.memory_space<vmem>>, %arg24: memref<1x32xf32, #tpu.memory_space<vmem>>, %arg25: memref<1x32xf32, #tpu.memory_space<vmem>>, %arg26: memref<1x32xf32, #tpu.memory_space<vmem>>, %arg27: memref<32x128xf32, #tpu.memory_space<vmem>>, %arg28: memref<1x128xf32, #tpu.memory_space<vmem>>, %arg29: memref<128x32xf32, #tpu.memory_space<vmem>>, %arg30: memref<1x32xf32, #tpu.memory_space<vmem>>, %arg31: memref<16x32xf32, #tpu.memory_space<vmem>>, %arg32: memref<1x32xf32, #tpu.memory_space<vmem>>, %arg33: memref<1x32xf32, #tpu.memory_space<vmem>>, %arg34: memref<32x96xf32, #tpu.memory_space<vmem>>, %arg35: memref<1x96xf32, #tpu.memory_space<vmem>>, %arg36: memref<32x32xf32, #tpu.memory_space<vmem>>, %arg37: memref<1x32xf32, #tpu.memory_space<vmem>>, %arg38: memref<1x32xf32, #tpu.memory_space<vmem>>, %arg39: memref<1x32xf32, #tpu.memory_space<vmem>>, %arg40: memref<32x128xf32, #tpu.memory_space<vmem>>, %arg41: memref<1x128xf32, #tpu.memory_space<vmem>>, %arg42: memref<128x32xf32, #tpu.memory_space<vmem>>, %arg43: memref<1x32xf32, #tpu.memory_space<vmem>>, %arg44: memref<32x32xf32, #tpu.memory_space<vmem>>, %arg45: memref<1x32xf32, #tpu.memory_space<vmem>>, %arg46: memref<1x32xf32, #tpu.memory_space<vmem>>, %arg47: memref<1x32xf32, #tpu.memory_space<vmem>>, %arg48: memref<1x32xf32, #tpu.memory_space<vmem>>, %arg49: memref<1x32xf32, #tpu.memory_space<vmem>>, %arg50: memref<32x32xf32, #tpu.memory_space<vmem>>, %arg51: memref<1x32xf32, #tpu.memory_space<vmem>>, %arg52: memref<32x64xf32, #tpu.memory_space<vmem>>, %arg53: memref<1x64xf32, #tpu.memory_space<vmem>>, %arg54: memref<32x32xf32, #tpu.memory_space<vmem>>, %arg55: memref<1x32xf32, #tpu.memory_space<vmem>>, %arg56: memref<32x32xf32, #tpu.memory_space<vmem>>, %arg57: memref<1x32xf32, #tpu.memory_space<vmem>>, %arg58: memref<1x16x32xf32, #tpu.memory_space<vmem>>) attributes {dimension_semantics = [#tpu.dimension_semantics<parallel>], iteration_bounds = array<i64: 2>, scalar_prefetch = 0 : i64, scratch_operands = 0 : i64, tpu.core_type = #tpu.core_type<tc>, window_params = [{transform_indices = @transform_0, window_bounds = array<i64: 1, 16, 32>}, {pipeline_mode = #tpu.pipeline_mode<synchronous>, transform_indices = @transform_1, window_bounds = array<i64: 8, 32>}, {pipeline_mode = #tpu.pipeline_mode<synchronous>, transform_indices = @transform_2, window_bounds = array<i64: 1, 32>}, {pipeline_mode = #tpu.pipeline_mode<synchronous>, transform_indices = @transform_3, window_bounds = array<i64: 1, 32>}, {pipeline_mode = #tpu.pipeline_mode<synchronous>, transform_indices = @transform_4, window_bounds = array<i64: 1, 32>}, {pipeline_mode = #tpu.pipeline_mode<synchronous>, transform_indices = @transform_5, window_bounds = array<i64: 1, 32>}, {pipeline_mode = #tpu.pipeline_mode<synchronous>, transform_indices = @transform_6, window_bounds = array<i64: 32, 32>}, {pipeline_mode = #tpu.pipeline_mode<synchronous>, transform_indices = @transform_7, window_bounds = array<i64: 1, 32>}, {pipeline_mode = #tpu.pipeline_mode<synchronous>, transform_indices = @transform_8, window_bounds = array<i64: 32, 64>}, {pipeline_mode = #tpu.pipeline_mode<synchronous>, transform_indices = @transform_9, window_bounds = array<i64: 1, 64>}, {pipeline_mode = #tpu.pipeline_mode<synchronous>, transform_indices = @transform_10, window_bounds = array<i64: 32, 32>}, {pipeline_mode = #tpu.pipeline_mode<synchronous>, transform_indices = @transform_11, window_bounds = array<i64: 1, 32>}, {pipeline_mode = #tpu.pipeline_mode<synchronous>, transform_indices = @transform_12, window_bounds = array<i64: 1, 32>}, {pipeline_mode = #tpu.pipeline_mode<synchronous>, transform_indices = @transform_13, window_bounds = array<i64: 1, 32>}, {pipeline_mode = #tpu.pipeline_mode<synchronous>, transform_indices = @transform_14, window_bounds = array<i64: 32, 128>}, {pipeline_mode = #tpu.pipeline_mode<synchronous>, transform_indices = @transform_15, window_bounds = array<i64: 1, 128>}, {pipeline_mode = #tpu.pipeline_mode<synchronous>, transform_indices = @transform_16, window_bounds = array<i64: 128, 32>}, {pipeline_mode = #tpu.pipeline_mode<synchronous>, transform_indices = @transform_17, window_bounds = array<i64: 1, 32>}, {pipeline_mode = #tpu.pipeline_mode<synchronous>, transform_indices = @transform_18, window_bounds = array<i64: 1, 32>}, {pipeline_mode = #tpu.pipeline_mode<synchronous>, transform_indices = @transform_19, window_bounds = array<i64: 1, 32>}, {pipeline_mode = #tpu.pipeline_mode<synchronous>, transform_indices = @transform_20, window_bounds = array<i64: 32, 96>}, {pipeline_mode = #tpu.pipeline_mode<synchronous>, transform_indices = @transform_21, window_bounds = array<i64: 1, 96>}, {pipeline_mode = #tpu.pipeline_mode<synchronous>, transform_indices = @transform_22, window_bounds = array<i64: 32, 32>}, {pipeline_mode = #tpu.pipeline_mode<synchronous>, transform_indices = @transform_23, window_bounds = array<i64: 1, 32>}, {pipeline_mode = #tpu.pipeline_mode<synchronous>, transform_indices = @transform_24, window_bounds = array<i64: 1, 32>}, {pipeline_mode = #tpu.pipeline_mode<synchronous>, transform_indices = @transform_25, window_bounds = array<i64: 1, 32>}, {pipeline_mode = #tpu.pipeline_mode<synchronous>, transform_indices = @transform_26, window_bounds = array<i64: 32, 128>}, {pipeline_mode = #tpu.pipeline_mode<synchronous>, transform_indices = @transform_27, window_bounds = array<i64: 1, 128>}, {pipeline_mode = #tpu.pipeline_mode<synchronous>, transform_indices = @transform_28, window_bounds = array<i64: 128, 32>}, {pipeline_mode = #tpu.pipeline_mode<synchronous>, transform_indices = @transform_29, window_bounds = array<i64: 1, 32>}, {pipeline_mode = #tpu.pipeline_mode<synchronous>, transform_indices = @transform_30, window_bounds = array<i64: 16, 32>}, {pipeline_mode = #tpu.pipeline_mode<synchronous>, transform_indices = @transform_31, window_bounds = array<i64: 1, 32>}, {pipeline_mode = #tpu.pipeline_mode<synchronous>, transform_indices = @transform_32, window_bounds = array<i64: 1, 32>}, {pipeline_mode = #tpu.pipeline_mode<synchronous>, transform_indices = @transform_33, window_bounds = array<i64: 32, 96>}, {pipeline_mode = #tpu.pipeline_mode<synchronous>, transform_indices = @transform_34, window_bounds = array<i64: 1, 96>}, {pipeline_mode = #tpu.pipeline_mode<synchronous>, transform_indices = @transform_35, window_bounds = array<i64: 32, 32>}, {pipeline_mode = #tpu.pipeline_mode<synchronous>, transform_indices = @transform_36, window_bounds = array<i64: 1, 32>}, {pipeline_mode = #tpu.pipeline_mode<synchronous>, transform_indices = @transform_37, window_bounds = array<i64: 1, 32>}, {pipeline_mode = #tpu.pipeline_mode<synchronous>, transform_indices = @transform_38, window_bounds = array<i64: 1, 32>}, {pipeline_mode = #tpu.pipeline_mode<synchronous>, transform_indices = @transform_39, window_bounds = array<i64: 32, 128>}, {pipeline_mode = #tpu.pipeline_mode<synchronous>, transform_indices = @transform_40, window_bounds = array<i64: 1, 128>}, {pipeline_mode = #tpu.pipeline_mode<synchronous>, transform_indices = @transform_41, window_bounds = array<i64: 128, 32>}, {pipeline_mode = #tpu.pipeline_mode<synchronous>, transform_indices = @transform_42, window_bounds = array<i64: 1, 32>}, {pipeline_mode = #tpu.pipeline_mode<synchronous>, transform_indices = @transform_43, window_bounds = array<i64: 32, 32>}, {pipeline_mode = #tpu.pipeline_mode<synchronous>, transform_indices = @transform_44, window_bounds = array<i64: 1, 32>}, {pipeline_mode = #tpu.pipeline_mode<synchronous>, transform_indices = @transform_45, window_bounds = array<i64: 1, 32>}, {pipeline_mode = #tpu.pipeline_mode<synchronous>, transform_indices = @transform_46, window_bounds = array<i64: 1, 32>}, {pipeline_mode = #tpu.pipeline_mode<synchronous>, transform_indices = @transform_47, window_bounds = array<i64: 1, 32>}, {pipeline_mode = #tpu.pipeline_mode<synchronous>, transform_indices = @transform_48, window_bounds = array<i64: 1, 32>}, {pipeline_mode = #tpu.pipeline_mode<synchronous>, transform_indices = @transform_49, window_bounds = array<i64: 32, 32>}, {pipeline_mode = #tpu.pipeline_mode<synchronous>, transform_indices = @transform_50, window_bounds = array<i64: 1, 32>}, {pipeline_mode = #tpu.pipeline_mode<synchronous>, transform_indices = @transform_51, window_bounds = array<i64: 32, 64>}, {pipeline_mode = #tpu.pipeline_mode<synchronous>, transform_indices = @transform_52, window_bounds = array<i64: 1, 64>}, {pipeline_mode = #tpu.pipeline_mode<synchronous>, transform_indices = @transform_53, window_bounds = array<i64: 32, 32>}, {pipeline_mode = #tpu.pipeline_mode<synchronous>, transform_indices = @transform_54, window_bounds = array<i64: 1, 32>}, {pipeline_mode = #tpu.pipeline_mode<synchronous>, transform_indices = @transform_55, window_bounds = array<i64: 32, 32>}, {pipeline_mode = #tpu.pipeline_mode<synchronous>, transform_indices = @transform_56, window_bounds = array<i64: 1, 32>}, {transform_indices = @transform_57, window_bounds = array<i64: 1, 16, 32>}]} {
    %c0 = arith.constant 0 : index
    %c0_0 = arith.constant 0 : index
    %c0_1 = arith.constant 0 : index
    %0 = vector.load %arg1[%c0, %c0_0, %c0_1] : memref<1x16x32xf32, #tpu.memory_space<vmem>>, vector<1x16x32xf32>
    %1 = vector.shape_cast %0 : vector<1x16x32xf32> to vector<16x32xf32>
    %c0_2 = arith.constant 0 : index
    %c0_3 = arith.constant 0 : index
    %2 = vector.load %arg2[%c0_2, %c0_3] : memref<8x32xf32, #tpu.memory_space<vmem>>, vector<8x32xf32>
    %cst = arith.constant dense<0.000000e+00> : vector<8xf32>
    %3 = vector.multi_reduction <add>, %2, %cst [1] : vector<8x32xf32> to vector<8xf32>
    %4 = vector.shape_cast %3 : vector<8xf32> to vector<8x1xf32>
    %cst_4 = arith.constant 3.200000e+01 : f32
    %5 = vector.broadcast %cst_4 : f32 to vector<8x1xf32>
    %6 = arith.divf %4, %5 : vector<8x1xf32>
    %7 = vector.broadcast %6 : vector<8x1xf32> to vector<8x32xf32>
    %8 = arith.subf %2, %7 : vector<8x32xf32>
    %9 = arith.mulf %8, %8 : vector<8x32xf32>
    %cst_5 = arith.constant dense<0.000000e+00> : vector<8xf32>
    %10 = vector.multi_reduction <add>, %9, %cst_5 [1] : vector<8x32xf32> to vector<8xf32>
    %11 = vector.shape_cast %10 : vector<8xf32> to vector<8x1xf32>
    %cst_6 = arith.constant 3.200000e+01 : f32
    %12 = vector.broadcast %cst_6 : f32 to vector<8x1xf32>
    %13 = arith.divf %11, %12 : vector<8x1xf32>
    %14 = vector.broadcast %6 : vector<8x1xf32> to vector<8x32xf32>
    %15 = arith.subf %2, %14 : vector<8x32xf32>
    %cst_7 = arith.constant 9.99999974E-6 : f32
    %16 = vector.broadcast %cst_7 : f32 to vector<8x1xf32>
    %17 = arith.addf %13, %16 : vector<8x1xf32>
    %18 = math.rsqrt %17 : vector<8x1xf32>
    %19 = vector.broadcast %18 : vector<8x1xf32> to vector<8x32xf32>
    %20 = arith.mulf %15, %19 : vector<8x32xf32>
    %c0_8 = arith.constant 0 : index
    %c0_9 = arith.constant 0 : index
    %21 = vector.load %arg3[%c0_8, %c0_9] : memref<1x32xf32, #tpu.memory_space<vmem>>, vector<1x32xf32>
    %22 = vector.broadcast %21 : vector<1x32xf32> to vector<8x32xf32>
    %23 = arith.mulf %20, %22 : vector<8x32xf32>
    %c0_10 = arith.constant 0 : index
    %c0_11 = arith.constant 0 : index
    %24 = vector.load %arg4[%c0_10, %c0_11] : memref<1x32xf32, #tpu.memory_space<vmem>>, vector<1x32xf32>
    %25 = vector.broadcast %24 : vector<1x32xf32> to vector<8x32xf32>
    %26 = arith.addf %23, %25 : vector<8x32xf32>
    %cst_12 = arith.constant dense<0.000000e+00> : vector<16xf32>
    %27 = vector.multi_reduction <add>, %1, %cst_12 [1] : vector<16x32xf32> to vector<16xf32>
    %28 = vector.shape_cast %27 : vector<16xf32> to vector<16x1xf32>
    %cst_13 = arith.constant 3.200000e+01 : f32
    %29 = vector.broadcast %cst_13 : f32 to vector<16x1xf32>
    %30 = arith.divf %28, %29 : vector<16x1xf32>
    %31 = vector.broadcast %30 : vector<16x1xf32> to vector<16x32xf32>
    %32 = arith.subf %1, %31 : vector<16x32xf32>
    %33 = arith.mulf %32, %32 : vector<16x32xf32>
    %cst_14 = arith.constant dense<0.000000e+00> : vector<16xf32>
    %34 = vector.multi_reduction <add>, %33, %cst_14 [1] : vector<16x32xf32> to vector<16xf32>
    %35 = vector.shape_cast %34 : vector<16xf32> to vector<16x1xf32>
    %cst_15 = arith.constant 3.200000e+01 : f32
    %36 = vector.broadcast %cst_15 : f32 to vector<16x1xf32>
    %37 = arith.divf %35, %36 : vector<16x1xf32>
    %38 = vector.broadcast %30 : vector<16x1xf32> to vector<16x32xf32>
    %39 = arith.subf %1, %38 : vector<16x32xf32>
    %cst_16 = arith.constant 9.99999974E-6 : f32
    %40 = vector.broadcast %cst_16 : f32 to vector<16x1xf32>
    %41 = arith.addf %37, %40 : vector<16x1xf32>
    %42 = math.rsqrt %41 : vector<16x1xf32>
    %43 = vector.broadcast %42 : vector<16x1xf32> to vector<16x32xf32>
    %44 = arith.mulf %39, %43 : vector<16x32xf32>
    %c0_17 = arith.constant 0 : index
    %c0_18 = arith.constant 0 : index
    %45 = vector.load %arg5[%c0_17, %c0_18] : memref<1x32xf32, #tpu.memory_space<vmem>>, vector<1x32xf32>
    %46 = vector.broadcast %45 : vector<1x32xf32> to vector<16x32xf32>
    %47 = arith.mulf %44, %46 : vector<16x32xf32>
    %c0_19 = arith.constant 0 : index
    %c0_20 = arith.constant 0 : index
    %48 = vector.load %arg6[%c0_19, %c0_20] : memref<1x32xf32, #tpu.memory_space<vmem>>, vector<1x32xf32>
    %49 = vector.broadcast %48 : vector<1x32xf32> to vector<16x32xf32>
    %50 = arith.addf %47, %49 : vector<16x32xf32>
    %c0_21 = arith.constant 0 : index
    %c0_22 = arith.constant 0 : index
    %51 = vector.load %arg7[%c0_21, %c0_22] : memref<32x32xf32, #tpu.memory_space<vmem>>, vector<32x32xf32>
    %cst_23 = arith.constant dense<0.000000e+00> : vector<8x32xf32>
    %52 = tpu.matmul %26, %51, %cst_23 {dimension_numbers = #tpu.dot_dimension_numbers<[1], [0], [0], [1], [0, 0, 1, 1], [], []>} : vector<8x32xf32>, vector<32x32xf32>, vector<8x32xf32> -> vector<8x32xf32>
    %c0_24 = arith.constant 0 : index
    %c0_25 = arith.constant 0 : index
    %53 = vector.load %arg8[%c0_24, %c0_25] : memref<1x32xf32, #tpu.memory_space<vmem>>, vector<1x32xf32>
    %54 = vector.broadcast %53 : vector<1x32xf32> to vector<8x32xf32>
    %55 = arith.addf %52, %54 : vector<8x32xf32>
    %c0_26 = arith.constant 0 : index
    %c0_27 = arith.constant 0 : index
    %56 = vector.load %arg9[%c0_26, %c0_27] : memref<32x64xf32, #tpu.memory_space<vmem>>, vector<32x64xf32>
    %cst_28 = arith.constant dense<0.000000e+00> : vector<16x64xf32>
    %57 = tpu.matmul %50, %56, %cst_28 {dimension_numbers = #tpu.dot_dimension_numbers<[1], [0], [0], [1], [0, 0, 1, 1], [], []>} : vector<16x32xf32>, vector<32x64xf32>, vector<16x64xf32> -> vector<16x64xf32>
    %c0_29 = arith.constant 0 : index
    %c0_30 = arith.constant 0 : index
    %58 = vector.load %arg10[%c0_29, %c0_30] : memref<1x64xf32, #tpu.memory_space<vmem>>, vector<1x64xf32>
    %59 = vector.broadcast %58 : vector<1x64xf32> to vector<16x64xf32>
    %60 = arith.addf %57, %59 : vector<16x64xf32>
    %61 = vector.extract_strided_slice %60 {offsets = [0, 0], sizes = [16, 32], strides = [1, 1]} : vector<16x64xf32> to vector<16x32xf32>
    %62 = vector.extract_strided_slice %60 {offsets = [0, 32], sizes = [16, 32], strides = [1, 1]} : vector<16x64xf32> to vector<16x32xf32>
    %63 = tpu.transpose %61, [1, 0] : vector<16x32xf32> -> vector<32x16xf32>
    %cst_31 = arith.constant dense<0.000000e+00> : vector<8x16xf32>
    %64 = tpu.matmul %55, %63, %cst_31 {dimension_numbers = #tpu.dot_dimension_numbers<[1], [0], [0], [1], [0, 0, 1, 1], [], []>} : vector<8x32xf32>, vector<32x16xf32>, vector<8x16xf32> -> vector<8x16xf32>
    %cst_32 = arith.constant 0.176776692 : f32
    %65 = vector.broadcast %cst_32 : f32 to vector<8x16xf32>
    %66 = arith.mulf %64, %65 : vector<8x16xf32>
    %cst_33 = arith.constant dense<0xFF800000> : vector<8xf32>
    %67 = vector.multi_reduction <maximumf>, %66, %cst_33 [1] : vector<8x16xf32> to vector<8xf32>
    %68 = vector.shape_cast %67 : vector<8xf32> to vector<8x1xf32>
    %69 = vector.broadcast %68 : vector<8x1xf32> to vector<8x16xf32>
    %70 = arith.subf %66, %69 : vector<8x16xf32>
    %71 = math.exp %70 : vector<8x16xf32>
    %cst_34 = arith.constant dense<0.000000e+00> : vector<8xf32>
    %72 = vector.multi_reduction <add>, %71, %cst_34 [1] : vector<8x16xf32> to vector<8xf32>
    %73 = vector.shape_cast %72 : vector<8xf32> to vector<8x1xf32>
    %cst_35 = arith.constant dense<0.000000e+00> : vector<8x32xf32>
    %74 = tpu.matmul %71, %62, %cst_35 {dimension_numbers = #tpu.dot_dimension_numbers<[1], [0], [0], [1], [0, 0, 1, 1], [], []>} : vector<8x16xf32>, vector<16x32xf32>, vector<8x32xf32> -> vector<8x32xf32>
    %75 = tpu.reciprocal %73 {approx = true} : vector<8x1xf32> -> vector<8x1xf32>
    %76 = vector.broadcast %75 : vector<8x1xf32> to vector<8x32xf32>
    %77 = arith.mulf %74, %76 : vector<8x32xf32>
    %c0_36 = arith.constant 0 : index
    %c0_37 = arith.constant 0 : index
    %78 = vector.load %arg11[%c0_36, %c0_37] : memref<32x32xf32, #tpu.memory_space<vmem>>, vector<32x32xf32>
    %cst_38 = arith.constant dense<0.000000e+00> : vector<8x32xf32>
    %79 = tpu.matmul %77, %78, %cst_38 {dimension_numbers = #tpu.dot_dimension_numbers<[1], [0], [0], [1], [0, 0, 1, 1], [], []>} : vector<8x32xf32>, vector<32x32xf32>, vector<8x32xf32> -> vector<8x32xf32>
    %c0_39 = arith.constant 0 : index
    %c0_40 = arith.constant 0 : index
    %80 = vector.load %arg12[%c0_39, %c0_40] : memref<1x32xf32, #tpu.memory_space<vmem>>, vector<1x32xf32>
    %81 = vector.broadcast %80 : vector<1x32xf32> to vector<8x32xf32>
    %82 = arith.addf %79, %81 : vector<8x32xf32>
    %83 = arith.addf %2, %82 : vector<8x32xf32>
    %cst_41 = arith.constant dense<0.000000e+00> : vector<8xf32>
    %84 = vector.multi_reduction <add>, %83, %cst_41 [1] : vector<8x32xf32> to vector<8xf32>
    %85 = vector.shape_cast %84 : vector<8xf32> to vector<8x1xf32>
    %cst_42 = arith.constant 3.200000e+01 : f32
    %86 = vector.broadcast %cst_42 : f32 to vector<8x1xf32>
    %87 = arith.divf %85, %86 : vector<8x1xf32>
    %88 = vector.broadcast %87 : vector<8x1xf32> to vector<8x32xf32>
    %89 = arith.subf %83, %88 : vector<8x32xf32>
    %90 = arith.mulf %89, %89 : vector<8x32xf32>
    %cst_43 = arith.constant dense<0.000000e+00> : vector<8xf32>
    %91 = vector.multi_reduction <add>, %90, %cst_43 [1] : vector<8x32xf32> to vector<8xf32>
    %92 = vector.shape_cast %91 : vector<8xf32> to vector<8x1xf32>
    %cst_44 = arith.constant 3.200000e+01 : f32
    %93 = vector.broadcast %cst_44 : f32 to vector<8x1xf32>
    %94 = arith.divf %92, %93 : vector<8x1xf32>
    %95 = vector.broadcast %87 : vector<8x1xf32> to vector<8x32xf32>
    %96 = arith.subf %83, %95 : vector<8x32xf32>
    %cst_45 = arith.constant 9.99999974E-6 : f32
    %97 = vector.broadcast %cst_45 : f32 to vector<8x1xf32>
    %98 = arith.addf %94, %97 : vector<8x1xf32>
    %99 = math.rsqrt %98 : vector<8x1xf32>
    %100 = vector.broadcast %99 : vector<8x1xf32> to vector<8x32xf32>
    %101 = arith.mulf %96, %100 : vector<8x32xf32>
    %c0_46 = arith.constant 0 : index
    %c0_47 = arith.constant 0 : index
    %102 = vector.load %arg13[%c0_46, %c0_47] : memref<1x32xf32, #tpu.memory_space<vmem>>, vector<1x32xf32>
    %103 = vector.broadcast %102 : vector<1x32xf32> to vector<8x32xf32>
    %104 = arith.mulf %101, %103 : vector<8x32xf32>
    %c0_48 = arith.constant 0 : index
    %c0_49 = arith.constant 0 : index
    %105 = vector.load %arg14[%c0_48, %c0_49] : memref<1x32xf32, #tpu.memory_space<vmem>>, vector<1x32xf32>
    %106 = vector.broadcast %105 : vector<1x32xf32> to vector<8x32xf32>
    %107 = arith.addf %104, %106 : vector<8x32xf32>
    %c0_50 = arith.constant 0 : index
    %c0_51 = arith.constant 0 : index
    %108 = vector.load %arg15[%c0_50, %c0_51] : memref<32x128xf32, #tpu.memory_space<vmem>>, vector<32x128xf32>
    %cst_52 = arith.constant dense<0.000000e+00> : vector<8x128xf32>
    %109 = tpu.matmul %107, %108, %cst_52 {dimension_numbers = #tpu.dot_dimension_numbers<[1], [0], [0], [1], [0, 0, 1, 1], [], []>} : vector<8x32xf32>, vector<32x128xf32>, vector<8x128xf32> -> vector<8x128xf32>
    %c0_53 = arith.constant 0 : index
    %c0_54 = arith.constant 0 : index
    %110 = vector.load %arg16[%c0_53, %c0_54] : memref<1x128xf32, #tpu.memory_space<vmem>>, vector<1x128xf32>
    %111 = vector.broadcast %110 : vector<1x128xf32> to vector<8x128xf32>
    %112 = arith.addf %109, %111 : vector<8x128xf32>
    %113 = arith.mulf %112, %112 : vector<8x128xf32>
    %114 = arith.mulf %112, %113 : vector<8x128xf32>
    %cst_55 = arith.constant 4.471500e-02 : f32
    %115 = vector.broadcast %cst_55 : f32 to vector<8x128xf32>
    %116 = arith.mulf %115, %114 : vector<8x128xf32>
    %117 = arith.addf %112, %116 : vector<8x128xf32>
    %cst_56 = arith.constant 0.797884583 : f32
    %118 = vector.broadcast %cst_56 : f32 to vector<8x128xf32>
    %119 = arith.mulf %118, %117 : vector<8x128xf32>
    %120 = math.tanh %119 : vector<8x128xf32>
    %cst_57 = arith.constant 1.000000e+00 : f32
    %121 = vector.broadcast %cst_57 : f32 to vector<8x128xf32>
    %122 = arith.addf %121, %120 : vector<8x128xf32>
    %cst_58 = arith.constant 5.000000e-01 : f32
    %123 = vector.broadcast %cst_58 : f32 to vector<8x128xf32>
    %124 = arith.mulf %123, %122 : vector<8x128xf32>
    %125 = arith.mulf %112, %124 : vector<8x128xf32>
    %c0_59 = arith.constant 0 : index
    %c0_60 = arith.constant 0 : index
    %126 = vector.load %arg17[%c0_59, %c0_60] : memref<128x32xf32, #tpu.memory_space<vmem>>, vector<128x32xf32>
    %cst_61 = arith.constant dense<0.000000e+00> : vector<8x32xf32>
    %127 = tpu.matmul %125, %126, %cst_61 {dimension_numbers = #tpu.dot_dimension_numbers<[1], [0], [0], [1], [0, 0, 1, 1], [], []>} : vector<8x128xf32>, vector<128x32xf32>, vector<8x32xf32> -> vector<8x32xf32>
    %c0_62 = arith.constant 0 : index
    %c0_63 = arith.constant 0 : index
    %128 = vector.load %arg18[%c0_62, %c0_63] : memref<1x32xf32, #tpu.memory_space<vmem>>, vector<1x32xf32>
    %129 = vector.broadcast %128 : vector<1x32xf32> to vector<8x32xf32>
    %130 = arith.addf %127, %129 : vector<8x32xf32>
    %131 = arith.addf %83, %130 : vector<8x32xf32>
    %cst_64 = arith.constant dense<0.000000e+00> : vector<8xf32>
    %132 = vector.multi_reduction <add>, %131, %cst_64 [1] : vector<8x32xf32> to vector<8xf32>
    %133 = vector.shape_cast %132 : vector<8xf32> to vector<8x1xf32>
    %cst_65 = arith.constant 3.200000e+01 : f32
    %134 = vector.broadcast %cst_65 : f32 to vector<8x1xf32>
    %135 = arith.divf %133, %134 : vector<8x1xf32>
    %136 = vector.broadcast %135 : vector<8x1xf32> to vector<8x32xf32>
    %137 = arith.subf %131, %136 : vector<8x32xf32>
    %138 = arith.mulf %137, %137 : vector<8x32xf32>
    %cst_66 = arith.constant dense<0.000000e+00> : vector<8xf32>
    %139 = vector.multi_reduction <add>, %138, %cst_66 [1] : vector<8x32xf32> to vector<8xf32>
    %140 = vector.shape_cast %139 : vector<8xf32> to vector<8x1xf32>
    %cst_67 = arith.constant 3.200000e+01 : f32
    %141 = vector.broadcast %cst_67 : f32 to vector<8x1xf32>
    %142 = arith.divf %140, %141 : vector<8x1xf32>
    %143 = vector.broadcast %135 : vector<8x1xf32> to vector<8x32xf32>
    %144 = arith.subf %131, %143 : vector<8x32xf32>
    %cst_68 = arith.constant 9.99999974E-6 : f32
    %145 = vector.broadcast %cst_68 : f32 to vector<8x1xf32>
    %146 = arith.addf %142, %145 : vector<8x1xf32>
    %147 = math.rsqrt %146 : vector<8x1xf32>
    %148 = vector.broadcast %147 : vector<8x1xf32> to vector<8x32xf32>
    %149 = arith.mulf %144, %148 : vector<8x32xf32>
    %c0_69 = arith.constant 0 : index
    %c0_70 = arith.constant 0 : index
    %150 = vector.load %arg19[%c0_69, %c0_70] : memref<1x32xf32, #tpu.memory_space<vmem>>, vector<1x32xf32>
    %151 = vector.broadcast %150 : vector<1x32xf32> to vector<8x32xf32>
    %152 = arith.mulf %149, %151 : vector<8x32xf32>
    %c0_71 = arith.constant 0 : index
    %c0_72 = arith.constant 0 : index
    %153 = vector.load %arg20[%c0_71, %c0_72] : memref<1x32xf32, #tpu.memory_space<vmem>>, vector<1x32xf32>
    %154 = vector.broadcast %153 : vector<1x32xf32> to vector<8x32xf32>
    %155 = arith.addf %152, %154 : vector<8x32xf32>
    %c0_73 = arith.constant 0 : index
    %c0_74 = arith.constant 0 : index
    %156 = vector.load %arg21[%c0_73, %c0_74] : memref<32x96xf32, #tpu.memory_space<vmem>>, vector<32x96xf32>
    %cst_75 = arith.constant dense<0.000000e+00> : vector<8x96xf32>
    %157 = tpu.matmul %155, %156, %cst_75 {dimension_numbers = #tpu.dot_dimension_numbers<[1], [0], [0], [1], [0, 0, 1, 1], [], []>} : vector<8x32xf32>, vector<32x96xf32>, vector<8x96xf32> -> vector<8x96xf32>
    %c0_76 = arith.constant 0 : index
    %c0_77 = arith.constant 0 : index
    %158 = vector.load %arg22[%c0_76, %c0_77] : memref<1x96xf32, #tpu.memory_space<vmem>>, vector<1x96xf32>
    %159 = vector.broadcast %158 : vector<1x96xf32> to vector<8x96xf32>
    %160 = arith.addf %157, %159 : vector<8x96xf32>
    %161 = vector.extract_strided_slice %160 {offsets = [0, 0], sizes = [8, 32], strides = [1, 1]} : vector<8x96xf32> to vector<8x32xf32>
    %162 = vector.extract_strided_slice %160 {offsets = [0, 32], sizes = [8, 32], strides = [1, 1]} : vector<8x96xf32> to vector<8x32xf32>
    %163 = vector.extract_strided_slice %160 {offsets = [0, 64], sizes = [8, 32], strides = [1, 1]} : vector<8x96xf32> to vector<8x32xf32>
    %164 = tpu.transpose %162, [1, 0] : vector<8x32xf32> -> vector<32x8xf32>
    %cst_78 = arith.constant dense<0.000000e+00> : vector<8x8xf32>
    %165 = tpu.matmul %161, %164, %cst_78 {dimension_numbers = #tpu.dot_dimension_numbers<[1], [0], [0], [1], [0, 0, 1, 1], [], []>} : vector<8x32xf32>, vector<32x8xf32>, vector<8x8xf32> -> vector<8x8xf32>
    %cst_79 = arith.constant 0.176776692 : f32
    %166 = vector.broadcast %cst_79 : f32 to vector<8x8xf32>
    %167 = arith.mulf %165, %166 : vector<8x8xf32>
    %cst_80 = arith.constant dense<0xFF800000> : vector<8xf32>
    %168 = vector.multi_reduction <maximumf>, %167, %cst_80 [1] : vector<8x8xf32> to vector<8xf32>
    %169 = vector.shape_cast %168 : vector<8xf32> to vector<8x1xf32>
    %170 = vector.broadcast %169 : vector<8x1xf32> to vector<8x8xf32>
    %171 = arith.subf %167, %170 : vector<8x8xf32>
    %172 = math.exp %171 : vector<8x8xf32>
    %cst_81 = arith.constant dense<0.000000e+00> : vector<8xf32>
    %173 = vector.multi_reduction <add>, %172, %cst_81 [1] : vector<8x8xf32> to vector<8xf32>
    %174 = vector.shape_cast %173 : vector<8xf32> to vector<8x1xf32>
    %cst_82 = arith.constant dense<0.000000e+00> : vector<8x32xf32>
    %175 = tpu.matmul %172, %163, %cst_82 {dimension_numbers = #tpu.dot_dimension_numbers<[1], [0], [0], [1], [0, 0, 1, 1], [], []>} : vector<8x8xf32>, vector<8x32xf32>, vector<8x32xf32> -> vector<8x32xf32>
    %176 = tpu.reciprocal %174 {approx = true} : vector<8x1xf32> -> vector<8x1xf32>
    %177 = vector.broadcast %176 : vector<8x1xf32> to vector<8x32xf32>
    %178 = arith.mulf %175, %177 : vector<8x32xf32>
    %c0_83 = arith.constant 0 : index
    %c0_84 = arith.constant 0 : index
    %179 = vector.load %arg23[%c0_83, %c0_84] : memref<32x32xf32, #tpu.memory_space<vmem>>, vector<32x32xf32>
    %cst_85 = arith.constant dense<0.000000e+00> : vector<8x32xf32>
    %180 = tpu.matmul %178, %179, %cst_85 {dimension_numbers = #tpu.dot_dimension_numbers<[1], [0], [0], [1], [0, 0, 1, 1], [], []>} : vector<8x32xf32>, vector<32x32xf32>, vector<8x32xf32> -> vector<8x32xf32>
    %c0_86 = arith.constant 0 : index
    %c0_87 = arith.constant 0 : index
    %181 = vector.load %arg24[%c0_86, %c0_87] : memref<1x32xf32, #tpu.memory_space<vmem>>, vector<1x32xf32>
    %182 = vector.broadcast %181 : vector<1x32xf32> to vector<8x32xf32>
    %183 = arith.addf %180, %182 : vector<8x32xf32>
    %184 = arith.addf %131, %183 : vector<8x32xf32>
    %cst_88 = arith.constant dense<0.000000e+00> : vector<8xf32>
    %185 = vector.multi_reduction <add>, %184, %cst_88 [1] : vector<8x32xf32> to vector<8xf32>
    %186 = vector.shape_cast %185 : vector<8xf32> to vector<8x1xf32>
    %cst_89 = arith.constant 3.200000e+01 : f32
    %187 = vector.broadcast %cst_89 : f32 to vector<8x1xf32>
    %188 = arith.divf %186, %187 : vector<8x1xf32>
    %189 = vector.broadcast %188 : vector<8x1xf32> to vector<8x32xf32>
    %190 = arith.subf %184, %189 : vector<8x32xf32>
    %191 = arith.mulf %190, %190 : vector<8x32xf32>
    %cst_90 = arith.constant dense<0.000000e+00> : vector<8xf32>
    %192 = vector.multi_reduction <add>, %191, %cst_90 [1] : vector<8x32xf32> to vector<8xf32>
    %193 = vector.shape_cast %192 : vector<8xf32> to vector<8x1xf32>
    %cst_91 = arith.constant 3.200000e+01 : f32
    %194 = vector.broadcast %cst_91 : f32 to vector<8x1xf32>
    %195 = arith.divf %193, %194 : vector<8x1xf32>
    %196 = vector.broadcast %188 : vector<8x1xf32> to vector<8x32xf32>
    %197 = arith.subf %184, %196 : vector<8x32xf32>
    %cst_92 = arith.constant 9.99999974E-6 : f32
    %198 = vector.broadcast %cst_92 : f32 to vector<8x1xf32>
    %199 = arith.addf %195, %198 : vector<8x1xf32>
    %200 = math.rsqrt %199 : vector<8x1xf32>
    %201 = vector.broadcast %200 : vector<8x1xf32> to vector<8x32xf32>
    %202 = arith.mulf %197, %201 : vector<8x32xf32>
    %c0_93 = arith.constant 0 : index
    %c0_94 = arith.constant 0 : index
    %203 = vector.load %arg25[%c0_93, %c0_94] : memref<1x32xf32, #tpu.memory_space<vmem>>, vector<1x32xf32>
    %204 = vector.broadcast %203 : vector<1x32xf32> to vector<8x32xf32>
    %205 = arith.mulf %202, %204 : vector<8x32xf32>
    %c0_95 = arith.constant 0 : index
    %c0_96 = arith.constant 0 : index
    %206 = vector.load %arg26[%c0_95, %c0_96] : memref<1x32xf32, #tpu.memory_space<vmem>>, vector<1x32xf32>
    %207 = vector.broadcast %206 : vector<1x32xf32> to vector<8x32xf32>
    %208 = arith.addf %205, %207 : vector<8x32xf32>
    %c0_97 = arith.constant 0 : index
    %c0_98 = arith.constant 0 : index
    %209 = vector.load %arg27[%c0_97, %c0_98] : memref<32x128xf32, #tpu.memory_space<vmem>>, vector<32x128xf32>
    %cst_99 = arith.constant dense<0.000000e+00> : vector<8x128xf32>
    %210 = tpu.matmul %208, %209, %cst_99 {dimension_numbers = #tpu.dot_dimension_numbers<[1], [0], [0], [1], [0, 0, 1, 1], [], []>} : vector<8x32xf32>, vector<32x128xf32>, vector<8x128xf32> -> vector<8x128xf32>
    %c0_100 = arith.constant 0 : index
    %c0_101 = arith.constant 0 : index
    %211 = vector.load %arg28[%c0_100, %c0_101] : memref<1x128xf32, #tpu.memory_space<vmem>>, vector<1x128xf32>
    %212 = vector.broadcast %211 : vector<1x128xf32> to vector<8x128xf32>
    %213 = arith.addf %210, %212 : vector<8x128xf32>
    %214 = arith.mulf %213, %213 : vector<8x128xf32>
    %215 = arith.mulf %213, %214 : vector<8x128xf32>
    %cst_102 = arith.constant 4.471500e-02 : f32
    %216 = vector.broadcast %cst_102 : f32 to vector<8x128xf32>
    %217 = arith.mulf %216, %215 : vector<8x128xf32>
    %218 = arith.addf %213, %217 : vector<8x128xf32>
    %cst_103 = arith.constant 0.797884583 : f32
    %219 = vector.broadcast %cst_103 : f32 to vector<8x128xf32>
    %220 = arith.mulf %219, %218 : vector<8x128xf32>
    %221 = math.tanh %220 : vector<8x128xf32>
    %cst_104 = arith.constant 1.000000e+00 : f32
    %222 = vector.broadcast %cst_104 : f32 to vector<8x128xf32>
    %223 = arith.addf %222, %221 : vector<8x128xf32>
    %cst_105 = arith.constant 5.000000e-01 : f32
    %224 = vector.broadcast %cst_105 : f32 to vector<8x128xf32>
    %225 = arith.mulf %224, %223 : vector<8x128xf32>
    %226 = arith.mulf %213, %225 : vector<8x128xf32>
    %c0_106 = arith.constant 0 : index
    %c0_107 = arith.constant 0 : index
    %227 = vector.load %arg29[%c0_106, %c0_107] : memref<128x32xf32, #tpu.memory_space<vmem>>, vector<128x32xf32>
    %cst_108 = arith.constant dense<0.000000e+00> : vector<8x32xf32>
    %228 = tpu.matmul %226, %227, %cst_108 {dimension_numbers = #tpu.dot_dimension_numbers<[1], [0], [0], [1], [0, 0, 1, 1], [], []>} : vector<8x128xf32>, vector<128x32xf32>, vector<8x32xf32> -> vector<8x32xf32>
    %c0_109 = arith.constant 0 : index
    %c0_110 = arith.constant 0 : index
    %229 = vector.load %arg30[%c0_109, %c0_110] : memref<1x32xf32, #tpu.memory_space<vmem>>, vector<1x32xf32>
    %230 = vector.broadcast %229 : vector<1x32xf32> to vector<8x32xf32>
    %231 = arith.addf %228, %230 : vector<8x32xf32>
    %232 = arith.addf %184, %231 : vector<8x32xf32>
    %c0_111 = arith.constant 0 : index
    %c0_112 = arith.constant 0 : index
    %233 = vector.load %arg31[%c0_111, %c0_112] : memref<16x32xf32, #tpu.memory_space<vmem>>, vector<16x32xf32>
    %234 = arith.addf %1, %233 : vector<16x32xf32>
    %cst_113 = arith.constant dense<0.000000e+00> : vector<16xf32>
    %235 = vector.multi_reduction <add>, %234, %cst_113 [1] : vector<16x32xf32> to vector<16xf32>
    %236 = vector.shape_cast %235 : vector<16xf32> to vector<16x1xf32>
    %cst_114 = arith.constant 3.200000e+01 : f32
    %237 = vector.broadcast %cst_114 : f32 to vector<16x1xf32>
    %238 = arith.divf %236, %237 : vector<16x1xf32>
    %239 = vector.broadcast %238 : vector<16x1xf32> to vector<16x32xf32>
    %240 = arith.subf %234, %239 : vector<16x32xf32>
    %241 = arith.mulf %240, %240 : vector<16x32xf32>
    %cst_115 = arith.constant dense<0.000000e+00> : vector<16xf32>
    %242 = vector.multi_reduction <add>, %241, %cst_115 [1] : vector<16x32xf32> to vector<16xf32>
    %243 = vector.shape_cast %242 : vector<16xf32> to vector<16x1xf32>
    %cst_116 = arith.constant 3.200000e+01 : f32
    %244 = vector.broadcast %cst_116 : f32 to vector<16x1xf32>
    %245 = arith.divf %243, %244 : vector<16x1xf32>
    %246 = vector.broadcast %238 : vector<16x1xf32> to vector<16x32xf32>
    %247 = arith.subf %234, %246 : vector<16x32xf32>
    %cst_117 = arith.constant 9.99999974E-6 : f32
    %248 = vector.broadcast %cst_117 : f32 to vector<16x1xf32>
    %249 = arith.addf %245, %248 : vector<16x1xf32>
    %250 = math.rsqrt %249 : vector<16x1xf32>
    %251 = vector.broadcast %250 : vector<16x1xf32> to vector<16x32xf32>
    %252 = arith.mulf %247, %251 : vector<16x32xf32>
    %c0_118 = arith.constant 0 : index
    %c0_119 = arith.constant 0 : index
    %253 = vector.load %arg32[%c0_118, %c0_119] : memref<1x32xf32, #tpu.memory_space<vmem>>, vector<1x32xf32>
    %254 = vector.broadcast %253 : vector<1x32xf32> to vector<16x32xf32>
    %255 = arith.mulf %252, %254 : vector<16x32xf32>
    %c0_120 = arith.constant 0 : index
    %c0_121 = arith.constant 0 : index
    %256 = vector.load %arg33[%c0_120, %c0_121] : memref<1x32xf32, #tpu.memory_space<vmem>>, vector<1x32xf32>
    %257 = vector.broadcast %256 : vector<1x32xf32> to vector<16x32xf32>
    %258 = arith.addf %255, %257 : vector<16x32xf32>
    %c0_122 = arith.constant 0 : index
    %c0_123 = arith.constant 0 : index
    %259 = vector.load %arg34[%c0_122, %c0_123] : memref<32x96xf32, #tpu.memory_space<vmem>>, vector<32x96xf32>
    %cst_124 = arith.constant dense<0.000000e+00> : vector<16x96xf32>
    %260 = tpu.matmul %258, %259, %cst_124 {dimension_numbers = #tpu.dot_dimension_numbers<[1], [0], [0], [1], [0, 0, 1, 1], [], []>} : vector<16x32xf32>, vector<32x96xf32>, vector<16x96xf32> -> vector<16x96xf32>
    %c0_125 = arith.constant 0 : index
    %c0_126 = arith.constant 0 : index
    %261 = vector.load %arg35[%c0_125, %c0_126] : memref<1x96xf32, #tpu.memory_space<vmem>>, vector<1x96xf32>
    %262 = vector.broadcast %261 : vector<1x96xf32> to vector<16x96xf32>
    %263 = arith.addf %260, %262 : vector<16x96xf32>
    %264 = vector.extract_strided_slice %263 {offsets = [0, 0], sizes = [16, 32], strides = [1, 1]} : vector<16x96xf32> to vector<16x32xf32>
    %265 = vector.extract_strided_slice %263 {offsets = [0, 32], sizes = [16, 32], strides = [1, 1]} : vector<16x96xf32> to vector<16x32xf32>
    %266 = vector.extract_strided_slice %263 {offsets = [0, 64], sizes = [16, 32], strides = [1, 1]} : vector<16x96xf32> to vector<16x32xf32>
    %267 = tpu.transpose %265, [1, 0] : vector<16x32xf32> -> vector<32x16xf32>
    %cst_127 = arith.constant dense<0.000000e+00> : vector<16x16xf32>
    %268 = tpu.matmul %264, %267, %cst_127 {dimension_numbers = #tpu.dot_dimension_numbers<[1], [0], [0], [1], [0, 0, 1, 1], [], []>} : vector<16x32xf32>, vector<32x16xf32>, vector<16x16xf32> -> vector<16x16xf32>
    %cst_128 = arith.constant 0.176776692 : f32
    %269 = vector.broadcast %cst_128 : f32 to vector<16x16xf32>
    %270 = arith.mulf %268, %269 : vector<16x16xf32>
    %cst_129 = arith.constant dense<0xFF800000> : vector<16xf32>
    %271 = vector.multi_reduction <maximumf>, %270, %cst_129 [1] : vector<16x16xf32> to vector<16xf32>
    %272 = vector.shape_cast %271 : vector<16xf32> to vector<16x1xf32>
    %273 = vector.broadcast %272 : vector<16x1xf32> to vector<16x16xf32>
    %274 = arith.subf %270, %273 : vector<16x16xf32>
    %275 = math.exp %274 : vector<16x16xf32>
    %cst_130 = arith.constant dense<0.000000e+00> : vector<16xf32>
    %276 = vector.multi_reduction <add>, %275, %cst_130 [1] : vector<16x16xf32> to vector<16xf32>
    %277 = vector.shape_cast %276 : vector<16xf32> to vector<16x1xf32>
    %cst_131 = arith.constant dense<0.000000e+00> : vector<16x32xf32>
    %278 = tpu.matmul %275, %266, %cst_131 {dimension_numbers = #tpu.dot_dimension_numbers<[1], [0], [0], [1], [0, 0, 1, 1], [], []>} : vector<16x16xf32>, vector<16x32xf32>, vector<16x32xf32> -> vector<16x32xf32>
    %279 = tpu.reciprocal %277 {approx = true} : vector<16x1xf32> -> vector<16x1xf32>
    %280 = vector.broadcast %279 : vector<16x1xf32> to vector<16x32xf32>
    %281 = arith.mulf %278, %280 : vector<16x32xf32>
    %c0_132 = arith.constant 0 : index
    %c0_133 = arith.constant 0 : index
    %282 = vector.load %arg36[%c0_132, %c0_133] : memref<32x32xf32, #tpu.memory_space<vmem>>, vector<32x32xf32>
    %cst_134 = arith.constant dense<0.000000e+00> : vector<16x32xf32>
    %283 = tpu.matmul %281, %282, %cst_134 {dimension_numbers = #tpu.dot_dimension_numbers<[1], [0], [0], [1], [0, 0, 1, 1], [], []>} : vector<16x32xf32>, vector<32x32xf32>, vector<16x32xf32> -> vector<16x32xf32>
    %c0_135 = arith.constant 0 : index
    %c0_136 = arith.constant 0 : index
    %284 = vector.load %arg37[%c0_135, %c0_136] : memref<1x32xf32, #tpu.memory_space<vmem>>, vector<1x32xf32>
    %285 = vector.broadcast %284 : vector<1x32xf32> to vector<16x32xf32>
    %286 = arith.addf %283, %285 : vector<16x32xf32>
    %287 = arith.addf %234, %286 : vector<16x32xf32>
    %cst_137 = arith.constant dense<0.000000e+00> : vector<16xf32>
    %288 = vector.multi_reduction <add>, %287, %cst_137 [1] : vector<16x32xf32> to vector<16xf32>
    %289 = vector.shape_cast %288 : vector<16xf32> to vector<16x1xf32>
    %cst_138 = arith.constant 3.200000e+01 : f32
    %290 = vector.broadcast %cst_138 : f32 to vector<16x1xf32>
    %291 = arith.divf %289, %290 : vector<16x1xf32>
    %292 = vector.broadcast %291 : vector<16x1xf32> to vector<16x32xf32>
    %293 = arith.subf %287, %292 : vector<16x32xf32>
    %294 = arith.mulf %293, %293 : vector<16x32xf32>
    %cst_139 = arith.constant dense<0.000000e+00> : vector<16xf32>
    %295 = vector.multi_reduction <add>, %294, %cst_139 [1] : vector<16x32xf32> to vector<16xf32>
    %296 = vector.shape_cast %295 : vector<16xf32> to vector<16x1xf32>
    %cst_140 = arith.constant 3.200000e+01 : f32
    %297 = vector.broadcast %cst_140 : f32 to vector<16x1xf32>
    %298 = arith.divf %296, %297 : vector<16x1xf32>
    %299 = vector.broadcast %291 : vector<16x1xf32> to vector<16x32xf32>
    %300 = arith.subf %287, %299 : vector<16x32xf32>
    %cst_141 = arith.constant 9.99999974E-6 : f32
    %301 = vector.broadcast %cst_141 : f32 to vector<16x1xf32>
    %302 = arith.addf %298, %301 : vector<16x1xf32>
    %303 = math.rsqrt %302 : vector<16x1xf32>
    %304 = vector.broadcast %303 : vector<16x1xf32> to vector<16x32xf32>
    %305 = arith.mulf %300, %304 : vector<16x32xf32>
    %c0_142 = arith.constant 0 : index
    %c0_143 = arith.constant 0 : index
    %306 = vector.load %arg38[%c0_142, %c0_143] : memref<1x32xf32, #tpu.memory_space<vmem>>, vector<1x32xf32>
    %307 = vector.broadcast %306 : vector<1x32xf32> to vector<16x32xf32>
    %308 = arith.mulf %305, %307 : vector<16x32xf32>
    %c0_144 = arith.constant 0 : index
    %c0_145 = arith.constant 0 : index
    %309 = vector.load %arg39[%c0_144, %c0_145] : memref<1x32xf32, #tpu.memory_space<vmem>>, vector<1x32xf32>
    %310 = vector.broadcast %309 : vector<1x32xf32> to vector<16x32xf32>
    %311 = arith.addf %308, %310 : vector<16x32xf32>
    %c0_146 = arith.constant 0 : index
    %c0_147 = arith.constant 0 : index
    %312 = vector.load %arg40[%c0_146, %c0_147] : memref<32x128xf32, #tpu.memory_space<vmem>>, vector<32x128xf32>
    %cst_148 = arith.constant dense<0.000000e+00> : vector<16x128xf32>
    %313 = tpu.matmul %311, %312, %cst_148 {dimension_numbers = #tpu.dot_dimension_numbers<[1], [0], [0], [1], [0, 0, 1, 1], [], []>} : vector<16x32xf32>, vector<32x128xf32>, vector<16x128xf32> -> vector<16x128xf32>
    %c0_149 = arith.constant 0 : index
    %c0_150 = arith.constant 0 : index
    %314 = vector.load %arg41[%c0_149, %c0_150] : memref<1x128xf32, #tpu.memory_space<vmem>>, vector<1x128xf32>
    %315 = vector.broadcast %314 : vector<1x128xf32> to vector<16x128xf32>
    %316 = arith.addf %313, %315 : vector<16x128xf32>
    %317 = arith.mulf %316, %316 : vector<16x128xf32>
    %318 = arith.mulf %316, %317 : vector<16x128xf32>
    %cst_151 = arith.constant 4.471500e-02 : f32
    %319 = vector.broadcast %cst_151 : f32 to vector<16x128xf32>
    %320 = arith.mulf %319, %318 : vector<16x128xf32>
    %321 = arith.addf %316, %320 : vector<16x128xf32>
    %cst_152 = arith.constant 0.797884583 : f32
    %322 = vector.broadcast %cst_152 : f32 to vector<16x128xf32>
    %323 = arith.mulf %322, %321 : vector<16x128xf32>
    %324 = math.tanh %323 : vector<16x128xf32>
    %cst_153 = arith.constant 1.000000e+00 : f32
    %325 = vector.broadcast %cst_153 : f32 to vector<16x128xf32>
    %326 = arith.addf %325, %324 : vector<16x128xf32>
    %cst_154 = arith.constant 5.000000e-01 : f32
    %327 = vector.broadcast %cst_154 : f32 to vector<16x128xf32>
    %328 = arith.mulf %327, %326 : vector<16x128xf32>
    %329 = arith.mulf %316, %328 : vector<16x128xf32>
    %c0_155 = arith.constant 0 : index
    %c0_156 = arith.constant 0 : index
    %330 = vector.load %arg42[%c0_155, %c0_156] : memref<128x32xf32, #tpu.memory_space<vmem>>, vector<128x32xf32>
    %cst_157 = arith.constant dense<0.000000e+00> : vector<16x32xf32>
    %331 = tpu.matmul %329, %330, %cst_157 {dimension_numbers = #tpu.dot_dimension_numbers<[1], [0], [0], [1], [0, 0, 1, 1], [], []>} : vector<16x128xf32>, vector<128x32xf32>, vector<16x32xf32> -> vector<16x32xf32>
    %c0_158 = arith.constant 0 : index
    %c0_159 = arith.constant 0 : index
    %332 = vector.load %arg43[%c0_158, %c0_159] : memref<1x32xf32, #tpu.memory_space<vmem>>, vector<1x32xf32>
    %333 = vector.broadcast %332 : vector<1x32xf32> to vector<16x32xf32>
    %334 = arith.addf %331, %333 : vector<16x32xf32>
    %335 = arith.addf %287, %334 : vector<16x32xf32>
    %c0_160 = arith.constant 0 : index
    %c0_161 = arith.constant 0 : index
    %336 = vector.load %arg44[%c0_160, %c0_161] : memref<32x32xf32, #tpu.memory_space<vmem>>, vector<32x32xf32>
    %cst_162 = arith.constant dense<0.000000e+00> : vector<16x32xf32>
    %337 = tpu.matmul %335, %336, %cst_162 {dimension_numbers = #tpu.dot_dimension_numbers<[1], [0], [0], [1], [0, 0, 1, 1], [], []>} : vector<16x32xf32>, vector<32x32xf32>, vector<16x32xf32> -> vector<16x32xf32>
    %c0_163 = arith.constant 0 : index
    %c0_164 = arith.constant 0 : index
    %338 = vector.load %arg45[%c0_163, %c0_164] : memref<1x32xf32, #tpu.memory_space<vmem>>, vector<1x32xf32>
    %339 = vector.broadcast %338 : vector<1x32xf32> to vector<16x32xf32>
    %340 = arith.addf %337, %339 : vector<16x32xf32>
    %cst_165 = arith.constant dense<0.000000e+00> : vector<16xf32>
    %341 = vector.multi_reduction <add>, %340, %cst_165 [1] : vector<16x32xf32> to vector<16xf32>
    %342 = vector.shape_cast %341 : vector<16xf32> to vector<16x1xf32>
    %cst_166 = arith.constant 3.200000e+01 : f32
    %343 = vector.broadcast %cst_166 : f32 to vector<16x1xf32>
    %344 = arith.divf %342, %343 : vector<16x1xf32>
    %345 = vector.broadcast %344 : vector<16x1xf32> to vector<16x32xf32>
    %346 = arith.subf %340, %345 : vector<16x32xf32>
    %347 = arith.mulf %346, %346 : vector<16x32xf32>
    %cst_167 = arith.constant dense<0.000000e+00> : vector<16xf32>
    %348 = vector.multi_reduction <add>, %347, %cst_167 [1] : vector<16x32xf32> to vector<16xf32>
    %349 = vector.shape_cast %348 : vector<16xf32> to vector<16x1xf32>
    %cst_168 = arith.constant 3.200000e+01 : f32
    %350 = vector.broadcast %cst_168 : f32 to vector<16x1xf32>
    %351 = arith.divf %349, %350 : vector<16x1xf32>
    %352 = vector.broadcast %344 : vector<16x1xf32> to vector<16x32xf32>
    %353 = arith.subf %340, %352 : vector<16x32xf32>
    %cst_169 = arith.constant 9.99999974E-6 : f32
    %354 = vector.broadcast %cst_169 : f32 to vector<16x1xf32>
    %355 = arith.addf %351, %354 : vector<16x1xf32>
    %356 = math.rsqrt %355 : vector<16x1xf32>
    %357 = vector.broadcast %356 : vector<16x1xf32> to vector<16x32xf32>
    %358 = arith.mulf %353, %357 : vector<16x32xf32>
    %c0_170 = arith.constant 0 : index
    %c0_171 = arith.constant 0 : index
    %359 = vector.load %arg46[%c0_170, %c0_171] : memref<1x32xf32, #tpu.memory_space<vmem>>, vector<1x32xf32>
    %360 = vector.broadcast %359 : vector<1x32xf32> to vector<16x32xf32>
    %361 = arith.mulf %358, %360 : vector<16x32xf32>
    %c0_172 = arith.constant 0 : index
    %c0_173 = arith.constant 0 : index
    %362 = vector.load %arg47[%c0_172, %c0_173] : memref<1x32xf32, #tpu.memory_space<vmem>>, vector<1x32xf32>
    %363 = vector.broadcast %362 : vector<1x32xf32> to vector<16x32xf32>
    %364 = arith.addf %361, %363 : vector<16x32xf32>
    %cst_174 = arith.constant dense<0.000000e+00> : vector<8xf32>
    %365 = vector.multi_reduction <add>, %232, %cst_174 [1] : vector<8x32xf32> to vector<8xf32>
    %366 = vector.shape_cast %365 : vector<8xf32> to vector<8x1xf32>
    %cst_175 = arith.constant 3.200000e+01 : f32
    %367 = vector.broadcast %cst_175 : f32 to vector<8x1xf32>
    %368 = arith.divf %366, %367 : vector<8x1xf32>
    %369 = vector.broadcast %368 : vector<8x1xf32> to vector<8x32xf32>
    %370 = arith.subf %232, %369 : vector<8x32xf32>
    %371 = arith.mulf %370, %370 : vector<8x32xf32>
    %cst_176 = arith.constant dense<0.000000e+00> : vector<8xf32>
    %372 = vector.multi_reduction <add>, %371, %cst_176 [1] : vector<8x32xf32> to vector<8xf32>
    %373 = vector.shape_cast %372 : vector<8xf32> to vector<8x1xf32>
    %cst_177 = arith.constant 3.200000e+01 : f32
    %374 = vector.broadcast %cst_177 : f32 to vector<8x1xf32>
    %375 = arith.divf %373, %374 : vector<8x1xf32>
    %376 = vector.broadcast %368 : vector<8x1xf32> to vector<8x32xf32>
    %377 = arith.subf %232, %376 : vector<8x32xf32>
    %cst_178 = arith.constant 9.99999974E-6 : f32
    %378 = vector.broadcast %cst_178 : f32 to vector<8x1xf32>
    %379 = arith.addf %375, %378 : vector<8x1xf32>
    %380 = math.rsqrt %379 : vector<8x1xf32>
    %381 = vector.broadcast %380 : vector<8x1xf32> to vector<8x32xf32>
    %382 = arith.mulf %377, %381 : vector<8x32xf32>
    %c0_179 = arith.constant 0 : index
    %c0_180 = arith.constant 0 : index
    %383 = vector.load %arg48[%c0_179, %c0_180] : memref<1x32xf32, #tpu.memory_space<vmem>>, vector<1x32xf32>
    %384 = vector.broadcast %383 : vector<1x32xf32> to vector<8x32xf32>
    %385 = arith.mulf %382, %384 : vector<8x32xf32>
    %c0_181 = arith.constant 0 : index
    %c0_182 = arith.constant 0 : index
    %386 = vector.load %arg49[%c0_181, %c0_182] : memref<1x32xf32, #tpu.memory_space<vmem>>, vector<1x32xf32>
    %387 = vector.broadcast %386 : vector<1x32xf32> to vector<8x32xf32>
    %388 = arith.addf %385, %387 : vector<8x32xf32>
    %c0_183 = arith.constant 0 : index
    %c0_184 = arith.constant 0 : index
    %389 = vector.load %arg50[%c0_183, %c0_184] : memref<32x32xf32, #tpu.memory_space<vmem>>, vector<32x32xf32>
    %cst_185 = arith.constant dense<0.000000e+00> : vector<16x32xf32>
    %390 = tpu.matmul %364, %389, %cst_185 {dimension_numbers = #tpu.dot_dimension_numbers<[1], [0], [0], [1], [0, 0, 1, 1], [], []>} : vector<16x32xf32>, vector<32x32xf32>, vector<16x32xf32> -> vector<16x32xf32>
    %c0_186 = arith.constant 0 : index
    %c0_187 = arith.constant 0 : index
    %391 = vector.load %arg51[%c0_186, %c0_187] : memref<1x32xf32, #tpu.memory_space<vmem>>, vector<1x32xf32>
    %392 = vector.broadcast %391 : vector<1x32xf32> to vector<16x32xf32>
    %393 = arith.addf %390, %392 : vector<16x32xf32>
    %c0_188 = arith.constant 0 : index
    %c0_189 = arith.constant 0 : index
    %394 = vector.load %arg52[%c0_188, %c0_189] : memref<32x64xf32, #tpu.memory_space<vmem>>, vector<32x64xf32>
    %cst_190 = arith.constant dense<0.000000e+00> : vector<8x64xf32>
    %395 = tpu.matmul %388, %394, %cst_190 {dimension_numbers = #tpu.dot_dimension_numbers<[1], [0], [0], [1], [0, 0, 1, 1], [], []>} : vector<8x32xf32>, vector<32x64xf32>, vector<8x64xf32> -> vector<8x64xf32>
    %c0_191 = arith.constant 0 : index
    %c0_192 = arith.constant 0 : index
    %396 = vector.load %arg53[%c0_191, %c0_192] : memref<1x64xf32, #tpu.memory_space<vmem>>, vector<1x64xf32>
    %397 = vector.broadcast %396 : vector<1x64xf32> to vector<8x64xf32>
    %398 = arith.addf %395, %397 : vector<8x64xf32>
    %399 = vector.extract_strided_slice %398 {offsets = [0, 0], sizes = [8, 32], strides = [1, 1]} : vector<8x64xf32> to vector<8x32xf32>
    %400 = vector.extract_strided_slice %398 {offsets = [0, 32], sizes = [8, 32], strides = [1, 1]} : vector<8x64xf32> to vector<8x32xf32>
    %401 = tpu.transpose %399, [1, 0] : vector<8x32xf32> -> vector<32x8xf32>
    %cst_193 = arith.constant dense<0.000000e+00> : vector<16x8xf32>
    %402 = tpu.matmul %393, %401, %cst_193 {dimension_numbers = #tpu.dot_dimension_numbers<[1], [0], [0], [1], [0, 0, 1, 1], [], []>} : vector<16x32xf32>, vector<32x8xf32>, vector<16x8xf32> -> vector<16x8xf32>
    %cst_194 = arith.constant 0.176776692 : f32
    %403 = vector.broadcast %cst_194 : f32 to vector<16x8xf32>
    %404 = arith.mulf %402, %403 : vector<16x8xf32>
    %cst_195 = arith.constant dense<0xFF800000> : vector<16xf32>
    %405 = vector.multi_reduction <maximumf>, %404, %cst_195 [1] : vector<16x8xf32> to vector<16xf32>
    %406 = vector.shape_cast %405 : vector<16xf32> to vector<16x1xf32>
    %407 = vector.broadcast %406 : vector<16x1xf32> to vector<16x8xf32>
    %408 = arith.subf %404, %407 : vector<16x8xf32>
    %409 = math.exp %408 : vector<16x8xf32>
    %cst_196 = arith.constant dense<0.000000e+00> : vector<16xf32>
    %410 = vector.multi_reduction <add>, %409, %cst_196 [1] : vector<16x8xf32> to vector<16xf32>
    %411 = vector.shape_cast %410 : vector<16xf32> to vector<16x1xf32>
    %cst_197 = arith.constant dense<0.000000e+00> : vector<16x32xf32>
    %412 = tpu.matmul %409, %400, %cst_197 {dimension_numbers = #tpu.dot_dimension_numbers<[1], [0], [0], [1], [0, 0, 1, 1], [], []>} : vector<16x8xf32>, vector<8x32xf32>, vector<16x32xf32> -> vector<16x32xf32>
    %413 = tpu.reciprocal %411 {approx = true} : vector<16x1xf32> -> vector<16x1xf32>
    %414 = vector.broadcast %413 : vector<16x1xf32> to vector<16x32xf32>
    %415 = arith.mulf %412, %414 : vector<16x32xf32>
    %c0_198 = arith.constant 0 : index
    %c0_199 = arith.constant 0 : index
    %416 = vector.load %arg54[%c0_198, %c0_199] : memref<32x32xf32, #tpu.memory_space<vmem>>, vector<32x32xf32>
    %cst_200 = arith.constant dense<0.000000e+00> : vector<16x32xf32>
    %417 = tpu.matmul %415, %416, %cst_200 {dimension_numbers = #tpu.dot_dimension_numbers<[1], [0], [0], [1], [0, 0, 1, 1], [], []>} : vector<16x32xf32>, vector<32x32xf32>, vector<16x32xf32> -> vector<16x32xf32>
    %c0_201 = arith.constant 0 : index
    %c0_202 = arith.constant 0 : index
    %418 = vector.load %arg55[%c0_201, %c0_202] : memref<1x32xf32, #tpu.memory_space<vmem>>, vector<1x32xf32>
    %419 = vector.broadcast %418 : vector<1x32xf32> to vector<16x32xf32>
    %420 = arith.addf %417, %419 : vector<16x32xf32>
    %421 = arith.addf %340, %420 : vector<16x32xf32>
    %c0_203 = arith.constant 0 : index
    %c0_204 = arith.constant 0 : index
    %422 = vector.load %arg56[%c0_203, %c0_204] : memref<32x32xf32, #tpu.memory_space<vmem>>, vector<32x32xf32>
    %cst_205 = arith.constant dense<0.000000e+00> : vector<16x32xf32>
    %423 = tpu.matmul %421, %422, %cst_205 {dimension_numbers = #tpu.dot_dimension_numbers<[1], [0], [0], [1], [0, 0, 1, 1], [], []>} : vector<16x32xf32>, vector<32x32xf32>, vector<16x32xf32> -> vector<16x32xf32>
    %c0_206 = arith.constant 0 : index
    %c0_207 = arith.constant 0 : index
    %424 = vector.load %arg57[%c0_206, %c0_207] : memref<1x32xf32, #tpu.memory_space<vmem>>, vector<1x32xf32>
    %425 = vector.broadcast %424 : vector<1x32xf32> to vector<16x32xf32>
    %426 = arith.addf %423, %425 : vector<16x32xf32>
    %c0_208 = arith.constant 0 : index
    %c0_209 = arith.constant 0 : index
    %c0_210 = arith.constant 0 : index
    %427 = vector.load %arg58[%c0_208, %c0_209, %c0_210] : memref<1x16x32xf32, #tpu.memory_space<vmem>>, vector<1x16x32xf32>
    %428 = vector.shape_cast %427 : vector<1x16x32xf32> to vector<16x32xf32>
    %429 = vector.shape_cast %426 : vector<16x32xf32> to vector<1x16x32xf32>
    tpu.vector_store %arg58[%c0_208, %c0_209, %c0_210], %429 {strides = array<i32>} : memref<1x16x32xf32, #tpu.memory_space<vmem>>, vector<1x16x32xf32>,
    return
  }
  func.func @transform_0(%arg0: i32) -> (i32, i32, i32) {
    %c0_i32 = arith.constant 0 : i32
    %c0_i32_0 = arith.constant 0 : i32
    %c0_i32_1 = arith.constant 0 : i32
    return %arg0, %c0_i32, %c0_i32_0 : i32, i32, i32
  }
  func.func @transform_1(%arg0: i32) -> (i32, i32) {
    %c0_i32 = arith.constant 0 : i32
    %c0_i32_0 = arith.constant 0 : i32
    %c0_i32_1 = arith.constant 0 : i32
    return %c0_i32, %c0_i32_0 : i32, i32
  }
  func.func @transform_2(%arg0: i32) -> (i32, i32) {
    %c0_i32 = arith.constant 0 : i32
    %c0_i32_0 = arith.constant 0 : i32
    %c0_i32_1 = arith.constant 0 : i32
    return %c0_i32, %c0_i32_0 : i32, i32
  }
  func.func @transform_3(%arg0: i32) -> (i32, i32) {
    %c0_i32 = arith.constant 0 : i32
    %c0_i32_0 = arith.constant 0 : i32
    %c0_i32_1 = arith.constant 0 : i32
    return %c0_i32, %c0_i32_0 : i32, i32
  }
  func.func @transform_4(%arg0: i32) -> (i32, i32) {
    %c0_i32 = arith.constant 0 : i32
    %c0_i32_0 = arith.constant 0 : i32
    %c0_i32_1 = arith.constant 0 : i32
    return %c0_i32, %c0_i32_0 : i32, i32
  }
  func.func @transform_5(%arg0: i32) -> (i32, i32) {
    %c0_i32 = arith.constant 0 : i32
    %c0_i32_0 = arith.constant 0 : i32
    %c0_i32_1 = arith.constant 0 : i32
    return %c0_i32, %c0_i32_0 : i32, i32
  }
  func.func @transform_6(%arg0: i32) -> (i32, i32) {
    %c0_i32 = arith.constant 0 : i32
    %c0_i32_0 = arith.constant 0 : i32
    %c0_i32_1 = arith.constant 0 : i32
    return %c0_i32, %c0_i32_0 : i32, i32
  }
  func.func @transform_7(%arg0: i32) -> (i32, i32) {
    %c0_i32 = arith.constant 0 : i32
    %c0_i32_0 = arith.constant 0 : i32
    %c0_i32_1 = arith.constant 0 : i32
    return %c0_i32, %c0_i32_0 : i32, i32
  }
  func.func @transform_8(%arg0: i32) -> (i32, i32) {
    %c0_i32 = arith.constant 0 : i32
    %c0_i32_0 = arith.constant 0 : i32
    %c0_i32_1 = arith.constant 0 : i32
    return %c0_i32, %c0_i32_0 : i32, i32
  }
  func.func @transform_9(%arg0: i32) -> (i32, i32) {
    %c0_i32 = arith.constant 0 : i32
    %c0_i32_0 = arith.constant 0 : i32
    %c0_i32_1 = arith.constant 0 : i32
    return %c0_i32, %c0_i32_0 : i32, i32
  }
  func.func @transform_10(%arg0: i32) -> (i32, i32) {
    %c0_i32 = arith.constant 0 : i32
    %c0_i32_0 = arith.constant 0 : i32
    %c0_i32_1 = arith.constant 0 : i32
    return %c0_i32, %c0_i32_0 : i32, i32
  }
  func.func @transform_11(%arg0: i32) -> (i32, i32) {
    %c0_i32 = arith.constant 0 : i32
    %c0_i32_0 = arith.constant 0 : i32
    %c0_i32_1 = arith.constant 0 : i32
    return %c0_i32, %c0_i32_0 : i32, i32
  }
  func.func @transform_12(%arg0: i32) -> (i32, i32) {
    %c0_i32 = arith.constant 0 : i32
    %c0_i32_0 = arith.constant 0 : i32
    %c0_i32_1 = arith.constant 0 : i32
    return %c0_i32, %c0_i32_0 : i32, i32
  }
  func.func @transform_13(%arg0: i32) -> (i32, i32) {
    %c0_i32 = arith.constant 0 : i32
    %c0_i32_0 = arith.constant 0 : i32
    %c0_i32_1 = arith.constant 0 : i32
    return %c0_i32, %c0_i32_0 : i32, i32
  }
  func.func @transform_14(%arg0: i32) -> (i32, i32) {
    %c0_i32 = arith.constant 0 : i32
    %c0_i32_0 = arith.constant 0 : i32
    %c0_i32_1 = arith.constant 0 : i32
    return %c0_i32, %c0_i32_0 : i32, i32
  }
  func.func @transform_15(%arg0: i32) -> (i32, i32) {
    %c0_i32 = arith.constant 0 : i32
    %c0_i32_0 = arith.constant 0 : i32
    %c0_i32_1 = arith.constant 0 : i32
    return %c0_i32, %c0_i32_0 : i32, i32
  }
  func.func @transform_16(%arg0: i32) -> (i32, i32) {
    %c0_i32 = arith.constant 0 : i32
    %c0_i32_0 = arith.constant 0 : i32
    %c0_i32_1 = arith.constant 0 : i32
    return %c0_i32, %c0_i32_0 : i32, i32
  }
  func.func @transform_17(%arg0: i32) -> (i32, i32) {
    %c0_i32 = arith.constant 0 : i32
    %c0_i32_0 = arith.constant 0 : i32
    %c0_i32_1 = arith.constant 0 : i32
    return %c0_i32, %c0_i32_0 : i32, i32
  }
  func.func @transform_18(%arg0: i32) -> (i32, i32) {
    %c0_i32 = arith.constant 0 : i32
    %c0_i32_0 = arith.constant 0 : i32
    %c0_i32_1 = arith.constant 0 : i32
    return %c0_i32, %c0_i32_0 : i32, i32
  }
  func.func @transform_19(%arg0: i32) -> (i32, i32) {
    %c0_i32 = arith.constant 0 : i32
    %c0_i32_0 = arith.constant 0 : i32
    %c0_i32_1 = arith.constant 0 : i32
    return %c0_i32, %c0_i32_0 : i32, i32
  }
  func.func @transform_20(%arg0: i32) -> (i32, i32) {
    %c0_i32 = arith.constant 0 : i32
    %c0_i32_0 = arith.constant 0 : i32
    %c0_i32_1 = arith.constant 0 : i32
    return %c0_i32, %c0_i32_0 : i32, i32
  }
  func.func @transform_21(%arg0: i32) -> (i32, i32) {
    %c0_i32 = arith.constant 0 : i32
    %c0_i32_0 = arith.constant 0 : i32
    %c0_i32_1 = arith.constant 0 : i32
    return %c0_i32, %c0_i32_0 : i32, i32
  }
  func.func @transform_22(%arg0: i32) -> (i32, i32) {
    %c0_i32 = arith.constant 0 : i32
    %c0_i32_0 = arith.constant 0 : i32
    %c0_i32_1 = arith.constant 0 : i32
    return %c0_i32, %c0_i32_0 : i32, i32
  }
  func.func @transform_23(%arg0: i32) -> (i32, i32) {
    %c0_i32 = arith.constant 0 : i32
    %c0_i32_0 = arith.constant 0 : i32
    %c0_i32_1 = arith.constant 0 : i32
    return %c0_i32, %c0_i32_0 : i32, i32
  }
  func.func @transform_24(%arg0: i32) -> (i32, i32) {
    %c0_i32 = arith.constant 0 : i32
    %c0_i32_0 = arith.constant 0 : i32
    %c0_i32_1 = arith.constant 0 : i32
    return %c0_i32, %c0_i32_0 : i32, i32
  }
  func.func @transform_25(%arg0: i32) -> (i32, i32) {
    %c0_i32 = arith.constant 0 : i32
    %c0_i32_0 = arith.constant 0 : i32
    %c0_i32_1 = arith.constant 0 : i32
    return %c0_i32, %c0_i32_0 : i32, i32
  }
  func.func @transform_26(%arg0: i32) -> (i32, i32) {
    %c0_i32 = arith.constant 0 : i32
    %c0_i32_0 = arith.constant 0 : i32
    %c0_i32_1 = arith.constant 0 : i32
    return %c0_i32, %c0_i32_0 : i32, i32
  }
  func.func @transform_27(%arg0: i32) -> (i32, i32) {
    %c0_i32 = arith.constant 0 : i32
    %c0_i32_0 = arith.constant 0 : i32
    %c0_i32_1 = arith.constant 0 : i32
    return %c0_i32, %c0_i32_0 : i32, i32
  }
  func.func @transform_28(%arg0: i32) -> (i32, i32) {
    %c0_i32 = arith.constant 0 : i32
    %c0_i32_0 = arith.constant 0 : i32
    %c0_i32_1 = arith.constant 0 : i32
    return %c0_i32, %c0_i32_0 : i32, i32
  }
  func.func @transform_29(%arg0: i32) -> (i32, i32) {
    %c0_i32 = arith.constant 0 : i32
    %c0_i32_0 = arith.constant 0 : i32
    %c0_i32_1 = arith.constant 0 : i32
    return %c0_i32, %c0_i32_0 : i32, i32
  }
  func.func @transform_30(%arg0: i32) -> (i32, i32) {
    %c0_i32 = arith.constant 0 : i32
    %c0_i32_0 = arith.constant 0 : i32
    %c0_i32_1 = arith.constant 0 : i32
    return %c0_i32, %c0_i32_0 : i32, i32
  }
  func.func @transform_31(%arg0: i32) -> (i32, i32) {
    %c0_i32 = arith.constant 0 : i32
    %c0_i32_0 = arith.constant 0 : i32
    %c0_i32_1 = arith.constant 0 : i32
    return %c0_i32, %c0_i32_0 : i32, i32
  }
  func.func @transform_32(%arg0: i32) -> (i32, i32) {
    %c0_i32 = arith.constant 0 : i32
    %c0_i32_0 = arith.constant 0 : i32
    %c0_i32_1 = arith.constant 0 : i32
    return %c0_i32, %c0_i32_0 : i32, i32
  }
  func.func @transform_33(%arg0: i32) -> (i32, i32) {
    %c0_i32 = arith.constant 0 : i32
    %c0_i32_0 = arith.constant 0 : i32
    %c0_i32_1 = arith.constant 0 : i32
    return %c0_i32, %c0_i32_0 : i32, i32
  }
  func.func @transform_34(%arg0: i32) -> (i32, i32) {
    %c0_i32 = arith.constant 0 : i32
    %c0_i32_0 = arith.constant 0 : i32
    %c0_i32_1 = arith.constant 0 : i32
    return %c0_i32, %c0_i32_0 : i32, i32
  }
  func.func @transform_35(%arg0: i32) -> (i32, i32) {
    %c0_i32 = arith.constant 0 : i32
    %c0_i32_0 = arith.constant 0 : i32
    %c0_i32_1 = arith.constant 0 : i32
    return %c0_i32, %c0_i32_0 : i32, i32
  }
  func.func @transform_36(%arg0: i32) -> (i32, i32) {
    %c0_i32 = arith.constant 0 : i32
    %c0_i32_0 = arith.constant 0 : i32
    %c0_i32_1 = arith.constant 0 : i32
    return %c0_i32, %c0_i32_0 : i32, i32
  }
  func.func @transform_37(%arg0: i32) -> (i32, i32) {
    %c0_i32 = arith.constant 0 : i32
    %c0_i32_0 = arith.constant 0 : i32
    %c0_i32_1 = arith.constant 0 : i32
    return %c0_i32, %c0_i32_0 : i32, i32
  }
  func.func @transform_38(%arg0: i32) -> (i32, i32) {
    %c0_i32 = arith.constant 0 : i32
    %c0_i32_0 = arith.constant 0 : i32
    %c0_i32_1 = arith.constant 0 : i32
    return %c0_i32, %c0_i32_0 : i32, i32
  }
  func.func @transform_39(%arg0: i32) -> (i32, i32) {
    %c0_i32 = arith.constant 0 : i32
    %c0_i32_0 = arith.constant 0 : i32
    %c0_i32_1 = arith.constant 0 : i32
    return %c0_i32, %c0_i32_0 : i32, i32
  }
  func.func @transform_40(%arg0: i32) -> (i32, i32) {
    %c0_i32 = arith.constant 0 : i32
    %c0_i32_0 = arith.constant 0 : i32
    %c0_i32_1 = arith.constant 0 : i32
    return %c0_i32, %c0_i32_0 : i32, i32
  }
  func.func @transform_41(%arg0: i32) -> (i32, i32) {
    %c0_i32 = arith.constant 0 : i32
    %c0_i32_0 = arith.constant 0 : i32
    %c0_i32_1 = arith.constant 0 : i32
    return %c0_i32, %c0_i32_0 : i32, i32
  }
  func.func @transform_42(%arg0: i32) -> (i32, i32) {
    %c0_i32 = arith.constant 0 : i32
    %c0_i32_0 = arith.constant 0 : i32
    %c0_i32_1 = arith.constant 0 : i32
    return %c0_i32, %c0_i32_0 : i32, i32
  }
  func.func @transform_43(%arg0: i32) -> (i32, i32) {
    %c0_i32 = arith.constant 0 : i32
    %c0_i32_0 = arith.constant 0 : i32
    %c0_i32_1 = arith.constant 0 : i32
    return %c0_i32, %c0_i32_0 : i32, i32
  }
  func.func @transform_44(%arg0: i32) -> (i32, i32) {
    %c0_i32 = arith.constant 0 : i32
    %c0_i32_0 = arith.constant 0 : i32
    %c0_i32_1 = arith.constant 0 : i32
    return %c0_i32, %c0_i32_0 : i32, i32
  }
  func.func @transform_45(%arg0: i32) -> (i32, i32) {
    %c0_i32 = arith.constant 0 : i32
    %c0_i32_0 = arith.constant 0 : i32
    %c0_i32_1 = arith.constant 0 : i32
    return %c0_i32, %c0_i32_0 : i32, i32
  }
  func.func @transform_46(%arg0: i32) -> (i32, i32) {
    %c0_i32 = arith.constant 0 : i32
    %c0_i32_0 = arith.constant 0 : i32
    %c0_i32_1 = arith.constant 0 : i32
    return %c0_i32, %c0_i32_0 : i32, i32
  }
  func.func @transform_47(%arg0: i32) -> (i32, i32) {
    %c0_i32 = arith.constant 0 : i32
    %c0_i32_0 = arith.constant 0 : i32
    %c0_i32_1 = arith.constant 0 : i32
    return %c0_i32, %c0_i32_0 : i32, i32
  }
  func.func @transform_48(%arg0: i32) -> (i32, i32) {
    %c0_i32 = arith.constant 0 : i32
    %c0_i32_0 = arith.constant 0 : i32
    %c0_i32_1 = arith.constant 0 : i32
    return %c0_i32, %c0_i32_0 : i32, i32
  }
  func.func @transform_49(%arg0: i32) -> (i32, i32) {
    %c0_i32 = arith.constant 0 : i32
    %c0_i32_0 = arith.constant 0 : i32
    %c0_i32_1 = arith.constant 0 : i32
    return %c0_i32, %c0_i32_0 : i32, i32
  }
  func.func @transform_50(%arg0: i32) -> (i32, i32) {
    %c0_i32 = arith.constant 0 : i32
    %c0_i32_0 = arith.constant 0 : i32
    %c0_i32_1 = arith.constant 0 : i32
    return %c0_i32, %c0_i32_0 : i32, i32
  }
  func.func @transform_51(%arg0: i32) -> (i32, i32) {
    %c0_i32 = arith.constant 0 : i32
    %c0_i32_0 = arith.constant 0 : i32
    %c0_i32_1 = arith.constant 0 : i32
    return %c0_i32, %c0_i32_0 : i32, i32
  }
  func.func @transform_52(%arg0: i32) -> (i32, i32) {
    %c0_i32 = arith.constant 0 : i32
    %c0_i32_0 = arith.constant 0 : i32
    %c0_i32_1 = arith.constant 0 : i32
    return %c0_i32, %c0_i32_0 : i32, i32
  }
  func.func @transform_53(%arg0: i32) -> (i32, i32) {
    %c0_i32 = arith.constant 0 : i32
    %c0_i32_0 = arith.constant 0 : i32
    %c0_i32_1 = arith.constant 0 : i32
    return %c0_i32, %c0_i32_0 : i32, i32
  }
  func.func @transform_54(%arg0: i32) -> (i32, i32) {
    %c0_i32 = arith.constant 0 : i32
    %c0_i32_0 = arith.constant 0 : i32
    %c0_i32_1 = arith.constant 0 : i32
    return %c0_i32, %c0_i32_0 : i32, i32
  }
  func.func @transform_55(%arg0: i32) -> (i32, i32) {
    %c0_i32 = arith.constant 0 : i32
    %c0_i32_0 = arith.constant 0 : i32
    %c0_i32_1 = arith.constant 0 : i32
    return %c0_i32, %c0_i32_0 : i32, i32
  }
  func.func @transform_56(%arg0: i32) -> (i32, i32) {
    %c0_i32 = arith.constant 0 : i32
    %c0_i32_0 = arith.constant 0 : i32
    %c0_i32_1 = arith.constant 0 : i32
    return %c0_i32, %c0_i32_0 : i32, i32
  }
  func.func @transform_57(%arg0: i32) -> (i32, i32, i32) {
    %c0_i32 = arith.constant 0 : i32
    %c0_i32_0 = arith.constant 0 : i32
    %c0_i32_1 = arith.constant 0 : i32
    return %arg0, %c0_i32, %c0_i32_0 : i32, i32, i32
  }
}

</mosaic_0001>

<llo_original>
// kernel: forward.1
$region0: #{forward.1}
  #allocation0 [shape = 'u32[]', space=smem, size = 0x4, offset = 0x4, fixed_abs, tag = 'smem constant byte address 0x4 - core index']
  #allocation1 [shape = 'u32[144,128]{1,0:T(1,128)}', space=vmem, size = 0x12000, scoped, tag = 'internal scratch']
  %s0 = inlined_call_operand.smem [shape: u32[58], index: -1, kind: input, shape index: {}]
  %s1 = sld [smem:[%s0]]
  %s2 = scalar_lea.smem %s0, 1
  %s3 = sld [smem:[%s2]]
  %s4 = scalar_lea.smem %s0, 2
  %s5 = sld [smem:[%s4]]
  %s6 = scalar_lea.smem %s0, 3
  %s7 = sld [smem:[%s6]]
  %s8 = scalar_lea.smem %s0, 4
  %s9 = sld [smem:[%s8]]
  %s10 = scalar_lea.smem %s0, 5
  %s11 = sld [smem:[%s10]]
  %s12 = scalar_lea.smem %s0, 6
  %s13 = sld [smem:[%s12]]
  %s14 = scalar_lea.smem %s0, 7
  %s15 = sld [smem:[%s14]]
  %s16 = scalar_lea.smem %s0, 8
  %s17 = sld [smem:[%s16]]
  %s18 = scalar_lea.smem %s0, 9
  %s19 = sld [smem:[%s18]]
  %s20 = scalar_lea.smem %s0, 10
  %s21 = sld [smem:[%s20]]
  %s22 = scalar_lea.smem %s0, 11
  %s23 = sld [smem:[%s22]]
  %s24 = scalar_lea.smem %s0, 12
  %s25 = sld [smem:[%s24]]
  %s26 = scalar_lea.smem %s0, 13
  %s27 = sld [smem:[%s26]]
  %s28 = scalar_lea.smem %s0, 14
  %s29 = sld [smem:[%s28]]
  %s30 = scalar_lea.smem %s0, 15
  %s31 = sld [smem:[%s30]]
  %s32 = scalar_lea.smem %s0, 16
  %s33 = sld [smem:[%s32]]
  %s34 = scalar_lea.smem %s0, 17
  %s35 = sld [smem:[%s34]]
  %s36 = scalar_lea.smem %s0, 18
  %s37 = sld [smem:[%s36]]
  %s38 = scalar_lea.smem %s0, 19
  %s39 = sld [smem:[%s38]]
  %s40 = scalar_lea.smem %s0, 20
  %s41 = sld [smem:[%s40]]
  %s42 = scalar_lea.smem %s0, 21
  %s43 = sld [smem:[%s42]]
  %s44 = scalar_lea.smem %s0, 22
  %s45 = sld [smem:[%s44]]
  %s46 = scalar_lea.smem %s0, 23
  %s47 = sld [smem:[%s46]]
  %s48 = scalar_lea.smem %s0, 24
  %s49 = sld [smem:[%s48]]
  %s50 = scalar_lea.smem %s0, 25
  %s51 = sld [smem:[%s50]]
  %s52 = scalar_lea.smem %s0, 26
  %s53 = sld [smem:[%s52]]
  %s54 = scalar_lea.smem %s0, 27
  %s55 = sld [smem:[%s54]]
  %s56 = scalar_lea.smem %s0, 28
  %s57 = sld [smem:[%s56]]
  %s58 = scalar_lea.smem %s0, 29
  %s59 = sld [smem:[%s58]]
  %s60 = scalar_lea.smem %s0, 30
  %s61 = sld [smem:[%s60]]
  %s62 = scalar_lea.smem %s0, 31
  %s63 = sld [smem:[%s62]]
  %s64 = scalar_lea.smem %s0, 32
  %s65 = sld [smem:[%s64]]
  %s66 = scalar_lea.smem %s0, 33
  %s67 = sld [smem:[%s66]]
  %s68 = scalar_lea.smem %s0, 34
  %s69 = sld [smem:[%s68]]
  %s70 = scalar_lea.smem %s0, 35
  %s71 = sld [smem:[%s70]]
  %s72 = scalar_lea.smem %s0, 36
  %s73 = sld [smem:[%s72]]
  %s74 = scalar_lea.smem %s0, 37
  %s75 = sld [smem:[%s74]]
  %s76 = scalar_lea.smem %s0, 38
  %s77 = sld [smem:[%s76]]
  %s78 = scalar_lea.smem %s0, 39
  %s79 = sld [smem:[%s78]]
  %s80 = scalar_lea.smem %s0, 40
  %s81 = sld [smem:[%s80]]
  %s82 = scalar_lea.smem %s0, 41
  %s83 = sld [smem:[%s82]]
  %s84 = scalar_lea.smem %s0, 42
  %s85 = sld [smem:[%s84]]
  %s86 = scalar_lea.smem %s0, 43
  %s87 = sld [smem:[%s86]]
  %s88 = scalar_lea.smem %s0, 44
  %s89 = sld [smem:[%s88]]
  %s90 = scalar_lea.smem %s0, 45
  %s91 = sld [smem:[%s90]]
  %s92 = scalar_lea.smem %s0, 46
  %s93 = sld [smem:[%s92]]
  %s94 = scalar_lea.smem %s0, 47
  %s95 = sld [smem:[%s94]]
  %s96 = scalar_lea.smem %s0, 48
  %s97 = sld [smem:[%s96]]
  %s98 = scalar_lea.smem %s0, 49
  %s99 = sld [smem:[%s98]]
  %s100 = scalar_lea.smem %s0, 50
  %s101 = sld [smem:[%s100]]
  %s102 = scalar_lea.smem %s0, 51
  %s103 = sld [smem:[%s102]]
  %s104 = scalar_lea.smem %s0, 52
  %s105 = sld [smem:[%s104]]
  %s106 = scalar_lea.smem %s0, 53
  %s107 = sld [smem:[%s106]]
  %s108 = scalar_lea.smem %s0, 54
  %s109 = sld [smem:[%s108]]
  %s110 = scalar_lea.smem %s0, 55
  %s111 = sld [smem:[%s110]]
  %s112 = scalar_lea.smem %s0, 56
  %s113 = sld [smem:[%s112]]
  %s114 = scalar_lea.smem %s0, 57
  %s115 = sld [smem:[%s114]]
  %s116 = sld [smem:[#allocation0]]
  $region357: #{forward.1} parent=0
    _
  %s118 = ssub.s32 1, %s116
  %s119 = scalar_select 0, %s118, %s116
  $region1: #{forward.1} parent=0
    #allocation2 [shape = 'u8[4096]{0}', space=vmem, size = 0x1000, scoped, tag = 'input window, operand 1, single buffered']
    #allocation3 [shape = 's32[2]{0}', space=sflag, size = 0x8, scoped, tag = 'scoped memory for forward.1']
    #allocation4 [shape = 's32[2]{0}', space=sflag, size = 0x8, scoped, tag = 'scoped memory for forward.1']
    #allocation5 [shape = 'u8[512]{0}', space=vmem, size = 0x400, scoped, tag = 'input window, operand 2, single buffered']
    #allocation6 [shape = 's32[1]{0}', space=sflag, size = 0x4, scoped, tag = 'scoped memory for forward.1']
    #allocation7 [shape = 'u8[512]{0}', space=vmem, size = 0x400, scoped, tag = 'input window, operand 3, single buffered']
    #allocation8 [shape = 'u8[512]{0}', space=vmem, size = 0x400, scoped, tag = 'input window, operand 4, single buffered']
    #allocation9 [shape = 's32[1]{0}', space=sflag, size = 0x4, scoped, tag = 'scoped memory for forward.1']
    #allocation10 [shape = 'u8[512]{0}', space=vmem, size = 0x400, scoped, tag = 'input window, operand 5, single buffered']
    #allocation11 [shape = 'u8[512]{0}', space=vmem, size = 0x400, scoped, tag = 'input window, operand 7, single buffered']
    #allocation12 [shape = 's32[1]{0}', space=sflag, size = 0x4, scoped, tag = 'scoped memory for forward.1']
    #allocation13 [shape = 'u8[512]{0}', space=vmem, size = 0x400, scoped, tag = 'input window, operand 9, single buffered']
    #allocation14 [shape = 'u8[512]{0}', space=vmem, size = 0x400, scoped, tag = 'input window, operand 11, single buffered']
    #allocation15 [shape = 's32[1]{0}', space=sflag, size = 0x4, scoped, tag = 'scoped memory for forward.1']
    #allocation16 [shape = 'u8[512]{0}', space=vmem, size = 0x400, scoped, tag = 'input window, operand 12, single buffered']
    #allocation17 [shape = 'u8[512]{0}', space=vmem, size = 0x400, scoped, tag = 'input window, operand 13, single buffered']
    #allocation18 [shape = 's32[1]{0}', space=sflag, size = 0x4, scoped, tag = 'scoped memory for forward.1']
    #allocation19 [shape = 'u8[512]{0}', space=vmem, size = 0x400, scoped, tag = 'input window, operand 15, single buffered']
    #allocation20 [shape = 'u8[512]{0}', space=vmem, size = 0x400, scoped, tag = 'input window, operand 17, single buffered']
    #allocation21 [shape = 's32[1]{0}', space=sflag, size = 0x4, scoped, tag = 'scoped memory for forward.1']
    #allocation22 [shape = 'u8[512]{0}', space=vmem, size = 0x400, scoped, tag = 'input window, operand 18, single buffered']
    #allocation23 [shape = 'u8[512]{0}', space=vmem, size = 0x400, scoped, tag = 'input window, operand 19, single buffered']
    #allocation24 [shape = 's32[1]{0}', space=sflag, size = 0x4, scoped, tag = 'scoped memory for forward.1']
    #allocation25 [shape = 'u8[512]{0}', space=vmem, size = 0x400, scoped, tag = 'input window, operand 21, single buffered']
    #allocation26 [shape = 'u8[512]{0}', space=vmem, size = 0x400, scoped, tag = 'input window, operand 23, single buffered']
    #allocation27 [shape = 's32[1]{0}', space=sflag, size = 0x4, scoped, tag = 'scoped memory for forward.1']
    #allocation28 [shape = 'u8[512]{0}', space=vmem, size = 0x400, scoped, tag = 'input window, operand 24, single buffered']
    #allocation29 [shape = 'u8[512]{0}', space=vmem, size = 0x400, scoped, tag = 'input window, operand 25, single buffered']
    #allocation30 [shape = 's32[1]{0}', space=sflag, size = 0x4, scoped, tag = 'scoped memory for forward.1']
    #allocation31 [shape = 'u8[512]{0}', space=vmem, size = 0x400, scoped, tag = 'input window, operand 27, single buffered']
    #allocation32 [shape = 'u8[512]{0}', space=vmem, size = 0x400, scoped, tag = 'input window, operand 29, single buffered']
    #allocation33 [shape = 's32[1]{0}', space=sflag, size = 0x4, scoped, tag = 'scoped memory for forward.1']
    #allocation34 [shape = 'u8[8192]{0}', space=vmem, size = 0x2000, scoped, tag = 'input window, operand 30, single buffered']
    #allocation35 [shape = 'u8[512]{0}', space=vmem, size = 0x400, scoped, tag = 'input window, operand 31, single buffered']
    #allocation36 [shape = 's32[1]{0}', space=sflag, size = 0x4, scoped, tag = 'scoped memory for forward.1']
    #allocation37 [shape = 'u8[512]{0}', space=vmem, size = 0x400, scoped, tag = 'input window, operand 32, single buffered']
    #allocation38 [shape = 'u8[512]{0}', space=vmem, size = 0x400, scoped, tag = 'input window, operand 34, single buffered']
    #allocation39 [shape = 's32[1]{0}', space=sflag, size = 0x4, scoped, tag = 'scoped memory for forward.1']
    #allocation40 [shape = 'u8[16384]{0}', space=vmem, size = 0x4000, scoped, tag = 'output window, operand 0']
    %120 = vsyncpa [#allocation3], 0
    %121 = vsyncpa [#allocation6], 0
    %122 = vsyncpa [#allocation9], 0
    %123 = vsyncpa [#allocation12], 0
    %124 = vsyncpa [#allocation15], 0
    %125 = vsyncpa [#allocation18], 0
    %126 = vsyncpa [#allocation21], 0
    %127 = vsyncpa [#allocation24], 0
    %128 = vsyncpa [#allocation27], 0
    %129 = vsyncpa [#allocation30], 0
    %130 = vsyncpa [#allocation33], 0
    %131 = vsyncpa [#allocation36], 0
    %132 = vsyncpa [#allocation39], 0
    %133 = vsyncpa [#allocation4], 0
    %s134 = scalar_lea.sflag [#allocation4], 1
    %135 = vsyncpa %s134, 0
    loop: start=0, step=1, limit=4
    $region2: #{forward.1} parent=1 // loop_pre_header
      _
    $region3: #{forward.1} parent=1 // loop_header
      %s137 = sphi 0, %s141
      %p138 = scmp.ge.s32.totalorder %s137, 4
      %s147 = sphi 0, %s149
      %s150 = sphi 0, %s147
      %s151 = sphi 0, %s150
      %s167 = sphi 0, %s151
      %s171 = sphi 0, %s171
      %s173 = sphi 0, %s171
      %s174 = sphi 0, %s173
      %s188 = sphi 0, %s174
      %s192 = sphi 0, %s192
      %s194 = sphi 0, %s192
      %s195 = sphi 0, %s194
      %s209 = sphi 0, %s195
      %s213 = sphi 0, %s213
      %s215 = sphi 0, %s213
      %s216 = sphi 0, %s215
      %s230 = sphi 0, %s216
      %s234 = sphi 0, %s234
      %s236 = sphi 0, %s234
      %s237 = sphi 0, %s236
      %s251 = sphi 0, %s237
      %s255 = sphi 0, %s255
      %s257 = sphi 0, %s255
      %s258 = sphi 0, %s257
      %s272 = sphi 0, %s258
      %s276 = sphi 0, %s276
      %s278 = sphi 0, %s276
      %s279 = sphi 0, %s278
      %s293 = sphi 0, %s279
      %s297 = sphi 0, %s297
      %s299 = sphi 0, %s297
      %s300 = sphi 0, %s299
      %s314 = sphi 0, %s300
      %s318 = sphi 0, %s318
      %s320 = sphi 0, %s318
      %s321 = sphi 0, %s320
      %s335 = sphi 0, %s321
      %s339 = sphi 0, %s339
      %s341 = sphi 0, %s339
      %s342 = sphi 0, %s341
      %s356 = sphi 0, %s342
      %s360 = sphi 0, %s360
      %s362 = sphi 0, %s360
      %s363 = sphi 0, %s362
      %s377 = sphi 0, %s363
      %s381 = sphi 0, %s381
      %s383 = sphi 0, %s381
      %s384 = sphi 0, %s383
      %s398 = sphi 0, %s384
      %s402 = sphi 0, %s402
      %s404 = sphi 0, %s402
      %s405 = sphi 0, %s404
      %s419 = sphi 0, %s405
      %s423 = sphi 0, %s423
      %s425 = sphi 0, %s423
      %s426 = sphi 0, %s425
      %s440 = sphi 0, %s426
      %s444 = sphi 0, %s444
      %s446 = sphi 0, %s444
      %s447 = sphi 0, %s446
      %s461 = sphi 0, %s447
      %s465 = sphi 0, %s465
      %s467 = sphi 0, %s465
      %s468 = sphi 0, %s467
      %s482 = sphi 0, %s468
      %s486 = sphi 0, %s486
      %s488 = sphi 0, %s486
      %s489 = sphi 0, %s488
      %s503 = sphi 0, %s489
      %s507 = sphi 0, %s507
      %s509 = sphi 0, %s507
      %s510 = sphi 0, %s509
      %s524 = sphi 0, %s510
      %s528 = sphi 0, %s528
      %s530 = sphi 0, %s528
      %s531 = sphi 0, %s530
      %s545 = sphi 0, %s531
      %s549 = sphi 0, %s549
      %s551 = sphi 0, %s549
      %s552 = sphi 0, %s551
      %s566 = sphi 0, %s552
      %s570 = sphi 0, %s570
      %s572 = sphi 0, %s570
      %s573 = sphi 0, %s572
      %s587 = sphi 0, %s573
      %s591 = sphi 0, %s591
      %s593 = sphi 0, %s591
      %s594 = sphi 0, %s593
      %s608 = sphi 0, %s594
      %s612 = sphi 0, %s612
      %s614 = sphi 0, %s612
      %s615 = sphi 0, %s614
      %s629 = sphi 0, %s615
      %s633 = sphi 0, %s633
      %s635 = sphi 0, %s633
      %s636 = sphi 0, %s635
      %s650 = sphi 0, %s636
      %s654 = sphi 0, %s654
      %s656 = sphi 0, %s654
      %s657 = sphi 0, %s656
      %s671 = sphi 0, %s657
      %s675 = sphi 0, %s675
      %s677 = sphi 0, %s675
      %s678 = sphi 0, %s677
      %s692 = sphi 0, %s678
      %s696 = sphi 0, %s696
      %s698 = sphi 0, %s696
      %s699 = sphi 0, %s698
      %s713 = sphi 0, %s699
      %s717 = sphi 0, %s717
      %s719 = sphi 0, %s717
      %s720 = sphi 0, %s719
      %s734 = sphi 0, %s720
      %s738 = sphi 0, %s738
      %s740 = sphi 0, %s738
      %s741 = sphi 0, %s740
      %s755 = sphi 0, %s741
      %s759 = sphi 0, %s759
      %s761 = sphi 0, %s759
      %s762 = sphi 0, %s761
      %s776 = sphi 0, %s762
      %s780 = sphi 0, %s780
      %s782 = sphi 0, %s780
      %s783 = sphi 0, %s782
      %s797 = sphi 0, %s783
      %s801 = sphi 0, %s801
      %s803 = sphi 0, %s801
      %s804 = sphi 0, %s803
      %s818 = sphi 0, %s804
      %s822 = sphi 0, %s822
      %s824 = sphi 0, %s822
      %s825 = sphi 0, %s824
      %s839 = sphi 0, %s825
      %s843 = sphi 0, %s843
      %s845 = sphi 0, %s843
      %s846 = sphi 0, %s845
      %s860 = sphi 0, %s846
      %s864 = sphi 0, %s864
      %s866 = sphi 0, %s864
      %s867 = sphi 0, %s866
      %s881 = sphi 0, %s867
      %s885 = sphi 0, %s885
      %s887 = sphi 0, %s885
      %s888 = sphi 0, %s887
      %s902 = sphi 0, %s888
      %s906 = sphi 0, %s906
      %s908 = sphi 0, %s906
      %s909 = sphi 0, %s908
      %s923 = sphi 0, %s909
      %s927 = sphi 0, %s927
      %s929 = sphi 0, %s927
      %s930 = sphi 0, %s929
      %s944 = sphi 0, %s930
      %s948 = sphi 0, %s948
      %s950 = sphi 0, %s948
      %s951 = sphi 0, %s950
      %s965 = sphi 0, %s951
      %s969 = sphi 0, %s969
      %s971 = sphi 0, %s969
      %s972 = sphi 0, %s971
      %s986 = sphi 0, %s972
      %s990 = sphi 0, %s990
      %s992 = sphi 0, %s990
      %s993 = sphi 0, %s992
      %s1007 = sphi 0, %s993
      %s1011 = sphi 0, %s1011
      %s1013 = sphi 0, %s1011
      %s1014 = sphi 0, %s1013
      %s1028 = sphi 0, %s1014
      %s1032 = sphi 0, %s1032
      %s1034 = sphi 0, %s1032
      %s1035 = sphi 0, %s1034
      %s1049 = sphi 0, %s1035
      %s1053 = sphi 0, %s1053
      %s1055 = sphi 0, %s1053
      %s1056 = sphi 0, %s1055
      %s1070 = sphi 0, %s1056
      %s1074 = sphi 0, %s1074
      %s1076 = sphi 0, %s1074
      %s1077 = sphi 0, %s1076
      %s1091 = sphi 0, %s1077
      %s1095 = sphi 0, %s1095
      %s1097 = sphi 0, %s1095
      %s1098 = sphi 0, %s1097
      %s1112 = sphi 0, %s1098
      %s1116 = sphi 0, %s1116
      %s1118 = sphi 0, %s1116
      %s1119 = sphi 0, %s1118
      %s1133 = sphi 0, %s1119
      %s1137 = sphi 0, %s1137
      %s1139 = sphi 0, %s1137
      %s1140 = sphi 0, %s1139
      %s1154 = sphi 0, %s1140
      %s1158 = sphi 0, %s1158
      %s1160 = sphi 0, %s1158
      %s1161 = sphi 0, %s1160
      %s1175 = sphi 0, %s1161
      %s1179 = sphi 0, %s1179
      %s1181 = sphi 0, %s1179
      %s1182 = sphi 0, %s1181
      %s1196 = sphi 0, %s1182
      %s1200 = sphi 0, %s1200
      %s1202 = sphi 0, %s1200
      %s1203 = sphi 0, %s1202
      %s1217 = sphi 0, %s1203
      %s1221 = sphi 0, %s1221
      %s1223 = sphi 0, %s1221
      %s1224 = sphi 0, %s1223
      %s1238 = sphi 0, %s1224
      %s1242 = sphi 0, %s1242
      %s1244 = sphi 0, %s1242
      %s1245 = sphi 0, %s1244
      %s1259 = sphi 0, %s1245
      %s1263 = sphi 0, %s1263
      %s1265 = sphi 0, %s1263
      %s1266 = sphi 0, %s1265
      %s1280 = sphi 0, %s1266
      %s1284 = sphi 0, %s1284
      %s1286 = sphi 0, %s1284
      %s1287 = sphi 0, %s1286
      %s1301 = sphi 0, %s1287
      %s1305 = sphi 0, %s1305
      %s1307 = sphi 0, %s1305
      %s1308 = sphi 0, %s1307
      %s1322 = sphi 0, %s1308
      %s1326 = sphi 0, %s1326
      %s1328 = sphi 0, %s1326
      %s1329 = sphi 0, %s1328
      %s1343 = sphi 0, %s1329
      %s1349 = sphi 0, %s1351
      %s1352 = sphi 0, %s1349
      %s1353 = sphi 0, %s1352
      %s1369 = sphi 0, %s1353
    $region4: #{forward.1} parent=1 // loop_header_branch
      %140 = sbr.rel (%p138) target = $region8
    $region5: #{forward.1} parent=1 // loop_body
      %s142 = ssub.s32 %s137, 1
      %s143 = ssub.s32 %s137, 2
      %s144 = sadd.s32 %s137, 1
      %s145 = ssub.s32 %s137, %s144
      %p146 = scmp.eq.s32.totalorder %s145, 0
      %s148 = sadd.s32 %s147, 1
      %s149 = scalar_select %p146, %s147, %s148
      %p152 = pneg %p146
      %p153 = scmp.eq.s32.totalorder %s137, 1
      %p154 = por %p152, %p153
      %p155 = scmp.ne.s32.totalorder %s147, %s150
      %p156 = scmp.eq.s32.totalorder %s137, 0
      %p157 = por %p155, %p156
      %p158 = scmp.ne.s32.totalorder %s147, %s150
      %p159 = scmp.eq.s32.totalorder %s142, 1
      %p160 = por %p158, %p159
      %p161 = scmp.ne.s32.totalorder %s150, %s151
      %p162 = scmp.eq.s32.totalorder %s142, 0
      %p163 = por %p161, %p162
      %p164 = scmp.ne.s32.totalorder %s150, %s151
      %p165 = scmp.eq.s32.totalorder %s143, 1
      %p166 = por %p164, %p165
      %p168 = scmp.ne.s32.totalorder %s151, %s167
      %p169 = scmp.eq.s32.totalorder %s143, 0
      %p170 = por %p168, %p169
      %s172 = sadd.s32 %s171, 1
      %p175 = scmp.eq.s32.totalorder %s137, 1
      %p176 = scmp.ne.s32.totalorder %s171, %s173
      %p177 = scmp.eq.s32.totalorder %s137, 0
      %p178 = por %p176, %p177
      %p179 = scmp.ne.s32.totalorder %s171, %s173
      %p180 = scmp.eq.s32.totalorder %s142, 1
      %p181 = por %p179, %p180
      %p182 = scmp.ne.s32.totalorder %s173, %s174
      %p183 = scmp.eq.s32.totalorder %s142, 0
      %p184 = por %p182, %p183
      %p185 = scmp.ne.s32.totalorder %s173, %s174
      %p186 = scmp.eq.s32.totalorder %s143, 1
      %p187 = por %p185, %p186
      %p189 = scmp.ne.s32.totalorder %s174, %s188
      %p190 = scmp.eq.s32.totalorder %s143, 0
      %p191 = por %p189, %p190
      %s193 = sadd.s32 %s192, 1
      %p196 = scmp.eq.s32.totalorder %s137, 1
      %p197 = scmp.ne.s32.totalorder %s192, %s194
      %p198 = scmp.eq.s32.totalorder %s137, 0
      %p199 = por %p197, %p198
      %p200 = scmp.ne.s32.totalorder %s192, %s194
      %p201 = scmp.eq.s32.totalorder %s142, 1
      %p202 = por %p200, %p201
      %p203 = scmp.ne.s32.totalorder %s194, %s195
      %p204 = scmp.eq.s32.totalorder %s142, 0
      %p205 = por %p203, %p204
      %p206 = scmp.ne.s32.totalorder %s194, %s195
      %p207 = scmp.eq.s32.totalorder %s143, 1
      %p208 = por %p206, %p207
      %p210 = scmp.ne.s32.totalorder %s195, %s209
      %p211 = scmp.eq.s32.totalorder %s143, 0
      %p212 = por %p210, %p211
      %s214 = sadd.s32 %s213, 1
      %p217 = scmp.eq.s32.totalorder %s137, 1
      %p218 = scmp.ne.s32.totalorder %s213, %s215
      %p219 = scmp.eq.s32.totalorder %s137, 0
      %p220 = por %p218, %p219
      %p221 = scmp.ne.s32.totalorder %s213, %s215
      %p222 = scmp.eq.s32.totalorder %s142, 1
      %p223 = por %p221, %p222
      %p224 = scmp.ne.s32.totalorder %s215, %s216
      %p225 = scmp.eq.s32.totalorder %s142, 0
      %p226 = por %p224, %p225
      %p227 = scmp.ne.s32.totalorder %s215, %s216
      %p228 = scmp.eq.s32.totalorder %s143, 1
      %p229 = por %p227, %p228
      %p231 = scmp.ne.s32.totalorder %s216, %s230
      %p232 = scmp.eq.s32.totalorder %s143, 0
      %p233 = por %p231, %p232
      %s235 = sadd.s32 %s234, 1
      %p238 = scmp.eq.s32.totalorder %s137, 1
      %p239 = scmp.ne.s32.totalorder %s234, %s236
      %p240 = scmp.eq.s32.totalorder %s137, 0
      %p241 = por %p239, %p240
      %p242 = scmp.ne.s32.totalorder %s234, %s236
      %p243 = scmp.eq.s32.totalorder %s142, 1
      %p244 = por %p242, %p243
      %p245 = scmp.ne.s32.totalorder %s236, %s237
      %p246 = scmp.eq.s32.totalorder %s142, 0
      %p247 = por %p245, %p246
      %p248 = scmp.ne.s32.totalorder %s236, %s237
      %p249 = scmp.eq.s32.totalorder %s143, 1
      %p250 = por %p248, %p249
      %p252 = scmp.ne.s32.totalorder %s237, %s251
      %p253 = scmp.eq.s32.totalorder %s143, 0
      %p254 = por %p252, %p253
      %s256 = sadd.s32 %s255, 1
      %p259 = scmp.eq.s32.totalorder %s137, 1
      %p260 = scmp.ne.s32.totalorder %s255, %s257
      %p261 = scmp.eq.s32.totalorder %s137, 0
      %p262 = por %p260, %p261
      %p263 = scmp.ne.s32.totalorder %s255, %s257
      %p264 = scmp.eq.s32.totalorder %s142, 1
      %p265 = por %p263, %p264
      %p266 = scmp.ne.s32.totalorder %s257, %s258
      %p267 = scmp.eq.s32.totalorder %s142, 0
      %p268 = por %p266, %p267
      %p269 = scmp.ne.s32.totalorder %s257, %s258
      %p270 = scmp.eq.s32.totalorder %s143, 1
      %p271 = por %p269, %p270
      %p273 = scmp.ne.s32.totalorder %s258, %s272
      %p274 = scmp.eq.s32.totalorder %s143, 0
      %p275 = por %p273, %p274
      %s277 = sadd.s32 %s276, 1
      %p280 = scmp.eq.s32.totalorder %s137, 1
      %p281 = scmp.ne.s32.totalorder %s276, %s278
      %p282 = scmp.eq.s32.totalorder %s137, 0
      %p283 = por %p281, %p282
      %p284 = scmp.ne.s32.totalorder %s276, %s278
      %p285 = scmp.eq.s32.totalorder %s142, 1
      %p286 = por %p284, %p285
      %p287 = scmp.ne.s32.totalorder %s278, %s279
      %p288 = scmp.eq.s32.totalorder %s142, 0
      %p289 = por %p287, %p288
      %p290 = scmp.ne.s32.totalorder %s278, %s279
      %p291 = scmp.eq.s32.totalorder %s143, 1
      %p292 = por %p290, %p291
      %p294 = scmp.ne.s32.totalorder %s279, %s293
      %p295 = scmp.eq.s32.totalorder %s143, 0
      %p296 = por %p294, %p295
      %s298 = sadd.s32 %s297, 1
      %p301 = scmp.eq.s32.totalorder %s137, 1
      %p302 = scmp.ne.s32.totalorder %s297, %s299
      %p303 = scmp.eq.s32.totalorder %s137, 0
      %p304 = por %p302, %p303
      %p305 = scmp.ne.s32.totalorder %s297, %s299
      %p306 = scmp.eq.s32.totalorder %s142, 1
      %p307 = por %p305, %p306
      %p308 = scmp.ne.s32.totalorder %s299, %s300
      %p309 = scmp.eq.s32.totalorder %s142, 0
      %p310 = por %p308, %p309
      %p311 = scmp.ne.s32.totalorder %s299, %s300
      %p312 = scmp.eq.s32.totalorder %s143, 1
      %p313 = por %p311, %p312
      %p315 = scmp.ne.s32.totalorder %s300, %s314
      %p316 = scmp.eq.s32.totalorder %s143, 0
      %p317 = por %p315, %p316
      %s319 = sadd.s32 %s318, 1
      %p322 = scmp.eq.s32.totalorder %s137, 1
      %p323 = scmp.ne.s32.totalorder %s318, %s320
      %p324 = scmp.eq.s32.totalorder %s137, 0
      %p325 = por %p323, %p324
      %p326 = scmp.ne.s32.totalorder %s318, %s320
      %p327 = scmp.eq.s32.totalorder %s142, 1
      %p328 = por %p326, %p327
      %p329 = scmp.ne.s32.totalorder %s320, %s321
      %p330 = scmp.eq.s32.totalorder %s142, 0
      %p331 = por %p329, %p330
      %p332 = scmp.ne.s32.totalorder %s320, %s321
      %p333 = scmp.eq.s32.totalorder %s143, 1
      %p334 = por %p332, %p333
      %p336 = scmp.ne.s32.totalorder %s321, %s335
      %p337 = scmp.eq.s32.totalorder %s143, 0
      %p338 = por %p336, %p337
      %s340 = sadd.s32 %s339, 1
      %p343 = scmp.eq.s32.totalorder %s137, 1
      %p344 = scmp.ne.s32.totalorder %s339, %s341
      %p345 = scmp.eq.s32.totalorder %s137, 0
      %p346 = por %p344, %p345
      %p347 = scmp.ne.s32.totalorder %s339, %s341
      %p348 = scmp.eq.s32.totalorder %s142, 1
      %p349 = por %p347, %p348
      %p350 = scmp.ne.s32.totalorder %s341, %s342
      %p351 = scmp.eq.s32.totalorder %s142, 0
      %p352 = por %p350, %p351
      %p353 = scmp.ne.s32.totalorder %s341, %s342
      %p354 = scmp.eq.s32.totalorder %s143, 1
      %p355 = por %p353, %p354
      %p357 = scmp.ne.s32.totalorder %s342, %s356
      %p358 = scmp.eq.s32.totalorder %s143, 0
      %p359 = por %p357, %p358
      %s361 = sadd.s32 %s360, 1
      %p364 = scmp.eq.s32.totalorder %s137, 1
      %p365 = scmp.ne.s32.totalorder %s360, %s362
      %p366 = scmp.eq.s32.totalorder %s137, 0
      %p367 = por %p365, %p366
      %p368 = scmp.ne.s32.totalorder %s360, %s362
      %p369 = scmp.eq.s32.totalorder %s142, 1
      %p370 = por %p368, %p369
      %p371 = scmp.ne.s32.totalorder %s362, %s363
      %p372 = scmp.eq.s32.totalorder %s142, 0
      %p373 = por %p371, %p372
      %p374 = scmp.ne.s32.totalorder %s362, %s363
      %p375 = scmp.eq.s32.totalorder %s143, 1
      %p376 = por %p374, %p375
      %p378 = scmp.ne.s32.totalorder %s363, %s377
      %p379 = scmp.eq.s32.totalorder %s143, 0
      %p380 = por %p378, %p379
      %s382 = sadd.s32 %s381, 1
      %p385 = scmp.eq.s32.totalorder %s137, 1
      %p386 = scmp.ne.s32.totalorder %s381, %s383
      %p387 = scmp.eq.s32.totalorder %s137, 0
      %p388 = por %p386, %p387
      %p389 = scmp.ne.s32.totalorder %s381, %s383
      %p390 = scmp.eq.s32.totalorder %s142, 1
      %p391 = por %p389, %p390
      %p392 = scmp.ne.s32.totalorder %s383, %s384
      %p393 = scmp.eq.s32.totalorder %s142, 0
      %p394 = por %p392, %p393
      %p395 = scmp.ne.s32.totalorder %s383, %s384
      %p396 = scmp.eq.s32.totalorder %s143, 1
      %p397 = por %p395, %p396
      %p399 = scmp.ne.s32.totalorder %s384, %s398
      %p400 = scmp.eq.s32.totalorder %s143, 0
      %p401 = por %p399, %p400
      %s403 = sadd.s32 %s402, 1
      %p406 = scmp.eq.s32.totalorder %s137, 1
      %p407 = scmp.ne.s32.totalorder %s402, %s404
      %p408 = scmp.eq.s32.totalorder %s137, 0
      %p409 = por %p407, %p408
      %p410 = scmp.ne.s32.totalorder %s402, %s404
      %p411 = scmp.eq.s32.totalorder %s142, 1
      %p412 = por %p410, %p411
      %p413 = scmp.ne.s32.totalorder %s404, %s405
      %p414 = scmp.eq.s32.totalorder %s142, 0
      %p415 = por %p413, %p414
      %p416 = scmp.ne.s32.totalorder %s404, %s405
      %p417 = scmp.eq.s32.totalorder %s143, 1
      %p418 = por %p416, %p417
      %p420 = scmp.ne.s32.totalorder %s405, %s419
      %p421 = scmp.eq.s32.totalorder %s143, 0
      %p422 = por %p420, %p421
      %s424 = sadd.s32 %s423, 1
      %p427 = scmp.eq.s32.totalorder %s137, 1
      %p428 = scmp.ne.s32.totalorder %s423, %s425
      %p429 = scmp.eq.s32.totalorder %s137, 0
      %p430 = por %p428, %p429
      %p431 = scmp.ne.s32.totalorder %s423, %s425
      %p432 = scmp.eq.s32.totalorder %s142, 1
      %p433 = por %p431, %p432
      %p434 = scmp.ne.s32.totalorder %s425, %s426
      %p435 = scmp.eq.s32.totalorder %s142, 0
      %p436 = por %p434, %p435
      %p437 = scmp.ne.s32.totalorder %s425, %s426
      %p438 = scmp.eq.s32.totalorder %s143, 1
      %p439 = por %p437, %p438
      %p441 = scmp.ne.s32.totalorder %s426, %s440
      %p442 = scmp.eq.s32.totalorder %s143, 0
      %p443 = por %p441, %p442
      %s445 = sadd.s32 %s444, 1
      %p448 = scmp.eq.s32.totalorder %s137, 1
      %p449 = scmp.ne.s32.totalorder %s444, %s446
      %p450 = scmp.eq.s32.totalorder %s137, 0
      %p451 = por %p449, %p450
      %p452 = scmp.ne.s32.totalorder %s444, %s446
      %p453 = scmp.eq.s32.totalorder %s142, 1
      %p454 = por %p452, %p453
      %p455 = scmp.ne.s32.totalorder %s446, %s447
      %p456 = scmp.eq.s32.totalorder %s142, 0
      %p457 = por %p455, %p456
      %p458 = scmp.ne.s32.totalorder %s446, %s447
      %p459 = scmp.eq.s32.totalorder %s143, 1
      %p460 = por %p458, %p459
      %p462 = scmp.ne.s32.totalorder %s447, %s461
      %p463 = scmp.eq.s32.totalorder %s143, 0
      %p464 = por %p462, %p463
      %s466 = sadd.s32 %s465, 1
      %p469 = scmp.eq.s32.totalorder %s137, 1
      %p470 = scmp.ne.s32.totalorder %s465, %s467
      %p471 = scmp.eq.s32.totalorder %s137, 0
      %p472 = por %p470, %p471
      %p473 = scmp.ne.s32.totalorder %s465, %s467
      %p474 = scmp.eq.s32.totalorder %s142, 1
      %p475 = por %p473, %p474
      %p476 = scmp.ne.s32.totalorder %s467, %s468
      %p477 = scmp.eq.s32.totalorder %s142, 0
      %p478 = por %p476, %p477
      %p479 = scmp.ne.s32.totalorder %s467, %s468
      %p480 = scmp.eq.s32.totalorder %s143, 1
      %p481 = por %p479, %p480
      %p483 = scmp.ne.s32.totalorder %s468, %s482
      %p484 = scmp.eq.s32.totalorder %s143, 0
      %p485 = por %p483, %p484
      %s487 = sadd.s32 %s486, 1
      %p490 = scmp.eq.s32.totalorder %s137, 1
      %p491 = scmp.ne.s32.totalorder %s486, %s488
      %p492 = scmp.eq.s32.totalorder %s137, 0
      %p493 = por %p491, %p492
      %p494 = scmp.ne.s32.totalorder %s486, %s488
      %p495 = scmp.eq.s32.totalorder %s142, 1
      %p496 = por %p494, %p495
      %p497 = scmp.ne.s32.totalorder %s488, %s489
      %p498 = scmp.eq.s32.totalorder %s142, 0
      %p499 = por %p497, %p498
      %p500 = scmp.ne.s32.totalorder %s488, %s489
      %p501 = scmp.eq.s32.totalorder %s143, 1
      %p502 = por %p500, %p501
      %p504 = scmp.ne.s32.totalorder %s489, %s503
      %p505 = scmp.eq.s32.totalorder %s143, 0
      %p506 = por %p504, %p505
      %s508 = sadd.s32 %s507, 1
      %p511 = scmp.eq.s32.totalorder %s137, 1
      %p512 = scmp.ne.s32.totalorder %s507, %s509
      %p513 = scmp.eq.s32.totalorder %s137, 0
      %p514 = por %p512, %p513
      %p515 = scmp.ne.s32.totalorder %s507, %s509
      %p516 = scmp.eq.s32.totalorder %s142, 1
      %p517 = por %p515, %p516
      %p518 = scmp.ne.s32.totalorder %s509, %s510
      %p519 = scmp.eq.s32.totalorder %s142, 0
      %p520 = por %p518, %p519
      %p521 = scmp.ne.s32.totalorder %s509, %s510
      %p522 = scmp.eq.s32.totalorder %s143, 1
      %p523 = por %p521, %p522
      %p525 = scmp.ne.s32.totalorder %s510, %s524
      %p526 = scmp.eq.s32.totalorder %s143, 0
      %p527 = por %p525, %p526
      %s529 = sadd.s32 %s528, 1
      %p532 = scmp.eq.s32.totalorder %s137, 1
      %p533 = scmp.ne.s32.totalorder %s528, %s530
      %p534 = scmp.eq.s32.totalorder %s137, 0
      %p535 = por %p533, %p534
      %p536 = scmp.ne.s32.totalorder %s528, %s530
      %p537 = scmp.eq.s32.totalorder %s142, 1
      %p538 = por %p536, %p537
      %p539 = scmp.ne.s32.totalorder %s530, %s531
      %p540 = scmp.eq.s32.totalorder %s142, 0
      %p541 = por %p539, %p540
      %p542 = scmp.ne.s32.totalorder %s530, %s531
      %p543 = scmp.eq.s32.totalorder %s143, 1
      %p544 = por %p542, %p543
      %p546 = scmp.ne.s32.totalorder %s531, %s545
      %p547 = scmp.eq.s32.totalorder %s143, 0
      %p548 = por %p546, %p547
      %s550 = sadd.s32 %s549, 1
      %p553 = scmp.eq.s32.totalorder %s137, 1
      %p554 = scmp.ne.s32.totalorder %s549, %s551
      %p555 = scmp.eq.s32.totalorder %s137, 0
      %p556 = por %p554, %p555
      %p557 = scmp.ne.s32.totalorder %s549, %s551
      %p558 = scmp.eq.s32.totalorder %s142, 1
      %p559 = por %p557, %p558
      %p560 = scmp.ne.s32.totalorder %s551, %s552
      %p561 = scmp.eq.s32.totalorder %s142, 0
      %p562 = por %p560, %p561
      %p563 = scmp.ne.s32.totalorder %s551, %s552
      %p564 = scmp.eq.s32.totalorder %s143, 1
      %p565 = por %p563, %p564
      %p567 = scmp.ne.s32.totalorder %s552, %s566
      %p568 = scmp.eq.s32.totalorder %s143, 0
      %p569 = por %p567, %p568
      %s571 = sadd.s32 %s570, 1
      %p574 = scmp.eq.s32.totalorder %s137, 1
      %p575 = scmp.ne.s32.totalorder %s570, %s572
      %p576 = scmp.eq.s32.totalorder %s137, 0
      %p577 = por %p575, %p576
      %p578 = scmp.ne.s32.totalorder %s570, %s572
      %p579 = scmp.eq.s32.totalorder %s142, 1
      %p580 = por %p578, %p579
      %p581 = scmp.ne.s32.totalorder %s572, %s573
      %p582 = scmp.eq.s32.totalorder %s142, 0
      %p583 = por %p581, %p582
      %p584 = scmp.ne.s32.totalorder %s572, %s573
      %p585 = scmp.eq.s32.totalorder %s143, 1
      %p586 = por %p584, %p585
      %p588 = scmp.ne.s32.totalorder %s573, %s587
      %p589 = scmp.eq.s32.totalorder %s143, 0
      %p590 = por %p588, %p589
      %s592 = sadd.s32 %s591, 1
      %p595 = scmp.eq.s32.totalorder %s137, 1
      %p596 = scmp.ne.s32.totalorder %s591, %s593
      %p597 = scmp.eq.s32.totalorder %s137, 0
      %p598 = por %p596, %p597
      %p599 = scmp.ne.s32.totalorder %s591, %s593
      %p600 = scmp.eq.s32.totalorder %s142, 1
      %p601 = por %p599, %p600
      %p602 = scmp.ne.s32.totalorder %s593, %s594
      %p603 = scmp.eq.s32.totalorder %s142, 0
      %p604 = por %p602, %p603
      %p605 = scmp.ne.s32.totalorder %s593, %s594
      %p606 = scmp.eq.s32.totalorder %s143, 1
      %p607 = por %p605, %p606
      %p609 = scmp.ne.s32.totalorder %s594, %s608
      %p610 = scmp.eq.s32.totalorder %s143, 0
      %p611 = por %p609, %p610
      %s613 = sadd.s32 %s612, 1
      %p616 = scmp.eq.s32.totalorder %s137, 1
      %p617 = scmp.ne.s32.totalorder %s612, %s614
      %p618 = scmp.eq.s32.totalorder %s137, 0
      %p619 = por %p617, %p618
      %p620 = scmp.ne.s32.totalorder %s612, %s614
      %p621 = scmp.eq.s32.totalorder %s142, 1
      %p622 = por %p620, %p621
      %p623 = scmp.ne.s32.totalorder %s614, %s615
      %p624 = scmp.eq.s32.totalorder %s142, 0
      %p625 = por %p623, %p624
      %p626 = scmp.ne.s32.totalorder %s614, %s615
      %p627 = scmp.eq.s32.totalorder %s143, 1
      %p628 = por %p626, %p627
      %p630 = scmp.ne.s32.totalorder %s615, %s629
      %p631 = scmp.eq.s32.totalorder %s143, 0
      %p632 = por %p630, %p631
      %s634 = sadd.s32 %s633, 1
      %p637 = scmp.eq.s32.totalorder %s137, 1
      %p638 = scmp.ne.s32.totalorder %s633, %s635
      %p639 = scmp.eq.s32.totalorder %s137, 0
      %p640 = por %p638, %p639
      %p641 = scmp.ne.s32.totalorder %s633, %s635
      %p642 = scmp.eq.s32.totalorder %s142, 1
      %p643 = por %p641, %p642
      %p644 = scmp.ne.s32.totalorder %s635, %s636
      %p645 = scmp.eq.s32.totalorder %s142, 0
      %p646 = por %p644, %p645
      %p647 = scmp.ne.s32.totalorder %s635, %s636
      %p648 = scmp.eq.s32.totalorder %s143, 1
      %p649 = por %p647, %p648
      %p651 = scmp.ne.s32.totalorder %s636, %s650
      %p652 = scmp.eq.s32.totalorder %s143, 0
      %p653 = por %p651, %p652
      %s655 = sadd.s32 %s654, 1
      %p658 = scmp.eq.s32.totalorder %s137, 1
      %p659 = scmp.ne.s32.totalorder %s654, %s656
      %p660 = scmp.eq.s32.totalorder %s137, 0
      %p661 = por %p659, %p660
      %p662 = scmp.ne.s32.totalorder %s654, %s656
      %p663 = scmp.eq.s32.totalorder %s142, 1
      %p664 = por %p662, %p663
      %p665 = scmp.ne.s32.totalorder %s656, %s657
      %p666 = scmp.eq.s32.totalorder %s142, 0
      %p667 = por %p665, %p666
      %p668 = scmp.ne.s32.totalorder %s656, %s657
      %p669 = scmp.eq.s32.totalorder %s143, 1
      %p670 = por %p668, %p669
      %p672 = scmp.ne.s32.totalorder %s657, %s671
      %p673 = scmp.eq.s32.totalorder %s143, 0
      %p674 = por %p672, %p673
      %s676 = sadd.s32 %s675, 1
      %p679 = scmp.eq.s32.totalorder %s137, 1
      %p680 = scmp.ne.s32.totalorder %s675, %s677
      %p681 = scmp.eq.s32.totalorder %s137, 0
      %p682 = por %p680, %p681
      %p683 = scmp.ne.s32.totalorder %s675, %s677
      %p684 = scmp.eq.s32.totalorder %s142, 1
      %p685 = por %p683, %p684
      %p686 = scmp.ne.s32.totalorder %s677, %s678
      %p687 = scmp.eq.s32.totalorder %s142, 0
      %p688 = por %p686, %p687
      %p689 = scmp.ne.s32.totalorder %s677, %s678
      %p690 = scmp.eq.s32.totalorder %s143, 1
      %p691 = por %p689, %p690
      %p693 = scmp.ne.s32.totalorder %s678, %s692
      %p694 = scmp.eq.s32.totalorder %s143, 0
      %p695 = por %p693, %p694
      %s697 = sadd.s32 %s696, 1
      %p700 = scmp.eq.s32.totalorder %s137, 1
      %p701 = scmp.ne.s32.totalorder %s696, %s698
      %p702 = scmp.eq.s32.totalorder %s137, 0
      %p703 = por %p701, %p702
      %p704 = scmp.ne.s32.totalorder %s696, %s698
      %p705 = scmp.eq.s32.totalorder %s142, 1
      %p706 = por %p704, %p705
      %p707 = scmp.ne.s32.totalorder %s698, %s699
      %p708 = scmp.eq.s32.totalorder %s142, 0
      %p709 = por %p707, %p708
      %p710 = scmp.ne.s32.totalorder %s698, %s699
      %p711 = scmp.eq.s32.totalorder %s143, 1
      %p712 = por %p710, %p711
      %p714 = scmp.ne.s32.totalorder %s699, %s713
      %p715 = scmp.eq.s32.totalorder %s143, 0
      %p716 = por %p714, %p715
      %s718 = sadd.s32 %s717, 1
      %p721 = scmp.eq.s32.totalorder %s137, 1
      %p722 = scmp.ne.s32.totalorder %s717, %s719
      %p723 = scmp.eq.s32.totalorder %s137, 0
      %p724 = por %p722, %p723
      %p725 = scmp.ne.s32.totalorder %s717, %s719
      %p726 = scmp.eq.s32.totalorder %s142, 1
      %p727 = por %p725, %p726
      %p728 = scmp.ne.s32.totalorder %s719, %s720
      %p729 = scmp.eq.s32.totalorder %s142, 0
      %p730 = por %p728, %p729
      %p731 = scmp.ne.s32.totalorder %s719, %s720
      %p732 = scmp.eq.s32.totalorder %s143, 1
      %p733 = por %p731, %p732
      %p735 = scmp.ne.s32.totalorder %s720, %s734
      %p736 = scmp.eq.s32.totalorder %s143, 0
      %p737 = por %p735, %p736
      %s739 = sadd.s32 %s738, 1
      %p742 = scmp.eq.s32.totalorder %s137, 1
      %p743 = scmp.ne.s32.totalorder %s738, %s740
      %p744 = scmp.eq.s32.totalorder %s137, 0
      %p745 = por %p743, %p744
      %p746 = scmp.ne.s32.totalorder %s738, %s740
      %p747 = scmp.eq.s32.totalorder %s142, 1
      %p748 = por %p746, %p747
      %p749 = scmp.ne.s32.totalorder %s740, %s741
      %p750 = scmp.eq.s32.totalorder %s142, 0
      %p751 = por %p749, %p750
      %p752 = scmp.ne.s32.totalorder %s740, %s741
      %p753 = scmp.eq.s32.totalorder %s143, 1
      %p754 = por %p752, %p753
      %p756 = scmp.ne.s32.totalorder %s741, %s755
      %p757 = scmp.eq.s32.totalorder %s143, 0
      %p758 = por %p756, %p757
      %s760 = sadd.s32 %s759, 1
      %p763 = scmp.eq.s32.totalorder %s137, 1
      %p764 = scmp.ne.s32.totalorder %s759, %s761
      %p765 = scmp.eq.s32.totalorder %s137, 0
      %p766 = por %p764, %p765
      %p767 = scmp.ne.s32.totalorder %s759, %s761
      %p768 = scmp.eq.s32.totalorder %s142, 1
      %p769 = por %p767, %p768
      %p770 = scmp.ne.s32.totalorder %s761, %s762
      %p771 = scmp.eq.s32.totalorder %s142, 0
      %p772 = por %p770, %p771
      %p773 = scmp.ne.s32.totalorder %s761, %s762
      %p774 = scmp.eq.s32.totalorder %s143, 1
      %p775 = por %p773, %p774
      %p777 = scmp.ne.s32.totalorder %s762, %s776
      %p778 = scmp.eq.s32.totalorder %s143, 0
      %p779 = por %p777, %p778
      %s781 = sadd.s32 %s780, 1
      %p784 = scmp.eq.s32.totalorder %s137, 1
      %p785 = scmp.ne.s32.totalorder %s780, %s782
      %p786 = scmp.eq.s32.totalorder %s137, 0
      %p787 = por %p785, %p786
      %p788 = scmp.ne.s32.totalorder %s780, %s782
      %p789 = scmp.eq.s32.totalorder %s142, 1
      %p790 = por %p788, %p789
      %p791 = scmp.ne.s32.totalorder %s782, %s783
      %p792 = scmp.eq.s32.totalorder %s142, 0
      %p793 = por %p791, %p792
      %p794 = scmp.ne.s32.totalorder %s782, %s783
      %p795 = scmp.eq.s32.totalorder %s143, 1
      %p796 = por %p794, %p795
      %p798 = scmp.ne.s32.totalorder %s783, %s797
      %p799 = scmp.eq.s32.totalorder %s143, 0
      %p800 = por %p798, %p799
      %s802 = sadd.s32 %s801, 1
      %p805 = scmp.eq.s32.totalorder %s137, 1
      %p806 = scmp.ne.s32.totalorder %s801, %s803
      %p807 = scmp.eq.s32.totalorder %s137, 0
      %p808 = por %p806, %p807
      %p809 = scmp.ne.s32.totalorder %s801, %s803
      %p810 = scmp.eq.s32.totalorder %s142, 1
      %p811 = por %p809, %p810
      %p812 = scmp.ne.s32.totalorder %s803, %s804
      %p813 = scmp.eq.s32.totalorder %s142, 0
      %p814 = por %p812, %p813
      %p815 = scmp.ne.s32.totalorder %s803, %s804
      %p816 = scmp.eq.s32.totalorder %s143, 1
      %p817 = por %p815, %p816
      %p819 = scmp.ne.s32.totalorder %s804, %s818
      %p820 = scmp.eq.s32.totalorder %s143, 0
      %p821 = por %p819, %p820
      %s823 = sadd.s32 %s822, 1
      %p826 = scmp.eq.s32.totalorder %s137, 1
      %p827 = scmp.ne.s32.totalorder %s822, %s824
      %p828 = scmp.eq.s32.totalorder %s137, 0
      %p829 = por %p827, %p828
      %p830 = scmp.ne.s32.totalorder %s822, %s824
      %p831 = scmp.eq.s32.totalorder %s142, 1
      %p832 = por %p830, %p831
      %p833 = scmp.ne.s32.totalorder %s824, %s825
      %p834 = scmp.eq.s32.totalorder %s142, 0
      %p835 = por %p833, %p834
      %p836 = scmp.ne.s32.totalorder %s824, %s825
      %p837 = scmp.eq.s32.totalorder %s143, 1
      %p838 = por %p836, %p837
      %p840 = scmp.ne.s32.totalorder %s825, %s839
      %p841 = scmp.eq.s32.totalorder %s143, 0
      %p842 = por %p840, %p841
      %s844 = sadd.s32 %s843, 1
      %p847 = scmp.eq.s32.totalorder %s137, 1
      %p848 = scmp.ne.s32.totalorder %s843, %s845
      %p849 = scmp.eq.s32.totalorder %s137, 0
      %p850 = por %p848, %p849
      %p851 = scmp.ne.s32.totalorder %s843, %s845
      %p852 = scmp.eq.s32.totalorder %s142, 1
      %p853 = por %p851, %p852
      %p854 = scmp.ne.s32.totalorder %s845, %s846
      %p855 = scmp.eq.s32.totalorder %s142, 0
      %p856 = por %p854, %p855
      %p857 = scmp.ne.s32.totalorder %s845, %s846
      %p858 = scmp.eq.s32.totalorder %s143, 1
      %p859 = por %p857, %p858
      %p861 = scmp.ne.s32.totalorder %s846, %s860
      %p862 = scmp.eq.s32.totalorder %s143, 0
      %p863 = por %p861, %p862
      %s865 = sadd.s32 %s864, 1
      %p868 = scmp.eq.s32.totalorder %s137, 1
      %p869 = scmp.ne.s32.totalorder %s864, %s866
      %p870 = scmp.eq.s32.totalorder %s137, 0
      %p871 = por %p869, %p870
      %p872 = scmp.ne.s32.totalorder %s864, %s866
      %p873 = scmp.eq.s32.totalorder %s142, 1
      %p874 = por %p872, %p873
      %p875 = scmp.ne.s32.totalorder %s866, %s867
      %p876 = scmp.eq.s32.totalorder %s142, 0
      %p877 = por %p875, %p876
      %p878 = scmp.ne.s32.totalorder %s866, %s867
      %p879 = scmp.eq.s32.totalorder %s143, 1
      %p880 = por %p878, %p879
      %p882 = scmp.ne.s32.totalorder %s867, %s881
      %p883 = scmp.eq.s32.totalorder %s143, 0
      %p884 = por %p882, %p883
      %s886 = sadd.s32 %s885, 1
      %p889 = scmp.eq.s32.totalorder %s137, 1
      %p890 = scmp.ne.s32.totalorder %s885, %s887
      %p891 = scmp.eq.s32.totalorder %s137, 0
      %p892 = por %p890, %p891
      %p893 = scmp.ne.s32.totalorder %s885, %s887
      %p894 = scmp.eq.s32.totalorder %s142, 1
      %p895 = por %p893, %p894
      %p896 = scmp.ne.s32.totalorder %s887, %s888
      %p897 = scmp.eq.s32.totalorder %s142, 0
      %p898 = por %p896, %p897
      %p899 = scmp.ne.s32.totalorder %s887, %s888
      %p900 = scmp.eq.s32.totalorder %s143, 1
      %p901 = por %p899, %p900
      %p903 = scmp.ne.s32.totalorder %s888, %s902
      %p904 = scmp.eq.s32.totalorder %s143, 0
      %p905 = por %p903, %p904
      %s907 = sadd.s32 %s906, 1
      %p910 = scmp.eq.s32.totalorder %s137, 1
      %p911 = scmp.ne.s32.totalorder %s906, %s908
      %p912 = scmp.eq.s32.totalorder %s137, 0
      %p913 = por %p911, %p912
      %p914 = scmp.ne.s32.totalorder %s906, %s908
      %p915 = scmp.eq.s32.totalorder %s142, 1
      %p916 = por %p914, %p915
      %p917 = scmp.ne.s32.totalorder %s908, %s909
      %p918 = scmp.eq.s32.totalorder %s142, 0
      %p919 = por %p917, %p918
      %p920 = scmp.ne.s32.totalorder %s908, %s909
      %p921 = scmp.eq.s32.totalorder %s143, 1
      %p922 = por %p920, %p921
      %p924 = scmp.ne.s32.totalorder %s909, %s923
      %p925 = scmp.eq.s32.totalorder %s143, 0
      %p926 = por %p924, %p925
      %s928 = sadd.s32 %s927, 1
      %p931 = scmp.eq.s32.totalorder %s137, 1
      %p932 = scmp.ne.s32.totalorder %s927, %s929
      %p933 = scmp.eq.s32.totalorder %s137, 0
      %p934 = por %p932, %p933
      %p935 = scmp.ne.s32.totalorder %s927, %s929
      %p936 = scmp.eq.s32.totalorder %s142, 1
      %p937 = por %p935, %p936
      %p938 = scmp.ne.s32.totalorder %s929, %s930
      %p939 = scmp.eq.s32.totalorder %s142, 0
      %p940 = por %p938, %p939
      %p941 = scmp.ne.s32.totalorder %s929, %s930
      %p942 = scmp.eq.s32.totalorder %s143, 1
      %p943 = por %p941, %p942
      %p945 = scmp.ne.s32.totalorder %s930, %s944
      %p946 = scmp.eq.s32.totalorder %s143, 0
      %p947 = por %p945, %p946
      %s949 = sadd.s32 %s948, 1
      %p952 = scmp.eq.s32.totalorder %s137, 1
      %p953 = scmp.ne.s32.totalorder %s948, %s950
      %p954 = scmp.eq.s32.totalorder %s137, 0
      %p955 = por %p953, %p954
      %p956 = scmp.ne.s32.totalorder %s948, %s950
      %p957 = scmp.eq.s32.totalorder %s142, 1
      %p958 = por %p956, %p957
      %p959 = scmp.ne.s32.totalorder %s950, %s951
      %p960 = scmp.eq.s32.totalorder %s142, 0
      %p961 = por %p959, %p960
      %p962 = scmp.ne.s32.totalorder %s950, %s951
      %p963 = scmp.eq.s32.totalorder %s143, 1
      %p964 = por %p962, %p963
      %p966 = scmp.ne.s32.totalorder %s951, %s965
      %p967 = scmp.eq.s32.totalorder %s143, 0
      %p968 = por %p966, %p967
      %s970 = sadd.s32 %s969, 1
      %p973 = scmp.eq.s32.totalorder %s137, 1
      %p974 = scmp.ne.s32.totalorder %s969, %s971
      %p975 = scmp.eq.s32.totalorder %s137, 0
      %p976 = por %p974, %p975
      %p977 = scmp.ne.s32.totalorder %s969, %s971
      %p978 = scmp.eq.s32.totalorder %s142, 1
      %p979 = por %p977, %p978
      %p980 = scmp.ne.s32.totalorder %s971, %s972
      %p981 = scmp.eq.s32.totalorder %s142, 0
      %p982 = por %p980, %p981
      %p983 = scmp.ne.s32.totalorder %s971, %s972
      %p984 = scmp.eq.s32.totalorder %s143, 1
      %p985 = por %p983, %p984
      %p987 = scmp.ne.s32.totalorder %s972, %s986
      %p988 = scmp.eq.s32.totalorder %s143, 0
      %p989 = por %p987, %p988
      %s991 = sadd.s32 %s990, 1
      %p994 = scmp.eq.s32.totalorder %s137, 1
      %p995 = scmp.ne.s32.totalorder %s990, %s992
      %p996 = scmp.eq.s32.totalorder %s137, 0
      %p997 = por %p995, %p996
      %p998 = scmp.ne.s32.totalorder %s990, %s992
      %p999 = scmp.eq.s32.totalorder %s142, 1
      %p1000 = por %p998, %p999
      %p1001 = scmp.ne.s32.totalorder %s992, %s993
      %p1002 = scmp.eq.s32.totalorder %s142, 0
      %p1003 = por %p1001, %p1002
      %p1004 = scmp.ne.s32.totalorder %s992, %s993
      %p1005 = scmp.eq.s32.totalorder %s143, 1
      %p1006 = por %p1004, %p1005
      %p1008 = scmp.ne.s32.totalorder %s993, %s1007
      %p1009 = scmp.eq.s32.totalorder %s143, 0
      %p1010 = por %p1008, %p1009
      %s1012 = sadd.s32 %s1011, 1
      %p1015 = scmp.eq.s32.totalorder %s137, 1
      %p1016 = scmp.ne.s32.totalorder %s1011, %s1013
      %p1017 = scmp.eq.s32.totalorder %s137, 0
      %p1018 = por %p1016, %p1017
      %p1019 = scmp.ne.s32.totalorder %s1011, %s1013
      %p1020 = scmp.eq.s32.totalorder %s142, 1
      %p1021 = por %p1019, %p1020
      %p1022 = scmp.ne.s32.totalorder %s1013, %s1014
      %p1023 = scmp.eq.s32.totalorder %s142, 0
      %p1024 = por %p1022, %p1023
      %p1025 = scmp.ne.s32.totalorder %s1013, %s1014
      %p1026 = scmp.eq.s32.totalorder %s143, 1
      %p1027 = por %p1025, %p1026
      %p1029 = scmp.ne.s32.totalorder %s1014, %s1028
      %p1030 = scmp.eq.s32.totalorder %s143, 0
      %p1031 = por %p1029, %p1030
      %s1033 = sadd.s32 %s1032, 1
      %p1036 = scmp.eq.s32.totalorder %s137, 1
      %p1037 = scmp.ne.s32.totalorder %s1032, %s1034
      %p1038 = scmp.eq.s32.totalorder %s137, 0
      %p1039 = por %p1037, %p1038
      %p1040 = scmp.ne.s32.totalorder %s1032, %s1034
      %p1041 = scmp.eq.s32.totalorder %s142, 1
      %p1042 = por %p1040, %p1041
      %p1043 = scmp.ne.s32.totalorder %s1034, %s1035
      %p1044 = scmp.eq.s32.totalorder %s142, 0
      %p1045 = por %p1043, %p1044
      %p1046 = scmp.ne.s32.totalorder %s1034, %s1035
      %p1047 = scmp.eq.s32.totalorder %s143, 1
      %p1048 = por %p1046, %p1047
      %p1050 = scmp.ne.s32.totalorder %s1035, %s1049
      %p1051 = scmp.eq.s32.totalorder %s143, 0
      %p1052 = por %p1050, %p1051
      %s1054 = sadd.s32 %s1053, 1
      %p1057 = scmp.eq.s32.totalorder %s137, 1
      %p1058 = scmp.ne.s32.totalorder %s1053, %s1055
      %p1059 = scmp.eq.s32.totalorder %s137, 0
      %p1060 = por %p1058, %p1059
      %p1061 = scmp.ne.s32.totalorder %s1053, %s1055
      %p1062 = scmp.eq.s32.totalorder %s142, 1
      %p1063 = por %p1061, %p1062
      %p1064 = scmp.ne.s32.totalorder %s1055, %s1056
      %p1065 = scmp.eq.s32.totalorder %s142, 0
      %p1066 = por %p1064, %p1065
      %p1067 = scmp.ne.s32.totalorder %s1055, %s1056
      %p1068 = scmp.eq.s32.totalorder %s143, 1
      %p1069 = por %p1067, %p1068
      %p1071 = scmp.ne.s32.totalorder %s1056, %s1070
      %p1072 = scmp.eq.s32.totalorder %s143, 0
      %p1073 = por %p1071, %p1072
      %s1075 = sadd.s32 %s1074, 1
      %p1078 = scmp.eq.s32.totalorder %s137, 1
      %p1079 = scmp.ne.s32.totalorder %s1074, %s1076
      %p1080 = scmp.eq.s32.totalorder %s137, 0
      %p1081 = por %p1079, %p1080
      %p1082 = scmp.ne.s32.totalorder %s1074, %s1076
      %p1083 = scmp.eq.s32.totalorder %s142, 1
      %p1084 = por %p1082, %p1083
      %p1085 = scmp.ne.s32.totalorder %s1076, %s1077
      %p1086 = scmp.eq.s32.totalorder %s142, 0
      %p1087 = por %p1085, %p1086
      %p1088 = scmp.ne.s32.totalorder %s1076, %s1077
      %p1089 = scmp.eq.s32.totalorder %s143, 1
      %p1090 = por %p1088, %p1089
      %p1092 = scmp.ne.s32.totalorder %s1077, %s1091
      %p1093 = scmp.eq.s32.totalorder %s143, 0
      %p1094 = por %p1092, %p1093
      %s1096 = sadd.s32 %s1095, 1
      %p1099 = scmp.eq.s32.totalorder %s137, 1
      %p1100 = scmp.ne.s32.totalorder %s1095, %s1097
      %p1101 = scmp.eq.s32.totalorder %s137, 0
      %p1102 = por %p1100, %p1101
      %p1103 = scmp.ne.s32.totalorder %s1095, %s1097
      %p1104 = scmp.eq.s32.totalorder %s142, 1
      %p1105 = por %p1103, %p1104
      %p1106 = scmp.ne.s32.totalorder %s1097, %s1098
      %p1107 = scmp.eq.s32.totalorder %s142, 0
      %p1108 = por %p1106, %p1107
      %p1109 = scmp.ne.s32.totalorder %s1097, %s1098
      %p1110 = scmp.eq.s32.totalorder %s143, 1
      %p1111 = por %p1109, %p1110
      %p1113 = scmp.ne.s32.totalorder %s1098, %s1112
      %p1114 = scmp.eq.s32.totalorder %s143, 0
      %p1115 = por %p1113, %p1114
      %s1117 = sadd.s32 %s1116, 1
      %p1120 = scmp.eq.s32.totalorder %s137, 1
      %p1121 = scmp.ne.s32.totalorder %s1116, %s1118
      %p1122 = scmp.eq.s32.totalorder %s137, 0
      %p1123 = por %p1121, %p1122
      %p1124 = scmp.ne.s32.totalorder %s1116, %s1118
      %p1125 = scmp.eq.s32.totalorder %s142, 1
      %p1126 = por %p1124, %p1125
      %p1127 = scmp.ne.s32.totalorder %s1118, %s1119
      %p1128 = scmp.eq.s32.totalorder %s142, 0
      %p1129 = por %p1127, %p1128
      %p1130 = scmp.ne.s32.totalorder %s1118, %s1119
      %p1131 = scmp.eq.s32.totalorder %s143, 1
      %p1132 = por %p1130, %p1131
      %p1134 = scmp.ne.s32.totalorder %s1119, %s1133
      %p1135 = scmp.eq.s32.totalorder %s143, 0
      %p1136 = por %p1134, %p1135
      %s1138 = sadd.s32 %s1137, 1
      %p1141 = scmp.eq.s32.totalorder %s137, 1
      %p1142 = scmp.ne.s32.totalorder %s1137, %s1139
      %p1143 = scmp.eq.s32.totalorder %s137, 0
      %p1144 = por %p1142, %p1143
      %p1145 = scmp.ne.s32.totalorder %s1137, %s1139
      %p1146 = scmp.eq.s32.totalorder %s142, 1
      %p1147 = por %p1145, %p1146
      %p1148 = scmp.ne.s32.totalorder %s1139, %s1140
      %p1149 = scmp.eq.s32.totalorder %s142, 0
      %p1150 = por %p1148, %p1149
      %p1151 = scmp.ne.s32.totalorder %s1139, %s1140
      %p1152 = scmp.eq.s32.totalorder %s143, 1
      %p1153 = por %p1151, %p1152
      %p1155 = scmp.ne.s32.totalorder %s1140, %s1154
      %p1156 = scmp.eq.s32.totalorder %s143, 0
      %p1157 = por %p1155, %p1156
      %s1159 = sadd.s32 %s1158, 1
      %p1162 = scmp.eq.s32.totalorder %s137, 1
      %p1163 = scmp.ne.s32.totalorder %s1158, %s1160
      %p1164 = scmp.eq.s32.totalorder %s137, 0
      %p1165 = por %p1163, %p1164
      %p1166 = scmp.ne.s32.totalorder %s1158, %s1160
      %p1167 = scmp.eq.s32.totalorder %s142, 1
      %p1168 = por %p1166, %p1167
      %p1169 = scmp.ne.s32.totalorder %s1160, %s1161
      %p1170 = scmp.eq.s32.totalorder %s142, 0
      %p1171 = por %p1169, %p1170
      %p1172 = scmp.ne.s32.totalorder %s1160, %s1161
      %p1173 = scmp.eq.s32.totalorder %s143, 1
      %p1174 = por %p1172, %p1173
      %p1176 = scmp.ne.s32.totalorder %s1161, %s1175
      %p1177 = scmp.eq.s32.totalorder %s143, 0
      %p1178 = por %p1176, %p1177
      %s1180 = sadd.s32 %s1179, 1
      %p1183 = scmp.eq.s32.totalorder %s137, 1
      %p1184 = scmp.ne.s32.totalorder %s1179, %s1181
      %p1185 = scmp.eq.s32.totalorder %s137, 0
      %p1186 = por %p1184, %p1185
      %p1187 = scmp.ne.s32.totalorder %s1179, %s1181
      %p1188 = scmp.eq.s32.totalorder %s142, 1
      %p1189 = por %p1187, %p1188
      %p1190 = scmp.ne.s32.totalorder %s1181, %s1182
      %p1191 = scmp.eq.s32.totalorder %s142, 0
      %p1192 = por %p1190, %p1191
      %p1193 = scmp.ne.s32.totalorder %s1181, %s1182
      %p1194 = scmp.eq.s32.totalorder %s143, 1
      %p1195 = por %p1193, %p1194
      %p1197 = scmp.ne.s32.totalorder %s1182, %s1196
      %p1198 = scmp.eq.s32.totalorder %s143, 0
      %p1199 = por %p1197, %p1198
      %s1201 = sadd.s32 %s1200, 1
      %p1204 = scmp.eq.s32.totalorder %s137, 1
      %p1205 = scmp.ne.s32.totalorder %s1200, %s1202
      %p1206 = scmp.eq.s32.totalorder %s137, 0
      %p1207 = por %p1205, %p1206
      %p1208 = scmp.ne.s32.totalorder %s1200, %s1202
      %p1209 = scmp.eq.s32.totalorder %s142, 1
      %p1210 = por %p1208, %p1209
      %p1211 = scmp.ne.s32.totalorder %s1202, %s1203
      %p1212 = scmp.eq.s32.totalorder %s142, 0
      %p1213 = por %p1211, %p1212
      %p1214 = scmp.ne.s32.totalorder %s1202, %s1203
      %p1215 = scmp.eq.s32.totalorder %s143, 1
      %p1216 = por %p1214, %p1215
      %p1218 = scmp.ne.s32.totalorder %s1203, %s1217
      %p1219 = scmp.eq.s32.totalorder %s143, 0
      %p1220 = por %p1218, %p1219
      %s1222 = sadd.s32 %s1221, 1
      %p1225 = scmp.eq.s32.totalorder %s137, 1
      %p1226 = scmp.ne.s32.totalorder %s1221, %s1223
      %p1227 = scmp.eq.s32.totalorder %s137, 0
      %p1228 = por %p1226, %p1227
      %p1229 = scmp.ne.s32.totalorder %s1221, %s1223
      %p1230 = scmp.eq.s32.totalorder %s142, 1
      %p1231 = por %p1229, %p1230
      %p1232 = scmp.ne.s32.totalorder %s1223, %s1224
      %p1233 = scmp.eq.s32.totalorder %s142, 0
      %p1234 = por %p1232, %p1233
      %p1235 = scmp.ne.s32.totalorder %s1223, %s1224
      %p1236 = scmp.eq.s32.totalorder %s143, 1
      %p1237 = por %p1235, %p1236
      %p1239 = scmp.ne.s32.totalorder %s1224, %s1238
      %p1240 = scmp.eq.s32.totalorder %s143, 0
      %p1241 = por %p1239, %p1240
      %s1243 = sadd.s32 %s1242, 1
      %p1246 = scmp.eq.s32.totalorder %s137, 1
      %p1247 = scmp.ne.s32.totalorder %s1242, %s1244
      %p1248 = scmp.eq.s32.totalorder %s137, 0
      %p1249 = por %p1247, %p1248
      %p1250 = scmp.ne.s32.totalorder %s1242, %s1244
      %p1251 = scmp.eq.s32.totalorder %s142, 1
      %p1252 = por %p1250, %p1251
      %p1253 = scmp.ne.s32.totalorder %s1244, %s1245
      %p1254 = scmp.eq.s32.totalorder %s142, 0
      %p1255 = por %p1253, %p1254
      %p1256 = scmp.ne.s32.totalorder %s1244, %s1245
      %p1257 = scmp.eq.s32.totalorder %s143, 1
      %p1258 = por %p1256, %p1257
      %p1260 = scmp.ne.s32.totalorder %s1245, %s1259
      %p1261 = scmp.eq.s32.totalorder %s143, 0
      %p1262 = por %p1260, %p1261
      %s1264 = sadd.s32 %s1263, 1
      %p1267 = scmp.eq.s32.totalorder %s137, 1
      %p1268 = scmp.ne.s32.totalorder %s1263, %s1265
      %p1269 = scmp.eq.s32.totalorder %s137, 0
      %p1270 = por %p1268, %p1269
      %p1271 = scmp.ne.s32.totalorder %s1263, %s1265
      %p1272 = scmp.eq.s32.totalorder %s142, 1
      %p1273 = por %p1271, %p1272
      %p1274 = scmp.ne.s32.totalorder %s1265, %s1266
      %p1275 = scmp.eq.s32.totalorder %s142, 0
      %p1276 = por %p1274, %p1275
      %p1277 = scmp.ne.s32.totalorder %s1265, %s1266
      %p1278 = scmp.eq.s32.totalorder %s143, 1
      %p1279 = por %p1277, %p1278
      %p1281 = scmp.ne.s32.totalorder %s1266, %s1280
      %p1282 = scmp.eq.s32.totalorder %s143, 0
      %p1283 = por %p1281, %p1282
      %s1285 = sadd.s32 %s1284, 1
      %p1288 = scmp.eq.s32.totalorder %s137, 1
      %p1289 = scmp.ne.s32.totalorder %s1284, %s1286
      %p1290 = scmp.eq.s32.totalorder %s137, 0
      %p1291 = por %p1289, %p1290
      %p1292 = scmp.ne.s32.totalorder %s1284, %s1286
      %p1293 = scmp.eq.s32.totalorder %s142, 1
      %p1294 = por %p1292, %p1293
      %p1295 = scmp.ne.s32.totalorder %s1286, %s1287
      %p1296 = scmp.eq.s32.totalorder %s142, 0
      %p1297 = por %p1295, %p1296
      %p1298 = scmp.ne.s32.totalorder %s1286, %s1287
      %p1299 = scmp.eq.s32.totalorder %s143, 1
      %p1300 = por %p1298, %p1299
      %p1302 = scmp.ne.s32.totalorder %s1287, %s1301
      %p1303 = scmp.eq.s32.totalorder %s143, 0
      %p1304 = por %p1302, %p1303
      %s1306 = sadd.s32 %s1305, 1
      %p1309 = scmp.eq.s32.totalorder %s137, 1
      %p1310 = scmp.ne.s32.totalorder %s1305, %s1307
      %p1311 = scmp.eq.s32.totalorder %s137, 0
      %p1312 = por %p1310, %p1311
      %p1313 = scmp.ne.s32.totalorder %s1305, %s1307
      %p1314 = scmp.eq.s32.totalorder %s142, 1
      %p1315 = por %p1313, %p1314
      %p1316 = scmp.ne.s32.totalorder %s1307, %s1308
      %p1317 = scmp.eq.s32.totalorder %s142, 0
      %p1318 = por %p1316, %p1317
      %p1319 = scmp.ne.s32.totalorder %s1307, %s1308
      %p1320 = scmp.eq.s32.totalorder %s143, 1
      %p1321 = por %p1319, %p1320
      %p1323 = scmp.ne.s32.totalorder %s1308, %s1322
      %p1324 = scmp.eq.s32.totalorder %s143, 0
      %p1325 = por %p1323, %p1324
      %s1327 = sadd.s32 %s1326, 1
      %p1330 = scmp.eq.s32.totalorder %s137, 1
      %p1331 = scmp.ne.s32.totalorder %s1326, %s1328
      %p1332 = scmp.eq.s32.totalorder %s137, 0
      %p1333 = por %p1331, %p1332
      %p1334 = scmp.ne.s32.totalorder %s1326, %s1328
      %p1335 = scmp.eq.s32.totalorder %s142, 1
      %p1336 = por %p1334, %p1335
      %p1337 = scmp.ne.s32.totalorder %s1328, %s1329
      %p1338 = scmp.eq.s32.totalorder %s142, 0
      %p1339 = por %p1337, %p1338
      %p1340 = scmp.ne.s32.totalorder %s1328, %s1329
      %p1341 = scmp.eq.s32.totalorder %s143, 1
      %p1342 = por %p1340, %p1341
      %p1344 = scmp.ne.s32.totalorder %s1329, %s1343
      %p1345 = scmp.eq.s32.totalorder %s143, 0
      %p1346 = por %p1344, %p1345
      %s1347 = ssub.s32 %s137, %s144
      %p1348 = scmp.eq.s32.totalorder %s1347, 0
      %s1350 = sadd.s32 %s1349, 1
      %s1351 = scalar_select %p1348, %s1349, %s1350
      %p1354 = pneg %p1348
      %p1355 = scmp.eq.s32.totalorder %s137, 1
      %p1356 = por %p1354, %p1355
      %p1357 = scmp.ne.s32.totalorder %s1349, %s1352
      %p1358 = scmp.eq.s32.totalorder %s137, 0
      %p1359 = por %p1357, %p1358
      %p1360 = scmp.ne.s32.totalorder %s1349, %s1352
      %p1361 = scmp.eq.s32.totalorder %s142, 1
      %p1362 = por %p1360, %p1361
      %p1363 = scmp.ne.s32.totalorder %s1352, %s1353
      %p1364 = scmp.eq.s32.totalorder %s142, 0
      %p1365 = por %p1363, %p1364
      %p1366 = scmp.ne.s32.totalorder %s1352, %s1353
      %p1367 = scmp.eq.s32.totalorder %s143, 1
      %p1368 = por %p1366, %p1367
      %p1370 = scmp.ne.s32.totalorder %s1353, %s1369
      %p1371 = scmp.eq.s32.totalorder %s143, 0
      %p1372 = por %p1370, %p1371
      %p1373 = scmp.le.s32.totalorder 1, %s137
      %p1374 = scmp.lt.s32.totalorder %s137, 3
      %p1375 = pnand %p1373, %p1374
      %p1376 = pneg %p1375
      // Predicated region
      $region9: #{forward.1} parent=5 // pred_check
        _
      $region10: #{forward.1} parent=5 // pred_check_branch
        %1378 = sbr.rel (%p1375) target = $region12
      $region11: #{forward.1} parent=5 // pred_region
        %s1379 = ssub.s32 %s137, 1
        // Predicated region
        $region13: #{forward.1} parent=11 // pred_check
          %p1380 = pneg %p184
        $region14: #{forward.1} parent=11 // pred_check_branch
          %1382 = sbr.rel (%p1380) target = $region16
        $region15: #{forward.1} parent=11 // pred_region
          %s1384 = ssub.s32 128, 128
          %1385 = vsyncadd [#allocation3], %s1384
          %s1387 = sshll.u32 [#allocation2], 4
          %s1388 = int_to_ptr.vmem [resolvable:$true] %s1387
          %1390 = dma.hbm_to_vmem [thread:$0]  %s3, 128, %s1388, [#allocation3]
        $region16: #{forward.1} parent=11 // pred_fallthru
          _
        // Predicated region
        $region17: #{forward.1} parent=11 // pred_check
          %p1391 = pneg %p205
        $region18: #{forward.1} parent=11 // pred_check_branch
          %1393 = sbr.rel (%p1391) target = $region20
        $region19: #{forward.1} parent=11 // pred_region
          %s1395 = ssub.s32 16, 16
          %1396 = vsyncadd [#allocation6], %s1395
          %s1398 = sshll.u32 [#allocation5], 4
          %s1399 = int_to_ptr.vmem [resolvable:$true] %s1398
          %1401 = dma.hbm_to_vmem [thread:$0]  %s5, 16, %s1399, [#allocation6]
        $region20: #{forward.1} parent=11 // pred_fallthru
          _
        // Predicated region
        $region21: #{forward.1} parent=11 // pred_check
          %p1402 = pneg %p226
        $region22: #{forward.1} parent=11 // pred_check_branch
          %1404 = sbr.rel (%p1402) target = $region24
        $region23: #{forward.1} parent=11 // pred_region
          %s1406 = ssub.s32 16, 16
          %1407 = vsyncadd [#allocation6], %s1406
          %s1409 = sshll.u32 [#allocation7], 4
          %s1410 = int_to_ptr.vmem [resolvable:$true] %s1409
          %1412 = dma.hbm_to_vmem [thread:$0]  %s7, 16, %s1410, [#allocation6]
        $region24: #{forward.1} parent=11 // pred_fallthru
          _
        // Predicated region
        $region25: #{forward.1} parent=11 // pred_check
          %p1413 = pneg %p247
        $region26: #{forward.1} parent=11 // pred_check_branch
          %1415 = sbr.rel (%p1413) target = $region28
        $region27: #{forward.1} parent=11 // pred_region
          %s1417 = ssub.s32 16, 16
          %1418 = vsyncadd [#allocation9], %s1417
          %s1420 = sshll.u32 [#allocation8], 4
          %s1421 = int_to_ptr.vmem [resolvable:$true] %s1420
          %1423 = dma.hbm_to_vmem [thread:$0]  %s9, 16, %s1421, [#allocation9]
        $region28: #{forward.1} parent=11 // pred_fallthru
          _
        // Predicated region
        $region29: #{forward.1} parent=11 // pred_check
          %p1424 = pneg %p268
        $region30: #{forward.1} parent=11 // pred_check_branch
          %1426 = sbr.rel (%p1424) target = $region32
        $region31: #{forward.1} parent=11 // pred_region
          %s1428 = ssub.s32 16, 16
          %1429 = vsyncadd [#allocation9], %s1428
          %s1431 = sshll.u32 [#allocation10], 4
          %s1432 = int_to_ptr.vmem [resolvable:$true] %s1431
          %1434 = dma.hbm_to_vmem [thread:$0]  %s11, 16, %s1432, [#allocation9]
        $region32: #{forward.1} parent=11 // pred_fallthru
          _
        // Predicated region
        $region33: #{forward.1} parent=11 // pred_check
          %p1435 = pneg %p289
        $region34: #{forward.1} parent=11 // pred_check_branch
          %1437 = sbr.rel (%p1435) target = $region36
        $region35: #{forward.1} parent=11 // pred_region
          _
        $region36: #{forward.1} parent=11 // pred_fallthru
          _
        // Predicated region
        $region37: #{forward.1} parent=11 // pred_check
          %p1438 = pneg %p310
        $region38: #{forward.1} parent=11 // pred_check_branch
          %1440 = sbr.rel (%p1438) target = $region40
        $region39: #{forward.1} parent=11 // pred_region
          %s1442 = ssub.s32 16, 16
          %1443 = vsyncadd [#allocation12], %s1442
          %s1445 = sshll.u32 [#allocation11], 4
          %s1446 = int_to_ptr.vmem [resolvable:$true] %s1445
          %1448 = dma.hbm_to_vmem [thread:$0]  %s15, 16, %s1446, [#allocation12]
        $region40: #{forward.1} parent=11 // pred_fallthru
          _
        // Predicated region
        $region41: #{forward.1} parent=11 // pred_check
          %p1449 = pneg %p331
        $region42: #{forward.1} parent=11 // pred_check_branch
          %1451 = sbr.rel (%p1449) target = $region44
        $region43: #{forward.1} parent=11 // pred_region
          _
        $region44: #{forward.1} parent=11 // pred_fallthru
          _
        // Predicated region
        $region45: #{forward.1} parent=11 // pred_check
          %p1452 = pneg %p352
        $region46: #{forward.1} parent=11 // pred_check_branch
          %1454 = sbr.rel (%p1452) target = $region48
        $region47: #{forward.1} parent=11 // pred_region
          %s1456 = ssub.s32 16, 16
          %1457 = vsyncadd [#allocation12], %s1456
          %s1459 = sshll.u32 [#allocation13], 4
          %s1460 = int_to_ptr.vmem [resolvable:$true] %s1459
          %1462 = dma.hbm_to_vmem [thread:$0]  %s19, 16, %s1460, [#allocation12]
        $region48: #{forward.1} parent=11 // pred_fallthru
          _
        // Predicated region
        $region49: #{forward.1} parent=11 // pred_check
          %p1463 = pneg %p373
        $region50: #{forward.1} parent=11 // pred_check_branch
          %1465 = sbr.rel (%p1463) target = $region52
        $region51: #{forward.1} parent=11 // pred_region
          _
        $region52: #{forward.1} parent=11 // pred_fallthru
          _
        // Predicated region
        $region53: #{forward.1} parent=11 // pred_check
          %p1466 = pneg %p394
        $region54: #{forward.1} parent=11 // pred_check_branch
          %1468 = sbr.rel (%p1466) target = $region56
        $region55: #{forward.1} parent=11 // pred_region
          %s1470 = ssub.s32 16, 16
          %1471 = vsyncadd [#allocation15], %s1470
          %s1473 = sshll.u32 [#allocation14], 4
          %s1474 = int_to_ptr.vmem [resolvable:$true] %s1473
          %1476 = dma.hbm_to_vmem [thread:$0]  %s23, 16, %s1474, [#allocation15]
        $region56: #{forward.1} parent=11 // pred_fallthru
          _
        // Predicated region
        $region57: #{forward.1} parent=11 // pred_check
          %p1477 = pneg %p415
        $region58: #{forward.1} parent=11 // pred_check_branch
          %1479 = sbr.rel (%p1477) target = $region60
        $region59: #{forward.1} parent=11 // pred_region
          %s1481 = ssub.s32 16, 16
          %1482 = vsyncadd [#allocation15], %s1481
          %s1484 = sshll.u32 [#allocation16], 4
          %s1485 = int_to_ptr.vmem [resolvable:$true] %s1484
          %1487 = dma.hbm_to_vmem [thread:$0]  %s25, 16, %s1485, [#allocation15]
        $region60: #{forward.1} parent=11 // pred_fallthru
          _
        // Predicated region
        $region61: #{forward.1} parent=11 // pred_check
          %p1488 = pneg %p436
        $region62: #{forward.1} parent=11 // pred_check_branch
          %1490 = sbr.rel (%p1488) target = $region64
        $region63: #{forward.1} parent=11 // pred_region
          %s1492 = ssub.s32 16, 16
          %1493 = vsyncadd [#allocation18], %s1492
          %s1495 = sshll.u32 [#allocation17], 4
          %s1496 = int_to_ptr.vmem [resolvable:$true] %s1495
          %1498 = dma.hbm_to_vmem [thread:$0]  %s27, 16, %s1496, [#allocation18]
        $region64: #{forward.1} parent=11 // pred_fallthru
          _
        // Predicated region
        $region65: #{forward.1} parent=11 // pred_check
          %p1499 = pneg %p457
        $region66: #{forward.1} parent=11 // pred_check_branch
          %1501 = sbr.rel (%p1499) target = $region68
        $region67: #{forward.1} parent=11 // pred_region
          _
        $region68: #{forward.1} parent=11 // pred_fallthru
          _
        // Predicated region
        $region69: #{forward.1} parent=11 // pred_check
          %p1502 = pneg %p478
        $region70: #{forward.1} parent=11 // pred_check_branch
          %1504 = sbr.rel (%p1502) target = $region72
        $region71: #{forward.1} parent=11 // pred_region
          %s1506 = ssub.s32 16, 16
          %1507 = vsyncadd [#allocation18], %s1506
          %s1509 = sshll.u32 [#allocation19], 4
          %s1510 = int_to_ptr.vmem [resolvable:$true] %s1509
          %1512 = dma.hbm_to_vmem [thread:$0]  %s31, 16, %s1510, [#allocation18]
        $region72: #{forward.1} parent=11 // pred_fallthru
          _
        // Predicated region
        $region73: #{forward.1} parent=11 // pred_check
          %p1513 = pneg %p499
        $region74: #{forward.1} parent=11 // pred_check_branch
          %1515 = sbr.rel (%p1513) target = $region76
        $region75: #{forward.1} parent=11 // pred_region
          _
        $region76: #{forward.1} parent=11 // pred_fallthru
          _
        // Predicated region
        $region77: #{forward.1} parent=11 // pred_check
          %p1516 = pneg %p520
        $region78: #{forward.1} parent=11 // pred_check_branch
          %1518 = sbr.rel (%p1516) target = $region80
        $region79: #{forward.1} parent=11 // pred_region
          %s1520 = ssub.s32 16, 16
          %1521 = vsyncadd [#allocation21], %s1520
          %s1523 = sshll.u32 [#allocation20], 4
          %s1524 = int_to_ptr.vmem [resolvable:$true] %s1523
          %1526 = dma.hbm_to_vmem [thread:$0]  %s35, 16, %s1524, [#allocation21]
        $region80: #{forward.1} parent=11 // pred_fallthru
          _
        // Predicated region
        $region81: #{forward.1} parent=11 // pred_check
          %p1527 = pneg %p541
        $region82: #{forward.1} parent=11 // pred_check_branch
          %1529 = sbr.rel (%p1527) target = $region84
        $region83: #{forward.1} parent=11 // pred_region
          %s1531 = ssub.s32 16, 16
          %1532 = vsyncadd [#allocation21], %s1531
          %s1534 = sshll.u32 [#allocation22], 4
          %s1535 = int_to_ptr.vmem [resolvable:$true] %s1534
          %1537 = dma.hbm_to_vmem [thread:$0]  %s37, 16, %s1535, [#allocation21]
        $region84: #{forward.1} parent=11 // pred_fallthru
          _
        // Predicated region
        $region85: #{forward.1} parent=11 // pred_check
          %p1538 = pneg %p562
        $region86: #{forward.1} parent=11 // pred_check_branch
          %1540 = sbr.rel (%p1538) target = $region88
        $region87: #{forward.1} parent=11 // pred_region
          %s1542 = ssub.s32 16, 16
          %1543 = vsyncadd [#allocation24], %s1542
          %s1545 = sshll.u32 [#allocation23], 4
          %s1546 = int_to_ptr.vmem [resolvable:$true] %s1545
          %1548 = dma.hbm_to_vmem [thread:$0]  %s39, 16, %s1546, [#allocation24]
        $region88: #{forward.1} parent=11 // pred_fallthru
          _
        // Predicated region
        $region89: #{forward.1} parent=11 // pred_check
          %p1549 = pneg %p583
        $region90: #{forward.1} parent=11 // pred_check_branch
          %1551 = sbr.rel (%p1549) target = $region92
        $region91: #{forward.1} parent=11 // pred_region
          _
        $region92: #{forward.1} parent=11 // pred_fallthru
          _
        // Predicated region
        $region93: #{forward.1} parent=11 // pred_check
          %p1552 = pneg %p604
        $region94: #{forward.1} parent=11 // pred_check_branch
          %1554 = sbr.rel (%p1552) target = $region96
        $region95: #{forward.1} parent=11 // pred_region
          %s1556 = ssub.s32 16, 16
          %1557 = vsyncadd [#allocation24], %s1556
          %s1559 = sshll.u32 [#allocation25], 4
          %s1560 = int_to_ptr.vmem [resolvable:$true] %s1559
          %1562 = dma.hbm_to_vmem [thread:$0]  %s43, 16, %s1560, [#allocation24]
        $region96: #{forward.1} parent=11 // pred_fallthru
          _
        // Predicated region
        $region97: #{forward.1} parent=11 // pred_check
          %p1563 = pneg %p625
        $region98: #{forward.1} parent=11 // pred_check_branch
          %1565 = sbr.rel (%p1563) target = $region100
        $region99: #{forward.1} parent=11 // pred_region
          _
        $region100: #{forward.1} parent=11 // pred_fallthru
          _
        // Predicated region
        $region101: #{forward.1} parent=11 // pred_check
          %p1566 = pneg %p646
        $region102: #{forward.1} parent=11 // pred_check_branch
          %1568 = sbr.rel (%p1566) target = $region104
        $region103: #{forward.1} parent=11 // pred_region
          %s1570 = ssub.s32 16, 16
          %1571 = vsyncadd [#allocation27], %s1570
          %s1573 = sshll.u32 [#allocation26], 4
          %s1574 = int_to_ptr.vmem [resolvable:$true] %s1573
          %1576 = dma.hbm_to_vmem [thread:$0]  %s47, 16, %s1574, [#allocation27]
        $region104: #{forward.1} parent=11 // pred_fallthru
          _
        // Predicated region
        $region105: #{forward.1} parent=11 // pred_check
          %p1577 = pneg %p667
        $region106: #{forward.1} parent=11 // pred_check_branch
          %1579 = sbr.rel (%p1577) target = $region108
        $region107: #{forward.1} parent=11 // pred_region
          %s1581 = ssub.s32 16, 16
          %1582 = vsyncadd [#allocation27], %s1581
          %s1584 = sshll.u32 [#allocation28], 4
          %s1585 = int_to_ptr.vmem [resolvable:$true] %s1584
          %1587 = dma.hbm_to_vmem [thread:$0]  %s49, 16, %s1585, [#allocation27]
        $region108: #{forward.1} parent=11 // pred_fallthru
          _
        // Predicated region
        $region109: #{forward.1} parent=11 // pred_check
          %p1588 = pneg %p688
        $region110: #{forward.1} parent=11 // pred_check_branch
          %1590 = sbr.rel (%p1588) target = $region112
        $region111: #{forward.1} parent=11 // pred_region
          %s1592 = ssub.s32 16, 16
          %1593 = vsyncadd [#allocation30], %s1592
          %s1595 = sshll.u32 [#allocation29], 4
          %s1596 = int_to_ptr.vmem [resolvable:$true] %s1595
          %1598 = dma.hbm_to_vmem [thread:$0]  %s51, 16, %s1596, [#allocation30]
        $region112: #{forward.1} parent=11 // pred_fallthru
          _
        // Predicated region
        $region113: #{forward.1} parent=11 // pred_check
          %p1599 = pneg %p709
        $region114: #{forward.1} parent=11 // pred_check_branch
          %1601 = sbr.rel (%p1599) target = $region116
        $region115: #{forward.1} parent=11 // pred_region
          _
        $region116: #{forward.1} parent=11 // pred_fallthru
          _
        // Predicated region
        $region117: #{forward.1} parent=11 // pred_check
          %p1602 = pneg %p730
        $region118: #{forward.1} parent=11 // pred_check_branch
          %1604 = sbr.rel (%p1602) target = $region120
        $region119: #{forward.1} parent=11 // pred_region
          %s1606 = ssub.s32 16, 16
          %1607 = vsyncadd [#allocation30], %s1606
          %s1609 = sshll.u32 [#allocation31], 4
          %s1610 = int_to_ptr.vmem [resolvable:$true] %s1609
          %1612 = dma.hbm_to_vmem [thread:$0]  %s55, 16, %s1610, [#allocation30]
        $region120: #{forward.1} parent=11 // pred_fallthru
          _
        // Predicated region
        $region121: #{forward.1} parent=11 // pred_check
          %p1613 = pneg %p751
        $region122: #{forward.1} parent=11 // pred_check_branch
          %1615 = sbr.rel (%p1613) target = $region124
        $region123: #{forward.1} parent=11 // pred_region
          _
        $region124: #{forward.1} parent=11 // pred_fallthru
          _
        // Predicated region
        $region125: #{forward.1} parent=11 // pred_check
          %p1616 = pneg %p772
        $region126: #{forward.1} parent=11 // pred_check_branch
          %1618 = sbr.rel (%p1616) target = $region128
        $region127: #{forward.1} parent=11 // pred_region
          %s1620 = ssub.s32 16, 16
          %1621 = vsyncadd [#allocation33], %s1620
          %s1623 = sshll.u32 [#allocation32], 4
          %s1624 = int_to_ptr.vmem [resolvable:$true] %s1623
          %1626 = dma.hbm_to_vmem [thread:$0]  %s59, 16, %s1624, [#allocation33]
        $region128: #{forward.1} parent=11 // pred_fallthru
          _
        // Predicated region
        $region129: #{forward.1} parent=11 // pred_check
          %p1627 = pneg %p793
        $region130: #{forward.1} parent=11 // pred_check_branch
          %1629 = sbr.rel (%p1627) target = $region132
        $region131: #{forward.1} parent=11 // pred_region
          %s1631 = ssub.s32 256, 256
          %1632 = vsyncadd [#allocation33], %s1631
          %s1633 = sshll.u32 [#allocation34], 4
          %s1634 = int_to_ptr.vmem [resolvable:$true] %s1633
          %1639 = dma.hbm_to_vmem [thread:$0]  %s61, 256, %s1634, [#allocation33], 128, 128, 8
        $region132: #{forward.1} parent=11 // pred_fallthru
          _
        // Predicated region
        $region133: #{forward.1} parent=11 // pred_check
          %p1640 = pneg %p814
        $region134: #{forward.1} parent=11 // pred_check_branch
          %1642 = sbr.rel (%p1640) target = $region136
        $region135: #{forward.1} parent=11 // pred_region
          %s1644 = ssub.s32 16, 16
          %1645 = vsyncadd [#allocation36], %s1644
          %s1647 = sshll.u32 [#allocation35], 4
          %s1648 = int_to_ptr.vmem [resolvable:$true] %s1647
          %1650 = dma.hbm_to_vmem [thread:$0]  %s63, 16, %s1648, [#allocation36]
        $region136: #{forward.1} parent=11 // pred_fallthru
          _
        // Predicated region
        $region137: #{forward.1} parent=11 // pred_check
          %p1651 = pneg %p835
        $region138: #{forward.1} parent=11 // pred_check_branch
          %1653 = sbr.rel (%p1651) target = $region140
        $region139: #{forward.1} parent=11 // pred_region
          %s1655 = ssub.s32 16, 16
          %1656 = vsyncadd [#allocation36], %s1655
          %s1658 = sshll.u32 [#allocation37], 4
          %s1659 = int_to_ptr.vmem [resolvable:$true] %s1658
          %1661 = dma.hbm_to_vmem [thread:$0]  %s65, 16, %s1659, [#allocation36]
        $region140: #{forward.1} parent=11 // pred_fallthru
          _
        // Predicated region
        $region141: #{forward.1} parent=11 // pred_check
          %p1662 = pneg %p856
        $region142: #{forward.1} parent=11 // pred_check_branch
          %1664 = sbr.rel (%p1662) target = $region144
        $region143: #{forward.1} parent=11 // pred_region
          _
        $region144: #{forward.1} parent=11 // pred_fallthru
          _
        // Predicated region
        $region145: #{forward.1} parent=11 // pred_check
          %p1665 = pneg %p877
        $region146: #{forward.1} parent=11 // pred_check_branch
          %1667 = sbr.rel (%p1665) target = $region148
        $region147: #{forward.1} parent=11 // pred_region
          %s1669 = ssub.s32 16, 16
          %1670 = vsyncadd [#allocation39], %s1669
          %s1672 = sshll.u32 [#allocation38], 4
          %s1673 = int_to_ptr.vmem [resolvable:$true] %s1672
          %1675 = dma.hbm_to_vmem [thread:$0]  %s69, 16, %s1673, [#allocation39]
        $region148: #{forward.1} parent=11 // pred_fallthru
          _
        // Predicated region
        $region149: #{forward.1} parent=11 // pred_check
          %p1676 = pneg %p898
        $region150: #{forward.1} parent=11 // pred_check_branch
          %1678 = sbr.rel (%p1676) target = $region152
        $region151: #{forward.1} parent=11 // pred_region
          _
        $region152: #{forward.1} parent=11 // pred_fallthru
          _
        // Predicated region
        $region153: #{forward.1} parent=11 // pred_check
          %p1679 = pneg %p919
        $region154: #{forward.1} parent=11 // pred_check_branch
          %1681 = sbr.rel (%p1679) target = $region156
        $region155: #{forward.1} parent=11 // pred_region
          _
        $region156: #{forward.1} parent=11 // pred_fallthru
          _
        // Predicated region
        $region157: #{forward.1} parent=11 // pred_check
          %p1682 = pneg %p940
        $region158: #{forward.1} parent=11 // pred_check_branch
          %1684 = sbr.rel (%p1682) target = $region160
        $region159: #{forward.1} parent=11 // pred_region
          _
        $region160: #{forward.1} parent=11 // pred_fallthru
          _
        // Predicated region
        $region161: #{forward.1} parent=11 // pred_check
          %p1685 = pneg %p961
        $region162: #{forward.1} parent=11 // pred_check_branch
          %1687 = sbr.rel (%p1685) target = $region164
        $region163: #{forward.1} parent=11 // pred_region
          _
        $region164: #{forward.1} parent=11 // pred_fallthru
          _
        // Predicated region
        $region165: #{forward.1} parent=11 // pred_check
          %p1688 = pneg %p982
        $region166: #{forward.1} parent=11 // pred_check_branch
          %1690 = sbr.rel (%p1688) target = $region168
        $region167: #{forward.1} parent=11 // pred_region
          _
        $region168: #{forward.1} parent=11 // pred_fallthru
          _
        // Predicated region
        $region169: #{forward.1} parent=11 // pred_check
          %p1691 = pneg %p1003
        $region170: #{forward.1} parent=11 // pred_check_branch
          %1693 = sbr.rel (%p1691) target = $region172
        $region171: #{forward.1} parent=11 // pred_region
          _
        $region172: #{forward.1} parent=11 // pred_fallthru
          _
        // Predicated region
        $region173: #{forward.1} parent=11 // pred_check
          %p1694 = pneg %p1024
        $region174: #{forward.1} parent=11 // pred_check_branch
          %1696 = sbr.rel (%p1694) target = $region176
        $region175: #{forward.1} parent=11 // pred_region
          _
        $region176: #{forward.1} parent=11 // pred_fallthru
          _
        // Predicated region
        $region177: #{forward.1} parent=11 // pred_check
          %p1697 = pneg %p1045
        $region178: #{forward.1} parent=11 // pred_check_branch
          %1699 = sbr.rel (%p1697) target = $region180
        $region179: #{forward.1} parent=11 // pred_region
          _
        $region180: #{forward.1} parent=11 // pred_fallthru
          _
        // Predicated region
        $region181: #{forward.1} parent=11 // pred_check
          %p1700 = pneg %p1066
        $region182: #{forward.1} parent=11 // pred_check_branch
          %1702 = sbr.rel (%p1700) target = $region184
        $region183: #{forward.1} parent=11 // pred_region
          _
        $region184: #{forward.1} parent=11 // pred_fallthru
          _
        // Predicated region
        $region185: #{forward.1} parent=11 // pred_check
          %p1703 = pneg %p1087
        $region186: #{forward.1} parent=11 // pred_check_branch
          %1705 = sbr.rel (%p1703) target = $region188
        $region187: #{forward.1} parent=11 // pred_region
          _
        $region188: #{forward.1} parent=11 // pred_fallthru
          _
        // Predicated region
        $region189: #{forward.1} parent=11 // pred_check
          %p1706 = pneg %p1108
        $region190: #{forward.1} parent=11 // pred_check_branch
          %1708 = sbr.rel (%p1706) target = $region192
        $region191: #{forward.1} parent=11 // pred_region
          _
        $region192: #{forward.1} parent=11 // pred_fallthru
          _
        // Predicated region
        $region193: #{forward.1} parent=11 // pred_check
          %p1709 = pneg %p1129
        $region194: #{forward.1} parent=11 // pred_check_branch
          %1711 = sbr.rel (%p1709) target = $region196
        $region195: #{forward.1} parent=11 // pred_region
          _
        $region196: #{forward.1} parent=11 // pred_fallthru
          _
        // Predicated region
        $region197: #{forward.1} parent=11 // pred_check
          %p1712 = pneg %p1150
        $region198: #{forward.1} parent=11 // pred_check_branch
          %1714 = sbr.rel (%p1712) target = $region200
        $region199: #{forward.1} parent=11 // pred_region
          _
        $region200: #{forward.1} parent=11 // pred_fallthru
          _
        // Predicated region
        $region201: #{forward.1} parent=11 // pred_check
          %p1715 = pneg %p1171
        $region202: #{forward.1} parent=11 // pred_check_branch
          %1717 = sbr.rel (%p1715) target = $region204
        $region203: #{forward.1} parent=11 // pred_region
          _
        $region204: #{forward.1} parent=11 // pred_fallthru
          _
        // Predicated region
        $region205: #{forward.1} parent=11 // pred_check
          %p1718 = pneg %p1192
        $region206: #{forward.1} parent=11 // pred_check_branch
          %1720 = sbr.rel (%p1718) target = $region208
        $region207: #{forward.1} parent=11 // pred_region
          _
        $region208: #{forward.1} parent=11 // pred_fallthru
          _
        // Predicated region
        $region209: #{forward.1} parent=11 // pred_check
          %p1721 = pneg %p1213
        $region210: #{forward.1} parent=11 // pred_check_branch
          %1723 = sbr.rel (%p1721) target = $region212
        $region211: #{forward.1} parent=11 // pred_region
          _
        $region212: #{forward.1} parent=11 // pred_fallthru
          _
        // Predicated region
        $region213: #{forward.1} parent=11 // pred_check
          %p1724 = pneg %p1234
        $region214: #{forward.1} parent=11 // pred_check_branch
          %1726 = sbr.rel (%p1724) target = $region216
        $region215: #{forward.1} parent=11 // pred_region
          _
        $region216: #{forward.1} parent=11 // pred_fallthru
          _
        // Predicated region
        $region217: #{forward.1} parent=11 // pred_check
          %p1727 = pneg %p1255
        $region218: #{forward.1} parent=11 // pred_check_branch
          %1729 = sbr.rel (%p1727) target = $region220
        $region219: #{forward.1} parent=11 // pred_region
          _
        $region220: #{forward.1} parent=11 // pred_fallthru
          _
        // Predicated region
        $region221: #{forward.1} parent=11 // pred_check
          %p1730 = pneg %p1276
        $region222: #{forward.1} parent=11 // pred_check_branch
          %1732 = sbr.rel (%p1730) target = $region224
        $region223: #{forward.1} parent=11 // pred_region
          _
        $region224: #{forward.1} parent=11 // pred_fallthru
          _
        // Predicated region
        $region225: #{forward.1} parent=11 // pred_check
          %p1733 = pneg %p1297
        $region226: #{forward.1} parent=11 // pred_check_branch
          %1735 = sbr.rel (%p1733) target = $region228
        $region227: #{forward.1} parent=11 // pred_region
          _
        $region228: #{forward.1} parent=11 // pred_fallthru
          _
        // Predicated region
        $region229: #{forward.1} parent=11 // pred_check
          %p1736 = pneg %p1318
        $region230: #{forward.1} parent=11 // pred_check_branch
          %1738 = sbr.rel (%p1736) target = $region232
        $region231: #{forward.1} parent=11 // pred_region
          _
        $region232: #{forward.1} parent=11 // pred_fallthru
          _
        // Predicated region
        $region233: #{forward.1} parent=11 // pred_check
          %p1739 = pneg %p1339
        $region234: #{forward.1} parent=11 // pred_check_branch
          %1741 = sbr.rel (%p1739) target = $region236
        $region235: #{forward.1} parent=11 // pred_region
          _
        $region236: #{forward.1} parent=11 // pred_fallthru
          _
      $region12: #{forward.1} parent=5 // pred_fallthru
        _
      %p1742 = scmp.lt.s32.totalorder %s137, 2
      // Predicated region
      $region237: #{forward.1} parent=5 // pred_check
        %p1743 = pneg %p1742
      $region238: #{forward.1} parent=5 // pred_check_branch
        %1745 = sbr.rel (%p1743) target = $region240
      $region239: #{forward.1} parent=5 // pred_region
        // Predicated region
        $region241: #{forward.1} parent=239 // pred_check
          %p1746 = pneg %p157
        $region242: #{forward.1} parent=239 // pred_check_branch
          %1748 = sbr.rel (%p1746) target = $region244
        $region243: #{forward.1} parent=239 // pred_region
          %p1749 = scmp.lt.s32.totalorder %s137, 1
          %s1750 = scalar_select %p1749, %s137, 1
          %s1751 = smul.addr %s1750, 2
          %s1752 = smul.addr %s1751, 8
          %s1753 = scalar_lea.vmem %s1, %s1752
        $region244: #{forward.1} parent=239 // pred_fallthru
          _
      $region240: #{forward.1} parent=5 // pred_fallthru
        _
      %p1754 = scmp.le.s32.totalorder 1, %s137
      %p1755 = scmp.lt.s32.totalorder %s137, 3
      %p1756 = pnand %p1754, %p1755
      %p1757 = pneg %p1756
      // Predicated region
      $region245: #{forward.1} parent=5 // pred_check
        _
      $region246: #{forward.1} parent=5 // pred_check_branch
        %1759 = sbr.rel (%p1756) target = $region248
      $region247: #{forward.1} parent=5 // pred_region
        %s1760 = ssub.s32 %s137, 1
        // Predicated region
        $region249: #{forward.1} parent=247 // pred_check
          %p1761 = pneg %p184
        $region250: #{forward.1} parent=247 // pred_check_branch
          %1763 = sbr.rel (%p1761) target = $region252
        $region251: #{forward.1} parent=247 // pred_region
          %1764 = dma.done [#allocation3], 128
        $region252: #{forward.1} parent=247 // pred_fallthru
          _
        // Predicated region
        $region253: #{forward.1} parent=247 // pred_check
          %p1765 = pneg %p205
        $region254: #{forward.1} parent=247 // pred_check_branch
          %1767 = sbr.rel (%p1765) target = $region256
        $region255: #{forward.1} parent=247 // pred_region
          %1768 = dma.done [#allocation6], 16
        $region256: #{forward.1} parent=247 // pred_fallthru
          _
        // Predicated region
        $region257: #{forward.1} parent=247 // pred_check
          %p1769 = pneg %p226
        $region258: #{forward.1} parent=247 // pred_check_branch
          %1771 = sbr.rel (%p1769) target = $region260
        $region259: #{forward.1} parent=247 // pred_region
          %1772 = dma.done [#allocation6], 16
        $region260: #{forward.1} parent=247 // pred_fallthru
          _
        // Predicated region
        $region261: #{forward.1} parent=247 // pred_check
          %p1773 = pneg %p247
        $region262: #{forward.1} parent=247 // pred_check_branch
          %1775 = sbr.rel (%p1773) target = $region264
        $region263: #{forward.1} parent=247 // pred_region
          %1776 = dma.done [#allocation9], 16
        $region264: #{forward.1} parent=247 // pred_fallthru
          _
        // Predicated region
        $region265: #{forward.1} parent=247 // pred_check
          %p1777 = pneg %p268
        $region266: #{forward.1} parent=247 // pred_check_branch
          %1779 = sbr.rel (%p1777) target = $region268
        $region267: #{forward.1} parent=247 // pred_region
          %1780 = dma.done [#allocation9], 16
        $region268: #{forward.1} parent=247 // pred_fallthru
          _
        // Predicated region
        $region269: #{forward.1} parent=247 // pred_check
          %p1781 = pneg %p310
        $region270: #{forward.1} parent=247 // pred_check_branch
          %1783 = sbr.rel (%p1781) target = $region272
        $region271: #{forward.1} parent=247 // pred_region
          %1784 = dma.done [#allocation12], 16
        $region272: #{forward.1} parent=247 // pred_fallthru
          _
        // Predicated region
        $region273: #{forward.1} parent=247 // pred_check
          %p1785 = pneg %p352
        $region274: #{forward.1} parent=247 // pred_check_branch
          %1787 = sbr.rel (%p1785) target = $region276
        $region275: #{forward.1} parent=247 // pred_region
          %1788 = dma.done [#allocation12], 16
        $region276: #{forward.1} parent=247 // pred_fallthru
          _
        // Predicated region
        $region277: #{forward.1} parent=247 // pred_check
          %p1789 = pneg %p394
        $region278: #{forward.1} parent=247 // pred_check_branch
          %1791 = sbr.rel (%p1789) target = $region280
        $region279: #{forward.1} parent=247 // pred_region
          %1792 = dma.done [#allocation15], 16
        $region280: #{forward.1} parent=247 // pred_fallthru
          _
        // Predicated region
        $region281: #{forward.1} parent=247 // pred_check
          %p1793 = pneg %p415
        $region282: #{forward.1} parent=247 // pred_check_branch
          %1795 = sbr.rel (%p1793) target = $region284
        $region283: #{forward.1} parent=247 // pred_region
          %1796 = dma.done [#allocation15], 16
        $region284: #{forward.1} parent=247 // pred_fallthru
          _
        // Predicated region
        $region285: #{forward.1} parent=247 // pred_check
          %p1797 = pneg %p436
        $region286: #{forward.1} parent=247 // pred_check_branch
          %1799 = sbr.rel (%p1797) target = $region288
        $region287: #{forward.1} parent=247 // pred_region
          %1800 = dma.done [#allocation18], 16
        $region288: #{forward.1} parent=247 // pred_fallthru
          _
        // Predicated region
        $region289: #{forward.1} parent=247 // pred_check
          %p1801 = pneg %p478
        $region290: #{forward.1} parent=247 // pred_check_branch
          %1803 = sbr.rel (%p1801) target = $region292
        $region291: #{forward.1} parent=247 // pred_region
          %1804 = dma.done [#allocation18], 16
        $region292: #{forward.1} parent=247 // pred_fallthru
          _
        // Predicated region
        $region293: #{forward.1} parent=247 // pred_check
          %p1805 = pneg %p520
        $region294: #{forward.1} parent=247 // pred_check_branch
          %1807 = sbr.rel (%p1805) target = $region296
        $region295: #{forward.1} parent=247 // pred_region
          %1808 = dma.done [#allocation21], 16
        $region296: #{forward.1} parent=247 // pred_fallthru
          _
        // Predicated region
        $region297: #{forward.1} parent=247 // pred_check
          %p1809 = pneg %p541
        $region298: #{forward.1} parent=247 // pred_check_branch
          %1811 = sbr.rel (%p1809) target = $region300
        $region299: #{forward.1} parent=247 // pred_region
          %1812 = dma.done [#allocation21], 16
        $region300: #{forward.1} parent=247 // pred_fallthru
          _
        // Predicated region
        $region301: #{forward.1} parent=247 // pred_check
          %p1813 = pneg %p562
        $region302: #{forward.1} parent=247 // pred_check_branch
          %1815 = sbr.rel (%p1813) target = $region304
        $region303: #{forward.1} parent=247 // pred_region
          %1816 = dma.done [#allocation24], 16
        $region304: #{forward.1} parent=247 // pred_fallthru
          _
        // Predicated region
        $region305: #{forward.1} parent=247 // pred_check
          %p1817 = pneg %p604
        $region306: #{forward.1} parent=247 // pred_check_branch
          %1819 = sbr.rel (%p1817) target = $region308
        $region307: #{forward.1} parent=247 // pred_region
          %1820 = dma.done [#allocation24], 16
        $region308: #{forward.1} parent=247 // pred_fallthru
          _
        // Predicated region
        $region309: #{forward.1} parent=247 // pred_check
          %p1821 = pneg %p646
        $region310: #{forward.1} parent=247 // pred_check_branch
          %1823 = sbr.rel (%p1821) target = $region312
        $region311: #{forward.1} parent=247 // pred_region
          %1824 = dma.done [#allocation27], 16
        $region312: #{forward.1} parent=247 // pred_fallthru
          _
        // Predicated region
        $region313: #{forward.1} parent=247 // pred_check
          %p1825 = pneg %p667
        $region314: #{forward.1} parent=247 // pred_check_branch
          %1827 = sbr.rel (%p1825) target = $region316
        $region315: #{forward.1} parent=247 // pred_region
          %1828 = dma.done [#allocation27], 16
        $region316: #{forward.1} parent=247 // pred_fallthru
          _
        // Predicated region
        $region317: #{forward.1} parent=247 // pred_check
          %p1829 = pneg %p688
        $region318: #{forward.1} parent=247 // pred_check_branch
          %1831 = sbr.rel (%p1829) target = $region320
        $region319: #{forward.1} parent=247 // pred_region
          %1832 = dma.done [#allocation30], 16
        $region320: #{forward.1} parent=247 // pred_fallthru
          _
        // Predicated region
        $region321: #{forward.1} parent=247 // pred_check
          %p1833 = pneg %p730
        $region322: #{forward.1} parent=247 // pred_check_branch
          %1835 = sbr.rel (%p1833) target = $region324
        $region323: #{forward.1} parent=247 // pred_region
          %1836 = dma.done [#allocation30], 16
        $region324: #{forward.1} parent=247 // pred_fallthru
          _
        // Predicated region
        $region325: #{forward.1} parent=247 // pred_check
          %p1837 = pneg %p772
        $region326: #{forward.1} parent=247 // pred_check_branch
          %1839 = sbr.rel (%p1837) target = $region328
        $region327: #{forward.1} parent=247 // pred_region
          %1840 = dma.done [#allocation33], 16
        $region328: #{forward.1} parent=247 // pred_fallthru
          _
        // Predicated region
        $region329: #{forward.1} parent=247 // pred_check
          %p1841 = pneg %p793
        $region330: #{forward.1} parent=247 // pred_check_branch
          %1843 = sbr.rel (%p1841) target = $region332
        $region331: #{forward.1} parent=247 // pred_region
          %1844 = dma.done [#allocation33], 256
        $region332: #{forward.1} parent=247 // pred_fallthru
          _
        // Predicated region
        $region333: #{forward.1} parent=247 // pred_check
          %p1845 = pneg %p814
        $region334: #{forward.1} parent=247 // pred_check_branch
          %1847 = sbr.rel (%p1845) target = $region336
        $region335: #{forward.1} parent=247 // pred_region
          %1848 = dma.done [#allocation36], 16
        $region336: #{forward.1} parent=247 // pred_fallthru
          _
        // Predicated region
        $region337: #{forward.1} parent=247 // pred_check
          %p1849 = pneg %p835
        $region338: #{forward.1} parent=247 // pred_check_branch
          %1851 = sbr.rel (%p1849) target = $region340
        $region339: #{forward.1} parent=247 // pred_region
          %1852 = dma.done [#allocation36], 16
        $region340: #{forward.1} parent=247 // pred_fallthru
          _
        // Predicated region
        $region341: #{forward.1} parent=247 // pred_check
          %p1853 = pneg %p877
        $region342: #{forward.1} parent=247 // pred_check_branch
          %1855 = sbr.rel (%p1853) target = $region344
        $region343: #{forward.1} parent=247 // pred_region
          %1856 = dma.done [#allocation39], 16
        $region344: #{forward.1} parent=247 // pred_fallthru
          _
        %p1857 = scmp.lt.s32.totalorder %s142, 1
        %s1858 = scalar_select %p1857, %s142, 1
        %s1859 = smul.addr %s1858, 2
        %s1860 = smul.addr %s1859, 8
        %s1861 = scalar_lea.vmem %s1, %s1860
        %p1862 = pneg %p163
        %p1863 = pneg %p160
        %p1864 = pneg %p184
        %p1865 = pneg %p181
        %p1866 = pneg %p205
        %p1867 = pneg %p202
        %p1868 = pneg %p226
        %p1869 = pneg %p223
        %p1870 = pneg %p247
        %p1871 = pneg %p244
        %p1872 = pneg %p268
        %p1873 = pneg %p265
        %p1874 = pneg %p289
        %p1875 = pneg %p286
        %p1876 = pneg %p310
        %p1877 = pneg %p307
        %p1878 = pneg %p331
        %p1879 = pneg %p328
        %p1880 = pneg %p352
        %p1881 = pneg %p349
        %p1882 = pneg %p373
        %p1883 = pneg %p370
        %p1884 = pneg %p394
        %p1885 = pneg %p391
        %p1886 = pneg %p415
        %p1887 = pneg %p412
        %p1888 = pneg %p436
        %p1889 = pneg %p433
        %p1890 = pneg %p457
        %p1891 = pneg %p454
        %p1892 = pneg %p478
        %p1893 = pneg %p475
        %p1894 = pneg %p499
        %p1895 = pneg %p496
        %p1896 = pneg %p520
        %p1897 = pneg %p517
        %p1898 = pneg %p541
        %p1899 = pneg %p538
        %p1900 = pneg %p562
        %p1901 = pneg %p559
        %p1902 = pneg %p583
        %p1903 = pneg %p580
        %p1904 = pneg %p604
        %p1905 = pneg %p601
        %p1906 = pneg %p625
        %p1907 = pneg %p622
        %p1908 = pneg %p646
        %p1909 = pneg %p643
        %p1910 = pneg %p667
        %p1911 = pneg %p664
        %p1912 = pneg %p688
        %p1913 = pneg %p685
        %p1914 = pneg %p709
        %p1915 = pneg %p706
        %p1916 = pneg %p730
        %p1917 = pneg %p727
        %p1918 = pneg %p751
        %p1919 = pneg %p748
        %p1920 = pneg %p772
        %p1921 = pneg %p769
        %p1922 = pneg %p793
        %p1923 = pneg %p790
        %p1924 = pneg %p814
        %p1925 = pneg %p811
        %p1926 = pneg %p835
        %p1927 = pneg %p832
        %p1928 = pneg %p856
        %p1929 = pneg %p853
        %p1930 = pneg %p877
        %p1931 = pneg %p874
        %p1932 = pneg %p898
        %p1933 = pneg %p895
        %p1934 = pneg %p919
        %p1935 = pneg %p916
        %p1936 = pneg %p940
        %p1937 = pneg %p937
        %p1938 = pneg %p961
        %p1939 = pneg %p958
        %p1940 = pneg %p982
        %p1941 = pneg %p979
        %p1942 = pneg %p1003
        %p1943 = pneg %p1000
        %p1944 = pneg %p1024
        %p1945 = pneg %p1021
        %p1946 = pneg %p1045
        %p1947 = pneg %p1042
        %p1948 = pneg %p1066
        %p1949 = pneg %p1063
        %p1950 = pneg %p1087
        %p1951 = pneg %p1084
        %p1952 = pneg %p1108
        %p1953 = pneg %p1105
        %p1954 = pneg %p1129
        %p1955 = pneg %p1126
        %p1956 = pneg %p1150
        %p1957 = pneg %p1147
        %p1958 = pneg %p1171
        %p1959 = pneg %p1168
        %p1960 = pneg %p1192
        %p1961 = pneg %p1189
        %p1962 = pneg %p1213
        %p1963 = pneg %p1210
        %p1964 = pneg %p1234
        %p1965 = pneg %p1231
        %p1966 = pneg %p1255
        %p1967 = pneg %p1252
        %p1968 = pneg %p1276
        %p1969 = pneg %p1273
        %p1970 = pneg %p1297
        %p1971 = pneg %p1294
        %p1972 = pneg %p1318
        %p1973 = pneg %p1315
        %p1974 = pneg %p1339
        %p1975 = pneg %p1336
        %p1976 = pneg %p1365
        %p1977 = pneg %p1362
        %s1978 = sand.u32 %s1352, 1
        %s1979 = scalar_lea.sflag [#allocation4], %s1978
        %s1980 = sand.u32 %s1352, 1
        %s1981 = smul.addr %s1980, 16
        %s1982 = scalar_lea.vmem [#allocation40], %s1981
        %p1983 = scmp.lt.s32.totalorder %s142, 1
        %s1984 = scalar_select %p1983, %s142, 1
        %s1985 = smul.addr %s1984, 2
        %s1986 = smul.addr %s1985, 8
        %s1987 = scalar_lea.vmem %s1, %s1986
        %v1988 = vld [vmem:[%s1987] sm:$0xff]
        %v1989 = vld [vmem:[%s1987 + $0x8] sm:$0xff]
        %v1990 = vld [vmem:[#allocation2] sm:$0xff]
        %vm1991 = vcmask 261120
        %v1992 = vsel %vm1991, %v1990, 0.0
        %1993 = vadd.xlane.f32.xlu0 %v1992
        %v1994 = vpop.xlane.xlu0 %1993
        %v1995 = vrcp.pop 32.0
        %v1996 = vmul.f32 %v1994, %v1995
        %v1997 = vsub.f32 %v1990, %v1996
        %v1998 = vmul.f32 %v1997, %v1997
        %v1999 = vsel %vm1991, %v1998, 0.0
        %2000 = vadd.xlane.f32.xlu0 %v1999
        %v2001 = vpop.xlane.xlu0 %2000
        %v2002 = vmul.f32 %v2001, %v1995
        %v2003 = vadd.f32 %v2002, 1e-05
        %v2004 = vrsqrt.pop %v2003
        %v2005 = vmul.f32 %v1997, %v2004
        %v2006 = vld [vmem:[#allocation5] sm:$0x1]
        %v2008 = vlaneseq
        %v2009 = vshrl.u32 %v2008, 7
        %v2010 = vsub.s32 0, %v2009
        %v2011 = vrot.slane %v2006, %v2010
        %v2013 = vmul.f32 %v2005, %v2011
        %v2014 = vld [vmem:[#allocation7] sm:$0x1]
        %v2016 = vlaneseq
        %v2017 = vshrl.u32 %v2016, 7
        %v2018 = vsub.s32 0, %v2017
        %v2019 = vrot.slane %v2014, %v2018
        %v2021 = vadd.f32 %v2013, %v2019
        %v2022 = vsel %vm1991, %v1988, 0.0
        %2023 = vadd.xlane.f32.xlu0 %v2022
        %v2024 = vpop.xlane.xlu0 %2023
        %v2025 = vsel %vm1991, %v1989, 0.0
        %2026 = vadd.xlane.f32.xlu0 %v2025
        %v2027 = vpop.xlane.xlu0 %2026
        %v2028 = vmul.f32 %v2024, %v1995
        %v2029 = vmul.f32 %v2027, %v1995
        %v2030 = vsub.f32 %v1988, %v2028
        %v2031 = vsub.f32 %v1989, %v2029
        %v2032 = vmul.f32 %v2030, %v2030
        %v2033 = vmul.f32 %v2031, %v2031
        %v2034 = vsel %vm1991, %v2032, 0.0
        %2035 = vadd.xlane.f32.xlu0 %v2034
        %v2036 = vpop.xlane.xlu0 %2035
        %v2037 = vsel %vm1991, %v2033, 0.0
        %2038 = vadd.xlane.f32.xlu0 %v2037
        %v2039 = vpop.xlane.xlu0 %2038
        %v2040 = vmul.f32 %v2036, %v1995
        %v2041 = vmul.f32 %v2039, %v1995
        %v2042 = vadd.f32 %v2040, 1e-05
        %v2043 = vadd.f32 %v2041, 1e-05
        %v2044 = vrsqrt.pop %v2042
        %v2045 = vrsqrt.pop %v2043
        %v2046 = vmul.f32 %v2030, %v2044
        %v2047 = vmul.f32 %v2031, %v2045
        %v2048 = vld [vmem:[#allocation8] sm:$0x1]
        %v2050 = vlaneseq
        %v2051 = vshrl.u32 %v2050, 7
        %v2052 = vsub.s32 0, %v2051
        %v2053 = vrot.slane %v2048, %v2052
        %v2055 = vmul.f32 %v2046, %v2053
        %v2056 = vmul.f32 %v2047, %v2053
        %v2057 = vld [vmem:[#allocation10] sm:$0x1]
        %v2059 = vlaneseq
        %v2060 = vshrl.u32 %v2059, 7
        %v2061 = vsub.s32 0, %v2060
        %v2062 = vrot.slane %v2057, %v2061
        %v2064 = vadd.f32 %v2055, %v2062
        %v2065 = vadd.f32 %v2056, %v2062
        %v2066 = vld [vmem:[%s13] sm:$0xff]
        %v2067 = vld [vmem:[%s13 + $0x8] sm:$0xff]
        %v2068 = vld [vmem:[%s13 + $0x10] sm:$0xff]
        %v2069 = vld [vmem:[%s13 + $0x18] sm:$0xff]
        %v2070 = vld [vmem:[#allocation11] sm:$0x1]
        %v2072 = vlaneseq
        %v2073 = vshrl.u32 %v2072, 7
        %v2074 = vsub.s32 0, %v2073
        %v2075 = vrot.slane %v2070, %v2074
        %v2078 = vsel %vm1991, %v2021, 0
        %2080 = vmatprep.subr.mxu0 0.0
        %2081 = vmatpush1.msra.mxu0 %v2066
        %2082 = vmatprep.subr.mxu0 0.0
        %2083 = vmatpush1.msra.mxu0 %v2067
        %2084 = vmatprep.subr.mxu0 0.0
        %2085 = vmatpush1.msra.mxu0 %v2068
        %2086 = vmatprep.subr.mxu0 0.0
        %2087 = vmatpush1.msra.mxu0 %v2069
        %2088 = vmatprep.subr.mxu0 0.0
        %2089 = vmatpush1.msra.mxu0 0.0
        %2090 = vmatprep.subr.mxu0 0.0
        %2091 = vmatpush1.msra.mxu0 0.0
        %2092 = vmatprep.subr.mxu0 0.0
        %2093 = vmatpush1.msra.mxu0 0.0
        %2094 = vmatprep.subr.mxu0 0.0
        %2095 = vmatpush1.msra.mxu0 0.0
        %2096 = vmatprep.subr.mxu0 0.0
        %2097 = vmatpush1.msra.mxu0 0.0
        %2098 = vmatprep.subr.mxu0 0.0
        %2099 = vmatpush1.msra.mxu0 0.0
        %2100 = vmatprep.subr.mxu0 0.0
        %2101 = vmatpush1.msra.mxu0 0.0
        %2102 = vmatprep.subr.mxu0 0.0
        %2103 = vmatpush1.msra.mxu0 0.0
        %2104 = vmatprep.subr.mxu0 0.0
        %2105 = vmatpush1.msra.mxu0 0.0
        %2106 = vmatprep.subr.mxu0 0.0
        %2107 = vmatpush1.msra.mxu0 0.0
        %2108 = vmatprep.subr.mxu0 0.0
        %2109 = vmatpush1.msra.mxu0 0.0
        %2110 = vmatprep.subr.mxu0 0.0
        %2111 = vmatpush1.msra.mxu0 0.0
        %2112 = vmatprep.subr.mxu0 0.0
        %2113 = vmatpush1.msra.mxu0 0.0
        %2114 = vmatprep.subr.mxu0 0.0
        %2115 = vmatpush1.msra.mxu0 0.0
        %2116 = vmatprep.subr.mxu0 0.0
        %2117 = vmatpush1.msra.mxu0 0.0
        %2118 = vmatprep.subr.mxu0 0.0
        %2119 = vmatpush1.msra.mxu0 0.0
        %2120 = vmatprep.subr.mxu0 0.0
        %2121 = vmatpush1.msra.mxu0 0.0
        %2122 = vmatprep.subr.mxu0 0.0
        %2123 = vmatpush1.msra.mxu0 0.0
        %2124 = vmatprep.subr.mxu0 0.0
        %2125 = vmatpush1.msra.mxu0 0.0
        %2126 = vmatprep.subr.mxu0 0.0
        %2127 = vmatpush1.msra.mxu0 0.0
        %2128 = vmatprep.subr.mxu0 0.0
        %2129 = vmatpush1.msra.mxu0 0.0
        %2130 = vmatprep.subr.mxu0 0.0
        %2131 = vmatpush1.msra.mxu0 0.0
        %2132 = vmatprep.subr.mxu0 0.0
        %2133 = vmatpush1.msra.mxu0 0.0
        %2134 = vmatprep.subr.mxu0 0.0
        %2135 = vmatpush1.msra.mxu0 0.0
        %2136 = vmatprep.subr.mxu0 0.0
        %2137 = vmatpush1.msra.mxu0 0.0
        %2138 = vmatprep.subr.mxu0 0.0
        %2139 = vmatpush1.msra.mxu0 0.0
        %2140 = vmatprep.subr.mxu0 0.0
        %2141 = vmatpush1.msra.mxu0 0.0
        %2142 = vmatprep.subr.mxu0 0.0
        %2143 = vmatpush1.msra.mxu0 0.0
        %2144 = vmatprep.mubr.f32.mxu0 0.0
        %2145 = vmatmul.mubr.f32.gmra.mrb[0].mxu0 %v2078
        %v2146 = vpop.f32.mrb[0].mxu0
        %v2147 = vadd.f32 %v2075, %v2146
        %v2148 = vpop.f32.mrb[0].mxu0
        %2149 = vdwg.mxu0
        %v2150 = vld [vmem:[%s17] sm:$0xff]
        %v2151 = vld [vmem:[%s17 + $0x8] sm:$0xff]
        %v2152 = vld [vmem:[%s17 + $0x10] sm:$0xff]
        %v2153 = vld [vmem:[%s17 + $0x18] sm:$0xff]
        %v2154 = vld [vmem:[#allocation13] sm:$0x1]
        %v2156 = vlaneseq
        %v2157 = vshrl.u32 %v2156, 7
        %v2158 = vsub.s32 0, %v2157
        %v2159 = vrot.slane %v2154, %v2158
        %v2162 = vsel %vm1991, %v2064, 0
        %v2165 = vsel %vm1991, %v2065, 0
        %2167 = vmatprep.subr.mxu0 0.0
        %2168 = vmatpush1.msra.mxu0 %v2150
        %2169 = vmatprep.subr.mxu0 0.0
        %2170 = vmatpush1.msra.mxu0 %v2151
        %2171 = vmatprep.subr.mxu0 0.0
        %2172 = vmatpush1.msra.mxu0 %v2152
        %2173 = vmatprep.subr.mxu0 0.0
        %2174 = vmatpush1.msra.mxu0 %v2153
        %2175 = vmatprep.subr.mxu0 0.0
        %2176 = vmatpush1.msra.mxu0 0.0
        %2177 = vmatprep.subr.mxu0 0.0
        %2178 = vmatpush1.msra.mxu0 0.0
        %2179 = vmatprep.subr.mxu0 0.0
        %2180 = vmatpush1.msra.mxu0 0.0
        %2181 = vmatprep.subr.mxu0 0.0
        %2182 = vmatpush1.msra.mxu0 0.0
        %2183 = vmatprep.subr.mxu0 0.0
        %2184 = vmatpush1.msra.mxu0 0.0
        %2185 = vmatprep.subr.mxu0 0.0
        %2186 = vmatpush1.msra.mxu0 0.0
        %2187 = vmatprep.subr.mxu0 0.0
        %2188 = vmatpush1.msra.mxu0 0.0
        %2189 = vmatprep.subr.mxu0 0.0
        %2190 = vmatpush1.msra.mxu0 0.0
        %2191 = vmatprep.subr.mxu0 0.0
        %2192 = vmatpush1.msra.mxu0 0.0
        %2193 = vmatprep.subr.mxu0 0.0
        %2194 = vmatpush1.msra.mxu0 0.0
        %2195 = vmatprep.subr.mxu0 0.0
        %2196 = vmatpush1.msra.mxu0 0.0
        %2197 = vmatprep.subr.mxu0 0.0
        %2198 = vmatpush1.msra.mxu0 0.0
        %2199 = vmatprep.subr.mxu0 0.0
        %2200 = vmatpush1.msra.mxu0 0.0
        %2201 = vmatprep.subr.mxu0 0.0
        %2202 = vmatpush1.msra.mxu0 0.0
        %2203 = vmatprep.subr.mxu0 0.0
        %2204 = vmatpush1.msra.mxu0 0.0
        %2205 = vmatprep.subr.mxu0 0.0
        %2206 = vmatpush1.msra.mxu0 0.0
        %2207 = vmatprep.subr.mxu0 0.0
        %2208 = vmatpush1.msra.mxu0 0.0
        %2209 = vmatprep.subr.mxu0 0.0
        %2210 = vmatpush1.msra.mxu0 0.0
        %2211 = vmatprep.subr.mxu0 0.0
        %2212 = vmatpush1.msra.mxu0 0.0
        %2213 = vmatprep.subr.mxu0 0.0
        %2214 = vmatpush1.msra.mxu0 0.0
        %2215 = vmatprep.subr.mxu0 0.0
        %2216 = vmatpush1.msra.mxu0 0.0
        %2217 = vmatprep.subr.mxu0 0.0
        %2218 = vmatpush1.msra.mxu0 0.0
        %2219 = vmatprep.subr.mxu0 0.0
        %2220 = vmatpush1.msra.mxu0 0.0
        %2221 = vmatprep.subr.mxu0 0.0
        %2222 = vmatpush1.msra.mxu0 0.0
        %2223 = vmatprep.subr.mxu0 0.0
        %2224 = vmatpush1.msra.mxu0 0.0
        %2225 = vmatprep.subr.mxu0 0.0
        %2226 = vmatpush1.msra.mxu0 0.0
        %2227 = vmatprep.subr.mxu0 0.0
        %2228 = vmatpush1.msra.mxu0 0.0
        %2229 = vmatprep.subr.mxu0 0.0
        %2230 = vmatpush1.msra.mxu0 0.0
        %2231 = vmatprep.mubr.f32.mxu0 0.0
        %2232 = vmatmul.mubr.f32.gmra.mrb[0].mxu0 %v2162
        %v2233 = vpop.f32.mrb[0].mxu0
        %v2234 = vadd.f32 %v2159, %v2233
        %v2235 = vpop.f32.mrb[0].mxu0
        %2236 = vmatprep.mubr.f32.mxu0 0.0
        %2237 = vmatmul.mubr.f32.gmra.mrb[0].mxu0 %v2165
        %v2238 = vpop.f32.mrb[0].mxu0
        %v2239 = vadd.f32 %v2159, %v2238
        %v2240 = vpop.f32.mrb[0].mxu0
        %2241 = vdwg.mxu0
        %v2243 = vsel %vm1991, %v2147, 0
        %v2246 = vsel %vm1991, %v2234, 0
        %v2249 = vsel %vm1991, %v2239, 0
        %2251 = vmatprep.subr.mxu0 0.0
        %2252 = vmatpush1.xpose.msra.mxu0 %v2246
        %2253 = vmatprep.subr.mxu0 0.0
        %2254 = vmatpush1.xpose.msra.mxu0 %v2249
        %2255 = vmatprep.subr.mxu0 0.0
        %2256 = vmatpush1.xpose.msra.mxu0 0.0
        %2257 = vmatprep.subr.mxu0 0.0
        %2258 = vmatpush1.xpose.msra.mxu0 0.0
        %2259 = vmatprep.subr.mxu0 0.0
        %2260 = vmatpush1.xpose.msra.mxu0 0.0
        %2261 = vmatprep.subr.mxu0 0.0
        %2262 = vmatpush1.xpose.msra.mxu0 0.0
        %2263 = vmatprep.subr.mxu0 0.0
        %2264 = vmatpush1.xpose.msra.mxu0 0.0
        %2265 = vmatprep.subr.mxu0 0.0
        %2266 = vmatpush1.xpose.msra.mxu0 0.0
        %2267 = vmatprep.subr.mxu0 0.0
        %2268 = vmatpush1.xpose.msra.mxu0 0.0
        %2269 = vmatprep.subr.mxu0 0.0
        %2270 = vmatpush1.xpose.msra.mxu0 0.0
        %2271 = vmatprep.subr.mxu0 0.0
        %2272 = vmatpush1.xpose.msra.mxu0 0.0
        %2273 = vmatprep.subr.mxu0 0.0
        %2274 = vmatpush1.xpose.msra.mxu0 0.0
        %2275 = vmatprep.subr.mxu0 0.0
        %2276 = vmatpush1.xpose.msra.mxu0 0.0
        %2277 = vmatprep.subr.mxu0 0.0
        %2278 = vmatpush1.xpose.msra.mxu0 0.0
        %2279 = vmatprep.subr.mxu0 0.0
        %2280 = vmatpush1.xpose.msra.mxu0 0.0
        %2281 = vmatprep.subr.mxu0 0.0
        %2282 = vmatpush1.xpose.msra.mxu0 0.0
        %2283 = vmatprep.subr.mxu0 0.0
        %2284 = vmatpush1.xpose.msra.mxu0 0.0
        %2285 = vmatprep.subr.mxu0 0.0
        %2286 = vmatpush1.xpose.msra.mxu0 0.0
        %2287 = vmatprep.subr.mxu0 0.0
        %2288 = vmatpush1.xpose.msra.mxu0 0.0
        %2289 = vmatprep.subr.mxu0 0.0
        %2290 = vmatpush1.xpose.msra.mxu0 0.0
        %2291 = vmatprep.subr.mxu0 0.0
        %2292 = vmatpush1.xpose.msra.mxu0 0.0
        %2293 = vmatprep.subr.mxu0 0.0
        %2294 = vmatpush1.xpose.msra.mxu0 0.0
        %2295 = vmatprep.subr.mxu0 0.0
        %2296 = vmatpush1.xpose.msra.mxu0 0.0
        %2297 = vmatprep.subr.mxu0 0.0
        %2298 = vmatpush1.xpose.msra.mxu0 0.0
        %2299 = vmatprep.subr.mxu0 0.0
        %2300 = vmatpush1.xpose.msra.mxu0 0.0
        %2301 = vmatprep.subr.mxu0 0.0
        %2302 = vmatpush1.xpose.msra.mxu0 0.0
        %2303 = vmatprep.subr.mxu0 0.0
        %2304 = vmatpush1.xpose.msra.mxu0 0.0
        %2305 = vmatprep.subr.mxu0 0.0
        %2306 = vmatpush1.xpose.msra.mxu0 0.0
        %2307 = vmatprep.subr.mxu0 0.0
        %2308 = vmatpush1.xpose.msra.mxu0 0.0
        %2309 = vmatprep.subr.mxu0 0.0
        %2310 = vmatpush1.xpose.msra.mxu0 0.0
        %2311 = vmatprep.subr.mxu0 0.0
        %2312 = vmatpush1.xpose.msra.mxu0 0.0
        %2313 = vmatprep.subr.mxu0 0.0
        %2314 = vmatpush1.xpose.msra.mxu0 0.0
        %2315 = vmatprep.mubr.f32.mxu0 0.0
        %2316 = vmatmul.mubr.f32.gmra.mrb[0].mxu0 %v2243
        %v2317 = vpop.f32.mrb[0].mxu0
        %v2318 = vadd.f32 0.0, %v2317
        %v2319 = vpop.f32.mrb[0].mxu0
        %2320 = vdwg.mxu0
        %v2321 = vmul.f32 %v2318, 0.17677669
        %vm2322 = vcmask 130048
        %v2323 = vsel %vm2322, %v2321, -inf
        %2324 = vmax.xlane.f32.xlu0 %v2323
        %v2325 = vpop.xlane.xlu0 %2324
        %v2326 = vsub.f32 %v2321, %v2325
        %v2327 = vmul.f32 %v2326, 1.442695
        %v2328 = vpow.pop %v2327
        %v2329 = vsel %vm2322, %v2328, 0.0
        %2330 = vadd.xlane.f32.xlu0 %v2329
        %v2331 = vpop.xlane.xlu0 %2330
        %2332 = vrot.lane.b32.xlu0 %v2234, 96
        %v2333 = vpop.permute.xlu0 %2332
        %2334 = vrot.lane.b32.xlu0 %v2239, 96
        %v2335 = vpop.permute.xlu0 %2334
        %v2339 = vsel %vm2322, %v2328, 0
        %2341 = vmatprep.subr.mxu0 0.0
        %2342 = vmatpush1.msra.mxu0 %v2333
        %2343 = vmatprep.subr.mxu0 0.0
        %2344 = vmatpush1.msra.mxu0 %v2335
        %2345 = vmatprep.subr.mxu0 0.0
        %2346 = vmatpush1.msra.mxu0 0.0
        %2347 = vmatprep.subr.mxu0 0.0
        %2348 = vmatpush1.msra.mxu0 0.0
        %2349 = vmatprep.subr.mxu0 0.0
        %2350 = vmatpush1.msra.mxu0 0.0
        %2351 = vmatprep.subr.mxu0 0.0
        %2352 = vmatpush1.msra.mxu0 0.0
        %2353 = vmatprep.subr.mxu0 0.0
        %2354 = vmatpush1.msra.mxu0 0.0
        %2355 = vmatprep.subr.mxu0 0.0
        %2356 = vmatpush1.msra.mxu0 0.0
        %2357 = vmatprep.subr.mxu0 0.0
        %2358 = vmatpush1.msra.mxu0 0.0
        %2359 = vmatprep.subr.mxu0 0.0
        %2360 = vmatpush1.msra.mxu0 0.0
        %2361 = vmatprep.subr.mxu0 0.0
        %2362 = vmatpush1.msra.mxu0 0.0
        %2363 = vmatprep.subr.mxu0 0.0
        %2364 = vmatpush1.msra.mxu0 0.0
        %2365 = vmatprep.subr.mxu0 0.0
        %2366 = vmatpush1.msra.mxu0 0.0
        %2367 = vmatprep.subr.mxu0 0.0
        %2368 = vmatpush1.msra.mxu0 0.0
        %2369 = vmatprep.subr.mxu0 0.0
        %2370 = vmatpush1.msra.mxu0 0.0
        %2371 = vmatprep.subr.mxu0 0.0
        %2372 = vmatpush1.msra.mxu0 0.0
        %2373 = vmatprep.subr.mxu0 0.0
        %2374 = vmatpush1.msra.mxu0 0.0
        %2375 = vmatprep.subr.mxu0 0.0
        %2376 = vmatpush1.msra.mxu0 0.0
        %2377 = vmatprep.subr.mxu0 0.0
        %2378 = vmatpush1.msra.mxu0 0.0
        %2379 = vmatprep.subr.mxu0 0.0
        %2380 = vmatpush1.msra.mxu0 0.0
        %2381 = vmatprep.subr.mxu0 0.0
        %2382 = vmatpush1.msra.mxu0 0.0
        %2383 = vmatprep.subr.mxu0 0.0
        %2384 = vmatpush1.msra.mxu0 0.0
        %2385 = vmatprep.subr.mxu0 0.0
        %2386 = vmatpush1.msra.mxu0 0.0
        %2387 = vmatprep.subr.mxu0 0.0
        %2388 = vmatpush1.msra.mxu0 0.0
        %2389 = vmatprep.subr.mxu0 0.0
        %2390 = vmatpush1.msra.mxu0 0.0
        %2391 = vmatprep.subr.mxu0 0.0
        %2392 = vmatpush1.msra.mxu0 0.0
        %2393 = vmatprep.subr.mxu0 0.0
        %2394 = vmatpush1.msra.mxu0 0.0
        %2395 = vmatprep.subr.mxu0 0.0
        %2396 = vmatpush1.msra.mxu0 0.0
        %2397 = vmatprep.subr.mxu0 0.0
        %2398 = vmatpush1.msra.mxu0 0.0
        %2399 = vmatprep.subr.mxu0 0.0
        %2400 = vmatpush1.msra.mxu0 0.0
        %2401 = vmatprep.subr.mxu0 0.0
        %2402 = vmatpush1.msra.mxu0 0.0
        %2403 = vmatprep.subr.mxu0 0.0
        %2404 = vmatpush1.msra.mxu0 0.0
        %2405 = vmatprep.mubr.f32.mxu0 0.0
        %2406 = vmatmul.mubr.f32.gmra.mrb[0].mxu0 %v2339
        %v2407 = vpop.f32.mrb[0].mxu0
        %v2408 = vadd.f32 0.0, %v2407
        %v2409 = vpop.f32.mrb[0].mxu0
        %2410 = vdwg.mxu0
        %v2411 = vrcp.pop %v2331
        %v2412 = vmul.f32 %v2408, %v2411
        %v2413 = vld [vmem:[%s21] sm:$0xff]
        %v2414 = vld [vmem:[%s21 + $0x8] sm:$0xff]
        %v2415 = vld [vmem:[%s21 + $0x10] sm:$0xff]
        %v2416 = vld [vmem:[%s21 + $0x18] sm:$0xff]
        %v2417 = vld [vmem:[#allocation14] sm:$0x1]
        %v2419 = vlaneseq
        %v2420 = vshrl.u32 %v2419, 7
        %v2421 = vsub.s32 0, %v2420
        %v2422 = vrot.slane %v2417, %v2421
        %v2425 = vsel %vm1991, %v2412, 0
        %2427 = vmatprep.subr.mxu0 0.0
        %2428 = vmatpush1.msra.mxu0 %v2413
        %2429 = vmatprep.subr.mxu0 0.0
        %2430 = vmatpush1.msra.mxu0 %v2414
        %2431 = vmatprep.subr.mxu0 0.0
        %2432 = vmatpush1.msra.mxu0 %v2415
        %2433 = vmatprep.subr.mxu0 0.0
        %2434 = vmatpush1.msra.mxu0 %v2416
        %2435 = vmatprep.subr.mxu0 0.0
        %2436 = vmatpush1.msra.mxu0 0.0
        %2437 = vmatprep.subr.mxu0 0.0
        %2438 = vmatpush1.msra.mxu0 0.0
        %2439 = vmatprep.subr.mxu0 0.0
        %2440 = vmatpush1.msra.mxu0 0.0
        %2441 = vmatprep.subr.mxu0 0.0
        %2442 = vmatpush1.msra.mxu0 0.0
        %2443 = vmatprep.subr.mxu0 0.0
        %2444 = vmatpush1.msra.mxu0 0.0
        %2445 = vmatprep.subr.mxu0 0.0
        %2446 = vmatpush1.msra.mxu0 0.0
        %2447 = vmatprep.subr.mxu0 0.0
        %2448 = vmatpush1.msra.mxu0 0.0
        %2449 = vmatprep.subr.mxu0 0.0
        %2450 = vmatpush1.msra.mxu0 0.0
        %2451 = vmatprep.subr.mxu0 0.0
        %2452 = vmatpush1.msra.mxu0 0.0
        %2453 = vmatprep.subr.mxu0 0.0
        %2454 = vmatpush1.msra.mxu0 0.0
        %2455 = vmatprep.subr.mxu0 0.0
        %2456 = vmatpush1.msra.mxu0 0.0
        %2457 = vmatprep.subr.mxu0 0.0
        %2458 = vmatpush1.msra.mxu0 0.0
        %2459 = vmatprep.subr.mxu0 0.0
        %2460 = vmatpush1.msra.mxu0 0.0
        %2461 = vmatprep.subr.mxu0 0.0
        %2462 = vmatpush1.msra.mxu0 0.0
        %2463 = vmatprep.subr.mxu0 0.0
        %2464 = vmatpush1.msra.mxu0 0.0
        %2465 = vmatprep.subr.mxu0 0.0
        %2466 = vmatpush1.msra.mxu0 0.0
        %2467 = vmatprep.subr.mxu0 0.0
        %2468 = vmatpush1.msra.mxu0 0.0
        %2469 = vmatprep.subr.mxu0 0.0
        %2470 = vmatpush1.msra.mxu0 0.0
        %2471 = vmatprep.subr.mxu0 0.0
        %2472 = vmatpush1.msra.mxu0 0.0
        %2473 = vmatprep.subr.mxu0 0.0
        %2474 = vmatpush1.msra.mxu0 0.0
        %2475 = vmatprep.subr.mxu0 0.0
        %2476 = vmatpush1.msra.mxu0 0.0
        %2477 = vmatprep.subr.mxu0 0.0
        %2478 = vmatpush1.msra.mxu0 0.0
        %2479 = vmatprep.subr.mxu0 0.0
        %2480 = vmatpush1.msra.mxu0 0.0
        %2481 = vmatprep.subr.mxu0 0.0
        %2482 = vmatpush1.msra.mxu0 0.0
        %2483 = vmatprep.subr.mxu0 0.0
        %2484 = vmatpush1.msra.mxu0 0.0
        %2485 = vmatprep.subr.mxu0 0.0
        %2486 = vmatpush1.msra.mxu0 0.0
        %2487 = vmatprep.subr.mxu0 0.0
        %2488 = vmatpush1.msra.mxu0 0.0
        %2489 = vmatprep.subr.mxu0 0.0
        %2490 = vmatpush1.msra.mxu0 0.0
        %2491 = vmatprep.mubr.f32.mxu0 0.0
        %2492 = vmatmul.mubr.f32.gmra.mrb[0].mxu0 %v2425
        %v2493 = vpop.f32.mrb[0].mxu0
        %v2494 = vadd.f32 %v2422, %v2493
        %v2495 = vpop.f32.mrb[0].mxu0
        %2496 = vdwg.mxu0
        %v2497 = vadd.f32 %v1990, %v2494
        %v2498 = vsel %vm1991, %v2497, 0.0
        %2499 = vadd.xlane.f32.xlu0 %v2498
        %v2500 = vpop.xlane.xlu0 %2499
        %v2501 = vmul.f32 %v2500, %v1995
        %v2502 = vsub.f32 %v2497, %v2501
        %v2503 = vmul.f32 %v2502, %v2502
        %v2504 = vsel %vm1991, %v2503, 0.0
        %2505 = vadd.xlane.f32.xlu0 %v2504
        %v2506 = vpop.xlane.xlu0 %2505
        %v2507 = vmul.f32 %v2506, %v1995
        %v2508 = vadd.f32 %v2507, 1e-05
        %v2509 = vrsqrt.pop %v2508
        %v2510 = vmul.f32 %v2502, %v2509
        %v2511 = vld [vmem:[#allocation16] sm:$0x1]
        %v2513 = vlaneseq
        %v2514 = vshrl.u32 %v2513, 7
        %v2515 = vsub.s32 0, %v2514
        %v2516 = vrot.slane %v2511, %v2515
        %v2518 = vmul.f32 %v2510, %v2516
        %v2519 = vld [vmem:[#allocation17] sm:$0x1]
        %v2521 = vlaneseq
        %v2522 = vshrl.u32 %v2521, 7
        %v2523 = vsub.s32 0, %v2522
        %v2524 = vrot.slane %v2519, %v2523
        %v2526 = vadd.f32 %v2518, %v2524
        %v2527 = vld [vmem:[%s29] sm:$0xff]
        %v2528 = vld [vmem:[%s29 + $0x8] sm:$0xff]
        %v2529 = vld [vmem:[%s29 + $0x10] sm:$0xff]
        %v2530 = vld [vmem:[%s29 + $0x18] sm:$0xff]
        %v2531 = vld [vmem:[#allocation19] sm:$0x1]
        %v2533 = vlaneseq
        %v2534 = vshrl.u32 %v2533, 7
        %v2535 = vsub.s32 0, %v2534
        %v2536 = vrot.slane %v2531, %v2535
        %v2539 = vsel %vm1991, %v2526, 0
        %2541 = vmatprep.subr.mxu0 0.0
        %2542 = vmatpush1.msra.mxu0 %v2527
        %2543 = vmatprep.subr.mxu0 0.0
        %2544 = vmatpush1.msra.mxu0 %v2528
        %2545 = vmatprep.subr.mxu0 0.0
        %2546 = vmatpush1.msra.mxu0 %v2529
        %2547 = vmatprep.subr.mxu0 0.0
        %2548 = vmatpush1.msra.mxu0 %v2530
        %2549 = vmatprep.subr.mxu0 0.0
        %2550 = vmatpush1.msra.mxu0 0.0
        %2551 = vmatprep.subr.mxu0 0.0
        %2552 = vmatpush1.msra.mxu0 0.0
        %2553 = vmatprep.subr.mxu0 0.0
        %2554 = vmatpush1.msra.mxu0 0.0
        %2555 = vmatprep.subr.mxu0 0.0
        %2556 = vmatpush1.msra.mxu0 0.0
        %2557 = vmatprep.subr.mxu0 0.0
        %2558 = vmatpush1.msra.mxu0 0.0
        %2559 = vmatprep.subr.mxu0 0.0
        %2560 = vmatpush1.msra.mxu0 0.0
        %2561 = vmatprep.subr.mxu0 0.0
        %2562 = vmatpush1.msra.mxu0 0.0
        %2563 = vmatprep.subr.mxu0 0.0
        %2564 = vmatpush1.msra.mxu0 0.0
        %2565 = vmatprep.subr.mxu0 0.0
        %2566 = vmatpush1.msra.mxu0 0.0
        %2567 = vmatprep.subr.mxu0 0.0
        %2568 = vmatpush1.msra.mxu0 0.0
        %2569 = vmatprep.subr.mxu0 0.0
        %2570 = vmatpush1.msra.mxu0 0.0
        %2571 = vmatprep.subr.mxu0 0.0
        %2572 = vmatpush1.msra.mxu0 0.0
        %2573 = vmatprep.subr.mxu0 0.0
        %2574 = vmatpush1.msra.mxu0 0.0
        %2575 = vmatprep.subr.mxu0 0.0
        %2576 = vmatpush1.msra.mxu0 0.0
        %2577 = vmatprep.subr.mxu0 0.0
        %2578 = vmatpush1.msra.mxu0 0.0
        %2579 = vmatprep.subr.mxu0 0.0
        %2580 = vmatpush1.msra.mxu0 0.0
        %2581 = vmatprep.subr.mxu0 0.0
        %2582 = vmatpush1.msra.mxu0 0.0
        %2583 = vmatprep.subr.mxu0 0.0
        %2584 = vmatpush1.msra.mxu0 0.0
        %2585 = vmatprep.subr.mxu0 0.0
        %2586 = vmatpush1.msra.mxu0 0.0
        %2587 = vmatprep.subr.mxu0 0.0
        %2588 = vmatpush1.msra.mxu0 0.0
        %2589 = vmatprep.subr.mxu0 0.0
        %2590 = vmatpush1.msra.mxu0 0.0
        %2591 = vmatprep.subr.mxu0 0.0
        %2592 = vmatpush1.msra.mxu0 0.0
        %2593 = vmatprep.subr.mxu0 0.0
        %2594 = vmatpush1.msra.mxu0 0.0
        %2595 = vmatprep.subr.mxu0 0.0
        %2596 = vmatpush1.msra.mxu0 0.0
        %2597 = vmatprep.subr.mxu0 0.0
        %2598 = vmatpush1.msra.mxu0 0.0
        %2599 = vmatprep.subr.mxu0 0.0
        %2600 = vmatpush1.msra.mxu0 0.0
        %2601 = vmatprep.subr.mxu0 0.0
        %2602 = vmatpush1.msra.mxu0 0.0
        %2603 = vmatprep.subr.mxu0 0.0
        %2604 = vmatpush1.msra.mxu0 0.0
        %2605 = vmatprep.mubr.f32.mxu0 0.0
        %2606 = vmatmul.mubr.f32.gmra.mrb[0].mxu0 %v2539
        %v2607 = vpop.f32.mrb[0].mxu0
        %v2608 = vadd.f32 %v2536, %v2607
        %v2609 = vpop.f32.mrb[0].mxu0
        %2610 = vdwg.mxu0
        %v2611 = vmul.f32 %v2608, %v2608
        %v2612 = vmul.f32 %v2608, %v2611
        %v2613 = vmul.f32 %v2612, 0.044715
        %v2614 = vadd.f32 %v2608, %v2613
        %v2615 = vmul.f32 %v2614, 0.7978846
        %v2616 = vtanh.pop %v2615
        %v2617 = vadd.f32 %v2616, 1.0
        %v2618 = vmul.f32 %v2617, 0.5
        %v2619 = vmul.f32 %v2608, %v2618
        %v2620 = vld [vmem:[%s33] sm:$0xff]
        %v2621 = vld [vmem:[%s33 + $0x8] sm:$0xff]
        %v2622 = vld [vmem:[%s33 + $0x10] sm:$0xff]
        %v2623 = vld [vmem:[%s33 + $0x18] sm:$0xff]
        %v2624 = vld [vmem:[%s33 + $0x20] sm:$0xff]
        %v2625 = vld [vmem:[%s33 + $0x28] sm:$0xff]
        %v2626 = vld [vmem:[%s33 + $0x30] sm:$0xff]
        %v2627 = vld [vmem:[%s33 + $0x38] sm:$0xff]
        %v2628 = vld [vmem:[%s33 + $0x40] sm:$0xff]
        %v2629 = vld [vmem:[%s33 + $0x48] sm:$0xff]
        %v2630 = vld [vmem:[%s33 + $0x50] sm:$0xff]
        %v2631 = vld [vmem:[%s33 + $0x58] sm:$0xff]
        %v2632 = vld [vmem:[%s33 + $0x60] sm:$0xff]
        %v2633 = vld [vmem:[%s33 + $0x68] sm:$0xff]
        %v2634 = vld [vmem:[%s33 + $0x70] sm:$0xff]
        %v2635 = vld [vmem:[%s33 + $0x78] sm:$0xff]
        %v2636 = vld [vmem:[#allocation20] sm:$0x1]
        %v2638 = vlaneseq
        %v2639 = vshrl.u32 %v2638, 7
        %v2640 = vsub.s32 0, %v2639
        %v2641 = vrot.slane %v2636, %v2640
        %2643 = vmatprep.subr.mxu0 0.0
        %2644 = vmatpush1.msra.mxu0 %v2620
        %2645 = vmatprep.subr.mxu0 0.0
        %2646 = vmatpush1.msra.mxu0 %v2621
        %2647 = vmatprep.subr.mxu0 0.0
        %2648 = vmatpush1.msra.mxu0 %v2622
        %2649 = vmatprep.subr.mxu0 0.0
        %2650 = vmatpush1.msra.mxu0 %v2623
        %2651 = vmatprep.subr.mxu0 0.0
        %2652 = vmatpush1.msra.mxu0 %v2624
        %2653 = vmatprep.subr.mxu0 0.0
        %2654 = vmatpush1.msra.mxu0 %v2625
        %2655 = vmatprep.subr.mxu0 0.0
        %2656 = vmatpush1.msra.mxu0 %v2626
        %2657 = vmatprep.subr.mxu0 0.0
        %2658 = vmatpush1.msra.mxu0 %v2627
        %2659 = vmatprep.subr.mxu0 0.0
        %2660 = vmatpush1.msra.mxu0 %v2628
        %2661 = vmatprep.subr.mxu0 0.0
        %2662 = vmatpush1.msra.mxu0 %v2629
        %2663 = vmatprep.subr.mxu0 0.0
        %2664 = vmatpush1.msra.mxu0 %v2630
        %2665 = vmatprep.subr.mxu0 0.0
        %2666 = vmatpush1.msra.mxu0 %v2631
        %2667 = vmatprep.subr.mxu0 0.0
        %2668 = vmatpush1.msra.mxu0 %v2632
        %2669 = vmatprep.subr.mxu0 0.0
        %2670 = vmatpush1.msra.mxu0 %v2633
        %2671 = vmatprep.subr.mxu0 0.0
        %2672 = vmatpush1.msra.mxu0 %v2634
        %2673 = vmatprep.subr.mxu0 0.0
        %2674 = vmatpush1.msra.mxu0 %v2635
        %2675 = vmatprep.subr.mxu0 0.0
        %2676 = vmatpush1.msra.mxu0 0.0
        %2677 = vmatprep.subr.mxu0 0.0
        %2678 = vmatpush1.msra.mxu0 0.0
        %2679 = vmatprep.subr.mxu0 0.0
        %2680 = vmatpush1.msra.mxu0 0.0
        %2681 = vmatprep.subr.mxu0 0.0
        %2682 = vmatpush1.msra.mxu0 0.0
        %2683 = vmatprep.subr.mxu0 0.0
        %2684 = vmatpush1.msra.mxu0 0.0
        %2685 = vmatprep.subr.mxu0 0.0
        %2686 = vmatpush1.msra.mxu0 0.0
        %2687 = vmatprep.subr.mxu0 0.0
        %2688 = vmatpush1.msra.mxu0 0.0
        %2689 = vmatprep.subr.mxu0 0.0
        %2690 = vmatpush1.msra.mxu0 0.0
        %2691 = vmatprep.subr.mxu0 0.0
        %2692 = vmatpush1.msra.mxu0 0.0
        %2693 = vmatprep.subr.mxu0 0.0
        %2694 = vmatpush1.msra.mxu0 0.0
        %2695 = vmatprep.subr.mxu0 0.0
        %2696 = vmatpush1.msra.mxu0 0.0
        %2697 = vmatprep.subr.mxu0 0.0
        %2698 = vmatpush1.msra.mxu0 0.0
        %2699 = vmatprep.subr.mxu0 0.0
        %2700 = vmatpush1.msra.mxu0 0.0
        %2701 = vmatprep.subr.mxu0 0.0
        %2702 = vmatpush1.msra.mxu0 0.0
        %2703 = vmatprep.subr.mxu0 0.0
        %2704 = vmatpush1.msra.mxu0 0.0
        %2705 = vmatprep.subr.mxu0 0.0
        %2706 = vmatpush1.msra.mxu0 0.0
        %2707 = vmatprep.mubr.f32.mxu0 0.0
        %2708 = vmatmul.mubr.f32.gmra.mrb[0].mxu0 %v2619
        %v2709 = vpop.f32.mrb[0].mxu0
        %v2710 = vadd.f32 %v2641, %v2709
        %v2711 = vpop.f32.mrb[0].mxu0
        %2712 = vdwg.mxu0
        %v2713 = vadd.f32 %v2497, %v2710
        %v2714 = vsel %vm1991, %v2713, 0.0
        %2715 = vadd.xlane.f32.xlu0 %v2714
        %v2716 = vpop.xlane.xlu0 %2715
        %v2717 = vmul.f32 %v2716, %v1995
        %v2718 = vsub.f32 %v2713, %v2717
        %v2719 = vmul.f32 %v2718, %v2718
        %v2720 = vsel %vm1991, %v2719, 0.0
        %2721 = vadd.xlane.f32.xlu0 %v2720
        %v2722 = vpop.xlane.xlu0 %2721
        %v2723 = vmul.f32 %v2722, %v1995
        %v2724 = vadd.f32 %v2723, 1e-05
        %v2725 = vrsqrt.pop %v2724
        %v2726 = vmul.f32 %v2718, %v2725
        %v2727 = vld [vmem:[#allocation22] sm:$0x1]
        %v2729 = vlaneseq
        %v2730 = vshrl.u32 %v2729, 7
        %v2731 = vsub.s32 0, %v2730
        %v2732 = vrot.slane %v2727, %v2731
        %v2734 = vmul.f32 %v2726, %v2732
        %v2735 = vld [vmem:[#allocation23] sm:$0x1]
        %v2737 = vlaneseq
        %v2738 = vshrl.u32 %v2737, 7
        %v2739 = vsub.s32 0, %v2738
        %v2740 = vrot.slane %v2735, %v2739
        %v2742 = vadd.f32 %v2734, %v2740
        %v2743 = vld [vmem:[%s41] sm:$0xff]
        %v2744 = vld [vmem:[%s41 + $0x8] sm:$0xff]
        %v2745 = vld [vmem:[%s41 + $0x10] sm:$0xff]
        %v2746 = vld [vmem:[%s41 + $0x18] sm:$0xff]
        %v2747 = vld [vmem:[#allocation25] sm:$0x1]
        %v2749 = vlaneseq
        %v2750 = vshrl.u32 %v2749, 7
        %v2751 = vsub.s32 0, %v2750
        %v2752 = vrot.slane %v2747, %v2751
        %v2755 = vsel %vm1991, %v2742, 0
        %2757 = vmatprep.subr.mxu0 0.0
        %2758 = vmatpush1.msra.mxu0 %v2743
        %2759 = vmatprep.subr.mxu0 0.0
        %2760 = vmatpush1.msra.mxu0 %v2744
        %2761 = vmatprep.subr.mxu0 0.0
        %2762 = vmatpush1.msra.mxu0 %v2745
        %2763 = vmatprep.subr.mxu0 0.0
        %2764 = vmatpush1.msra.mxu0 %v2746
        %2765 = vmatprep.subr.mxu0 0.0
        %2766 = vmatpush1.msra.mxu0 0.0
        %2767 = vmatprep.subr.mxu0 0.0
        %2768 = vmatpush1.msra.mxu0 0.0
        %2769 = vmatprep.subr.mxu0 0.0
        %2770 = vmatpush1.msra.mxu0 0.0
        %2771 = vmatprep.subr.mxu0 0.0
        %2772 = vmatpush1.msra.mxu0 0.0
        %2773 = vmatprep.subr.mxu0 0.0
        %2774 = vmatpush1.msra.mxu0 0.0
        %2775 = vmatprep.subr.mxu0 0.0
        %2776 = vmatpush1.msra.mxu0 0.0
        %2777 = vmatprep.subr.mxu0 0.0
        %2778 = vmatpush1.msra.mxu0 0.0
        %2779 = vmatprep.subr.mxu0 0.0
        %2780 = vmatpush1.msra.mxu0 0.0
        %2781 = vmatprep.subr.mxu0 0.0
        %2782 = vmatpush1.msra.mxu0 0.0
        %2783 = vmatprep.subr.mxu0 0.0
        %2784 = vmatpush1.msra.mxu0 0.0
        %2785 = vmatprep.subr.mxu0 0.0
        %2786 = vmatpush1.msra.mxu0 0.0
        %2787 = vmatprep.subr.mxu0 0.0
        %2788 = vmatpush1.msra.mxu0 0.0
        %2789 = vmatprep.subr.mxu0 0.0
        %2790 = vmatpush1.msra.mxu0 0.0
        %2791 = vmatprep.subr.mxu0 0.0
        %2792 = vmatpush1.msra.mxu0 0.0
        %2793 = vmatprep.subr.mxu0 0.0
        %2794 = vmatpush1.msra.mxu0 0.0
        %2795 = vmatprep.subr.mxu0 0.0
        %2796 = vmatpush1.msra.mxu0 0.0
        %2797 = vmatprep.subr.mxu0 0.0
        %2798 = vmatpush1.msra.mxu0 0.0
        %2799 = vmatprep.subr.mxu0 0.0
        %2800 = vmatpush1.msra.mxu0 0.0
        %2801 = vmatprep.subr.mxu0 0.0
        %2802 = vmatpush1.msra.mxu0 0.0
        %2803 = vmatprep.subr.mxu0 0.0
        %2804 = vmatpush1.msra.mxu0 0.0
        %2805 = vmatprep.subr.mxu0 0.0
        %2806 = vmatpush1.msra.mxu0 0.0
        %2807 = vmatprep.subr.mxu0 0.0
        %2808 = vmatpush1.msra.mxu0 0.0
        %2809 = vmatprep.subr.mxu0 0.0
        %2810 = vmatpush1.msra.mxu0 0.0
        %2811 = vmatprep.subr.mxu0 0.0
        %2812 = vmatpush1.msra.mxu0 0.0
        %2813 = vmatprep.subr.mxu0 0.0
        %2814 = vmatpush1.msra.mxu0 0.0
        %2815 = vmatprep.subr.mxu0 0.0
        %2816 = vmatpush1.msra.mxu0 0.0
        %2817 = vmatprep.subr.mxu0 0.0
        %2818 = vmatpush1.msra.mxu0 0.0
        %2819 = vmatprep.subr.mxu0 0.0
        %2820 = vmatpush1.msra.mxu0 0.0
        %2821 = vmatprep.mubr.f32.mxu0 0.0
        %2822 = vmatmul.mubr.f32.gmra.mrb[0].mxu0 %v2755
        %v2823 = vpop.f32.mrb[0].mxu0
        %v2824 = vadd.f32 %v2752, %v2823
        %v2825 = vpop.f32.mrb[0].mxu0
        %2826 = vdwg.mxu0
        %2828 = vrot.lane.b32.xlu0 %v2824, 96
        %v2829 = vpop.permute.xlu0 %2828
        %v2830 = vsel %vm1991, %v2824, 0
        %v2832 = vsel %vm1991, %v2829, 0
        %2834 = vmatprep.subr.mxu0 0.0
        %2835 = vmatpush1.xpose.msra.mxu0 %v2832
        %2836 = vmatprep.subr.mxu0 0.0
        %2837 = vmatpush1.xpose.msra.mxu0 0.0
        %2838 = vmatprep.subr.mxu0 0.0
        %2839 = vmatpush1.xpose.msra.mxu0 0.0
        %2840 = vmatprep.subr.mxu0 0.0
        %2841 = vmatpush1.xpose.msra.mxu0 0.0
        %2842 = vmatprep.subr.mxu0 0.0
        %2843 = vmatpush1.xpose.msra.mxu0 0.0
        %2844 = vmatprep.subr.mxu0 0.0
        %2845 = vmatpush1.xpose.msra.mxu0 0.0
        %2846 = vmatprep.subr.mxu0 0.0
        %2847 = vmatpush1.xpose.msra.mxu0 0.0
        %2848 = vmatprep.subr.mxu0 0.0
        %2849 = vmatpush1.xpose.msra.mxu0 0.0
        %2850 = vmatprep.subr.mxu0 0.0
        %2851 = vmatpush1.xpose.msra.mxu0 0.0
        %2852 = vmatprep.subr.mxu0 0.0
        %2853 = vmatpush1.xpose.msra.mxu0 0.0
        %2854 = vmatprep.subr.mxu0 0.0
        %2855 = vmatpush1.xpose.msra.mxu0 0.0
        %2856 = vmatprep.subr.mxu0 0.0
        %2857 = vmatpush1.xpose.msra.mxu0 0.0
        %2858 = vmatprep.subr.mxu0 0.0
        %2859 = vmatpush1.xpose.msra.mxu0 0.0
        %2860 = vmatprep.subr.mxu0 0.0
        %2861 = vmatpush1.xpose.msra.mxu0 0.0
        %2862 = vmatprep.subr.mxu0 0.0
        %2863 = vmatpush1.xpose.msra.mxu0 0.0
        %2864 = vmatprep.subr.mxu0 0.0
        %2865 = vmatpush1.xpose.msra.mxu0 0.0
        %2866 = vmatprep.subr.mxu0 0.0
        %2867 = vmatpush1.xpose.msra.mxu0 0.0
        %2868 = vmatprep.subr.mxu0 0.0
        %2869 = vmatpush1.xpose.msra.mxu0 0.0
        %2870 = vmatprep.subr.mxu0 0.0
        %2871 = vmatpush1.xpose.msra.mxu0 0.0
        %2872 = vmatprep.subr.mxu0 0.0
        %2873 = vmatpush1.xpose.msra.mxu0 0.0
        %2874 = vmatprep.subr.mxu0 0.0
        %2875 = vmatpush1.xpose.msra.mxu0 0.0
        %2876 = vmatprep.subr.mxu0 0.0
        %2877 = vmatpush1.xpose.msra.mxu0 0.0
        %2878 = vmatprep.subr.mxu0 0.0
        %2879 = vmatpush1.xpose.msra.mxu0 0.0
        %2880 = vmatprep.subr.mxu0 0.0
        %2881 = vmatpush1.xpose.msra.mxu0 0.0
        %2882 = vmatprep.subr.mxu0 0.0
        %2883 = vmatpush1.xpose.msra.mxu0 0.0
        %2884 = vmatprep.subr.mxu0 0.0
        %2885 = vmatpush1.xpose.msra.mxu0 0.0
        %2886 = vmatprep.subr.mxu0 0.0
        %2887 = vmatpush1.xpose.msra.mxu0 0.0
        %2888 = vmatprep.subr.mxu0 0.0
        %2889 = vmatpush1.xpose.msra.mxu0 0.0
        %2890 = vmatprep.subr.mxu0 0.0
        %2891 = vmatpush1.xpose.msra.mxu0 0.0
        %2892 = vmatprep.subr.mxu0 0.0
        %2893 = vmatpush1.xpose.msra.mxu0 0.0
        %2894 = vmatprep.subr.mxu0 0.0
        %2895 = vmatpush1.xpose.msra.mxu0 0.0
        %2896 = vmatprep.subr.mxu0 0.0
        %2897 = vmatpush1.xpose.msra.mxu0 0.0
        %2898 = vmatprep.mubr.f32.mxu0 0.0
        %2899 = vmatmul.mubr.f32.gmra.mrb[0].mxu0 %v2830
        %v2900 = vpop.f32.mrb[0].mxu0
        %v2901 = vadd.f32 0.0, %v2900
        %v2902 = vpop.f32.mrb[0].mxu0
        %2903 = vdwg.mxu0
        %v2904 = vmul.f32 %v2901, 0.17677669
        %vm2905 = vcmask 64512
        %v2906 = vsel %vm2905, %v2904, -inf
        %2907 = vmax.xlane.f32.xlu0 %v2906
        %v2908 = vpop.xlane.xlu0 %2907
        %v2909 = vsub.f32 %v2904, %v2908
        %v2910 = vmul.f32 %v2909, 1.442695
        %v2911 = vpow.pop %v2910
        %v2912 = vsel %vm2905, %v2911, 0.0
        %2913 = vadd.xlane.f32.xlu0 %v2912
        %v2914 = vpop.xlane.xlu0 %2913
        %2915 = vrot.lane.b32.xlu0 %v2824, 64
        %v2916 = vpop.permute.xlu0 %2915
        %v2919 = vsel %vm2905, %v2911, 0
        %2921 = vmatprep.subr.mxu0 0.0
        %2922 = vmatpush1.msra.mxu0 %v2916
        %2923 = vmatprep.subr.mxu0 0.0
        %2924 = vmatpush1.msra.mxu0 0.0
        %2925 = vmatprep.subr.mxu0 0.0
        %2926 = vmatpush1.msra.mxu0 0.0
        %2927 = vmatprep.subr.mxu0 0.0
        %2928 = vmatpush1.msra.mxu0 0.0
        %2929 = vmatprep.subr.mxu0 0.0
        %2930 = vmatpush1.msra.mxu0 0.0
        %2931 = vmatprep.subr.mxu0 0.0
        %2932 = vmatpush1.msra.mxu0 0.0
        %2933 = vmatprep.subr.mxu0 0.0
        %2934 = vmatpush1.msra.mxu0 0.0
        %2935 = vmatprep.subr.mxu0 0.0
        %2936 = vmatpush1.msra.mxu0 0.0
        %2937 = vmatprep.subr.mxu0 0.0
        %2938 = vmatpush1.msra.mxu0 0.0
        %2939 = vmatprep.subr.mxu0 0.0
        %2940 = vmatpush1.msra.mxu0 0.0
        %2941 = vmatprep.subr.mxu0 0.0
        %2942 = vmatpush1.msra.mxu0 0.0
        %2943 = vmatprep.subr.mxu0 0.0
        %2944 = vmatpush1.msra.mxu0 0.0
        %2945 = vmatprep.subr.mxu0 0.0
        %2946 = vmatpush1.msra.mxu0 0.0
        %2947 = vmatprep.subr.mxu0 0.0
        %2948 = vmatpush1.msra.mxu0 0.0
        %2949 = vmatprep.subr.mxu0 0.0
        %2950 = vmatpush1.msra.mxu0 0.0
        %2951 = vmatprep.subr.mxu0 0.0
        %2952 = vmatpush1.msra.mxu0 0.0
        %2953 = vmatprep.subr.mxu0 0.0
        %2954 = vmatpush1.msra.mxu0 0.0
        %2955 = vmatprep.subr.mxu0 0.0
        %2956 = vmatpush1.msra.mxu0 0.0
        %2957 = vmatprep.subr.mxu0 0.0
        %2958 = vmatpush1.msra.mxu0 0.0
        %2959 = vmatprep.subr.mxu0 0.0
        %2960 = vmatpush1.msra.mxu0 0.0
        %2961 = vmatprep.subr.mxu0 0.0
        %2962 = vmatpush1.msra.mxu0 0.0
        %2963 = vmatprep.subr.mxu0 0.0
        %2964 = vmatpush1.msra.mxu0 0.0
        %2965 = vmatprep.subr.mxu0 0.0
        %2966 = vmatpush1.msra.mxu0 0.0
        %2967 = vmatprep.subr.mxu0 0.0
        %2968 = vmatpush1.msra.mxu0 0.0
        %2969 = vmatprep.subr.mxu0 0.0
        %2970 = vmatpush1.msra.mxu0 0.0
        %2971 = vmatprep.subr.mxu0 0.0
        %2972 = vmatpush1.msra.mxu0 0.0
        %2973 = vmatprep.subr.mxu0 0.0
        %2974 = vmatpush1.msra.mxu0 0.0
        %2975 = vmatprep.subr.mxu0 0.0
        %2976 = vmatpush1.msra.mxu0 0.0
        %2977 = vmatprep.subr.mxu0 0.0
        %2978 = vmatpush1.msra.mxu0 0.0
        %2979 = vmatprep.subr.mxu0 0.0
        %2980 = vmatpush1.msra.mxu0 0.0
        %2981 = vmatprep.subr.mxu0 0.0
        %2982 = vmatpush1.msra.mxu0 0.0
        %2983 = vmatprep.subr.mxu0 0.0
        %2984 = vmatpush1.msra.mxu0 0.0
        %2985 = vmatprep.mubr.f32.mxu0 0.0
        %2986 = vmatmul.mubr.f32.gmra.mrb[0].mxu0 %v2919
        %v2987 = vpop.f32.mrb[0].mxu0
        %v2988 = vadd.f32 0.0, %v2987
        %v2989 = vpop.f32.mrb[0].mxu0
        %2990 = vdwg.mxu0
        %v2991 = vrcp.pop %v2914
        %v2992 = vmul.f32 %v2988, %v2991
        %v2993 = vld [vmem:[%s45] sm:$0xff]
        %v2994 = vld [vmem:[%s45 + $0x8] sm:$0xff]
        %v2995 = vld [vmem:[%s45 + $0x10] sm:$0xff]
        %v2996 = vld [vmem:[%s45 + $0x18] sm:$0xff]
        %v2997 = vld [vmem:[#allocation26] sm:$0x1]
        %v2999 = vlaneseq
        %v3000 = vshrl.u32 %v2999, 7
        %v3001 = vsub.s32 0, %v3000
        %v3002 = vrot.slane %v2997, %v3001
        %v3005 = vsel %vm1991, %v2992, 0
        %3007 = vmatprep.subr.mxu0 0.0
        %3008 = vmatpush1.msra.mxu0 %v2993
        %3009 = vmatprep.subr.mxu0 0.0
        %3010 = vmatpush1.msra.mxu0 %v2994
        %3011 = vmatprep.subr.mxu0 0.0
        %3012 = vmatpush1.msra.mxu0 %v2995
        %3013 = vmatprep.subr.mxu0 0.0
        %3014 = vmatpush1.msra.mxu0 %v2996
        %3015 = vmatprep.subr.mxu0 0.0
        %3016 = vmatpush1.msra.mxu0 0.0
        %3017 = vmatprep.subr.mxu0 0.0
        %3018 = vmatpush1.msra.mxu0 0.0
        %3019 = vmatprep.subr.mxu0 0.0
        %3020 = vmatpush1.msra.mxu0 0.0
        %3021 = vmatprep.subr.mxu0 0.0
        %3022 = vmatpush1.msra.mxu0 0.0
        %3023 = vmatprep.subr.mxu0 0.0
        %3024 = vmatpush1.msra.mxu0 0.0
        %3025 = vmatprep.subr.mxu0 0.0
        %3026 = vmatpush1.msra.mxu0 0.0
        %3027 = vmatprep.subr.mxu0 0.0
        %3028 = vmatpush1.msra.mxu0 0.0
        %3029 = vmatprep.subr.mxu0 0.0
        %3030 = vmatpush1.msra.mxu0 0.0
        %3031 = vmatprep.subr.mxu0 0.0
        %3032 = vmatpush1.msra.mxu0 0.0
        %3033 = vmatprep.subr.mxu0 0.0
        %3034 = vmatpush1.msra.mxu0 0.0
        %3035 = vmatprep.subr.mxu0 0.0
        %3036 = vmatpush1.msra.mxu0 0.0
        %3037 = vmatprep.subr.mxu0 0.0
        %3038 = vmatpush1.msra.mxu0 0.0
        %3039 = vmatprep.subr.mxu0 0.0
        %3040 = vmatpush1.msra.mxu0 0.0
        %3041 = vmatprep.subr.mxu0 0.0
        %3042 = vmatpush1.msra.mxu0 0.0
        %3043 = vmatprep.subr.mxu0 0.0
        %3044 = vmatpush1.msra.mxu0 0.0
        %3045 = vmatprep.subr.mxu0 0.0
        %3046 = vmatpush1.msra.mxu0 0.0
        %3047 = vmatprep.subr.mxu0 0.0
        %3048 = vmatpush1.msra.mxu0 0.0
        %3049 = vmatprep.subr.mxu0 0.0
        %3050 = vmatpush1.msra.mxu0 0.0
        %3051 = vmatprep.subr.mxu0 0.0
        %3052 = vmatpush1.msra.mxu0 0.0
        %3053 = vmatprep.subr.mxu0 0.0
        %3054 = vmatpush1.msra.mxu0 0.0
        %3055 = vmatprep.subr.mxu0 0.0
        %3056 = vmatpush1.msra.mxu0 0.0
        %3057 = vmatprep.subr.mxu0 0.0
        %3058 = vmatpush1.msra.mxu0 0.0
        %3059 = vmatprep.subr.mxu0 0.0
        %3060 = vmatpush1.msra.mxu0 0.0
        %3061 = vmatprep.subr.mxu0 0.0
        %3062 = vmatpush1.msra.mxu0 0.0
        %3063 = vmatprep.subr.mxu0 0.0
        %3064 = vmatpush1.msra.mxu0 0.0
        %3065 = vmatprep.subr.mxu0 0.0
        %3066 = vmatpush1.msra.mxu0 0.0
        %3067 = vmatprep.subr.mxu0 0.0
        %3068 = vmatpush1.msra.mxu0 0.0
        %3069 = vmatprep.subr.mxu0 0.0
        %3070 = vmatpush1.msra.mxu0 0.0
        %3071 = vmatprep.mubr.f32.mxu0 0.0
        %3072 = vmatmul.mubr.f32.gmra.mrb[0].mxu0 %v3005
        %v3073 = vpop.f32.mrb[0].mxu0
        %v3074 = vadd.f32 %v3002, %v3073
        %v3075 = vpop.f32.mrb[0].mxu0
        %3076 = vdwg.mxu0
        %v3077 = vadd.f32 %v2713, %v3074
        %v3078 = vsel %vm1991, %v3077, 0.0
        %3079 = vadd.xlane.f32.xlu0 %v3078
        %v3080 = vpop.xlane.xlu0 %3079
        %v3081 = vmul.f32 %v3080, %v1995
        %v3082 = vsub.f32 %v3077, %v3081
        %v3083 = vmul.f32 %v3082, %v3082
        %v3084 = vsel %vm1991, %v3083, 0.0
        %3085 = vadd.xlane.f32.xlu0 %v3084
        %v3086 = vpop.xlane.xlu0 %3085
        %v3087 = vmul.f32 %v3086, %v1995
        %v3088 = vadd.f32 %v3087, 1e-05
        %v3089 = vrsqrt.pop %v3088
        %v3090 = vmul.f32 %v3082, %v3089
        %v3091 = vld [vmem:[#allocation28] sm:$0x1]
        %v3093 = vlaneseq
        %v3094 = vshrl.u32 %v3093, 7
        %v3095 = vsub.s32 0, %v3094
        %v3096 = vrot.slane %v3091, %v3095
        %v3098 = vmul.f32 %v3090, %v3096
        %v3099 = vld [vmem:[#allocation29] sm:$0x1]
        %v3101 = vlaneseq
        %v3102 = vshrl.u32 %v3101, 7
        %v3103 = vsub.s32 0, %v3102
        %v3104 = vrot.slane %v3099, %v3103
        %v3106 = vadd.f32 %v3098, %v3104
        %v3107 = vld [vmem:[%s53] sm:$0xff]
        %v3108 = vld [vmem:[%s53 + $0x8] sm:$0xff]
        %v3109 = vld [vmem:[%s53 + $0x10] sm:$0xff]
        %v3110 = vld [vmem:[%s53 + $0x18] sm:$0xff]
        %v3111 = vld [vmem:[#allocation31] sm:$0x1]
        %v3113 = vlaneseq
        %v3114 = vshrl.u32 %v3113, 7
        %v3115 = vsub.s32 0, %v3114
        %v3116 = vrot.slane %v3111, %v3115
        %v3119 = vsel %vm1991, %v3106, 0
        %3121 = vmatprep.subr.mxu0 0.0
        %3122 = vmatpush1.msra.mxu0 %v3107
        %3123 = vmatprep.subr.mxu0 0.0
        %3124 = vmatpush1.msra.mxu0 %v3108
        %3125 = vmatprep.subr.mxu0 0.0
        %3126 = vmatpush1.msra.mxu0 %v3109
        %3127 = vmatprep.subr.mxu0 0.0
        %3128 = vmatpush1.msra.mxu0 %v3110
        %3129 = vmatprep.subr.mxu0 0.0
        %3130 = vmatpush1.msra.mxu0 0.0
        %3131 = vmatprep.subr.mxu0 0.0
        %3132 = vmatpush1.msra.mxu0 0.0
        %3133 = vmatprep.subr.mxu0 0.0
        %3134 = vmatpush1.msra.mxu0 0.0
        %3135 = vmatprep.subr.mxu0 0.0
        %3136 = vmatpush1.msra.mxu0 0.0
        %3137 = vmatprep.subr.mxu0 0.0
        %3138 = vmatpush1.msra.mxu0 0.0
        %3139 = vmatprep.subr.mxu0 0.0
        %3140 = vmatpush1.msra.mxu0 0.0
        %3141 = vmatprep.subr.mxu0 0.0
        %3142 = vmatpush1.msra.mxu0 0.0
        %3143 = vmatprep.subr.mxu0 0.0
        %3144 = vmatpush1.msra.mxu0 0.0
        %3145 = vmatprep.subr.mxu0 0.0
        %3146 = vmatpush1.msra.mxu0 0.0
        %3147 = vmatprep.subr.mxu0 0.0
        %3148 = vmatpush1.msra.mxu0 0.0
        %3149 = vmatprep.subr.mxu0 0.0
        %3150 = vmatpush1.msra.mxu0 0.0
        %3151 = vmatprep.subr.mxu0 0.0
        %3152 = vmatpush1.msra.mxu0 0.0
        %3153 = vmatprep.subr.mxu0 0.0
        %3154 = vmatpush1.msra.mxu0 0.0
        %3155 = vmatprep.subr.mxu0 0.0
        %3156 = vmatpush1.msra.mxu0 0.0
        %3157 = vmatprep.subr.mxu0 0.0
        %3158 = vmatpush1.msra.mxu0 0.0
        %3159 = vmatprep.subr.mxu0 0.0
        %3160 = vmatpush1.msra.mxu0 0.0
        %3161 = vmatprep.subr.mxu0 0.0
        %3162 = vmatpush1.msra.mxu0 0.0
        %3163 = vmatprep.subr.mxu0 0.0
        %3164 = vmatpush1.msra.mxu0 0.0
        %3165 = vmatprep.subr.mxu0 0.0
        %3166 = vmatpush1.msra.mxu0 0.0
        %3167 = vmatprep.subr.mxu0 0.0
        %3168 = vmatpush1.msra.mxu0 0.0
        %3169 = vmatprep.subr.mxu0 0.0
        %3170 = vmatpush1.msra.mxu0 0.0
        %3171 = vmatprep.subr.mxu0 0.0
        %3172 = vmatpush1.msra.mxu0 0.0
        %3173 = vmatprep.subr.mxu0 0.0
        %3174 = vmatpush1.msra.mxu0 0.0
        %3175 = vmatprep.subr.mxu0 0.0
        %3176 = vmatpush1.msra.mxu0 0.0
        %3177 = vmatprep.subr.mxu0 0.0
        %3178 = vmatpush1.msra.mxu0 0.0
        %3179 = vmatprep.subr.mxu0 0.0
        %3180 = vmatpush1.msra.mxu0 0.0
        %3181 = vmatprep.subr.mxu0 0.0
        %3182 = vmatpush1.msra.mxu0 0.0
        %3183 = vmatprep.subr.mxu0 0.0
        %3184 = vmatpush1.msra.mxu0 0.0
        %3185 = vmatprep.mubr.f32.mxu0 0.0
        %3186 = vmatmul.mubr.f32.gmra.mrb[0].mxu0 %v3119
        %v3187 = vpop.f32.mrb[0].mxu0
        %v3188 = vadd.f32 %v3116, %v3187
        %v3189 = vpop.f32.mrb[0].mxu0
        %3190 = vdwg.mxu0
        %v3191 = vmul.f32 %v3188, %v3188
        %v3192 = vmul.f32 %v3188, %v3191
        %v3193 = vmul.f32 %v3192, 0.044715
        %v3194 = vadd.f32 %v3188, %v3193
        %v3195 = vmul.f32 %v3194, 0.7978846
        %v3196 = vtanh.pop %v3195
        %v3197 = vadd.f32 %v3196, 1.0
        %v3198 = vmul.f32 %v3197, 0.5
        %v3199 = vmul.f32 %v3188, %v3198
        %v3200 = vld [vmem:[%s57] sm:$0xff]
        %v3201 = vld [vmem:[%s57 + $0x8] sm:$0xff]
        %v3202 = vld [vmem:[%s57 + $0x10] sm:$0xff]
        %v3203 = vld [vmem:[%s57 + $0x18] sm:$0xff]
        %v3204 = vld [vmem:[%s57 + $0x20] sm:$0xff]
        %v3205 = vld [vmem:[%s57 + $0x28] sm:$0xff]
        %v3206 = vld [vmem:[%s57 + $0x30] sm:$0xff]
        %v3207 = vld [vmem:[%s57 + $0x38] sm:$0xff]
        %v3208 = vld [vmem:[%s57 + $0x40] sm:$0xff]
        %v3209 = vld [vmem:[%s57 + $0x48] sm:$0xff]
        %v3210 = vld [vmem:[%s57 + $0x50] sm:$0xff]
        %v3211 = vld [vmem:[%s57 + $0x58] sm:$0xff]
        %v3212 = vld [vmem:[%s57 + $0x60] sm:$0xff]
        %v3213 = vld [vmem:[%s57 + $0x68] sm:$0xff]
        %v3214 = vld [vmem:[%s57 + $0x70] sm:$0xff]
        %v3215 = vld [vmem:[%s57 + $0x78] sm:$0xff]
        %v3216 = vld [vmem:[#allocation32] sm:$0x1]
        %v3218 = vlaneseq
        %v3219 = vshrl.u32 %v3218, 7
        %v3220 = vsub.s32 0, %v3219
        %v3221 = vrot.slane %v3216, %v3220
        %3223 = vmatprep.subr.mxu0 0.0
        %3224 = vmatpush1.msra.mxu0 %v3200
        %3225 = vmatprep.subr.mxu0 0.0
        %3226 = vmatpush1.msra.mxu0 %v3201
        %3227 = vmatprep.subr.mxu0 0.0
        %3228 = vmatpush1.msra.mxu0 %v3202
        %3229 = vmatprep.subr.mxu0 0.0
        %3230 = vmatpush1.msra.mxu0 %v3203
        %3231 = vmatprep.subr.mxu0 0.0
        %3232 = vmatpush1.msra.mxu0 %v3204
        %3233 = vmatprep.subr.mxu0 0.0
        %3234 = vmatpush1.msra.mxu0 %v3205
        %3235 = vmatprep.subr.mxu0 0.0
        %3236 = vmatpush1.msra.mxu0 %v3206
        %3237 = vmatprep.subr.mxu0 0.0
        %3238 = vmatpush1.msra.mxu0 %v3207
        %3239 = vmatprep.subr.mxu0 0.0
        %3240 = vmatpush1.msra.mxu0 %v3208
        %3241 = vmatprep.subr.mxu0 0.0
        %3242 = vmatpush1.msra.mxu0 %v3209
        %3243 = vmatprep.subr.mxu0 0.0
        %3244 = vmatpush1.msra.mxu0 %v3210
        %3245 = vmatprep.subr.mxu0 0.0
        %3246 = vmatpush1.msra.mxu0 %v3211
        %3247 = vmatprep.subr.mxu0 0.0
        %3248 = vmatpush1.msra.mxu0 %v3212
        %3249 = vmatprep.subr.mxu0 0.0
        %3250 = vmatpush1.msra.mxu0 %v3213
        %3251 = vmatprep.subr.mxu0 0.0
        %3252 = vmatpush1.msra.mxu0 %v3214
        %3253 = vmatprep.subr.mxu0 0.0
        %3254 = vmatpush1.msra.mxu0 %v3215
        %3255 = vmatprep.subr.mxu0 0.0
        %3256 = vmatpush1.msra.mxu0 0.0
        %3257 = vmatprep.subr.mxu0 0.0
        %3258 = vmatpush1.msra.mxu0 0.0
        %3259 = vmatprep.subr.mxu0 0.0
        %3260 = vmatpush1.msra.mxu0 0.0
        %3261 = vmatprep.subr.mxu0 0.0
        %3262 = vmatpush1.msra.mxu0 0.0
        %3263 = vmatprep.subr.mxu0 0.0
        %3264 = vmatpush1.msra.mxu0 0.0
        %3265 = vmatprep.subr.mxu0 0.0
        %3266 = vmatpush1.msra.mxu0 0.0
        %3267 = vmatprep.subr.mxu0 0.0
        %3268 = vmatpush1.msra.mxu0 0.0
        %3269 = vmatprep.subr.mxu0 0.0
        %3270 = vmatpush1.msra.mxu0 0.0
        %3271 = vmatprep.subr.mxu0 0.0
        %3272 = vmatpush1.msra.mxu0 0.0
        %3273 = vmatprep.subr.mxu0 0.0
        %3274 = vmatpush1.msra.mxu0 0.0
        %3275 = vmatprep.subr.mxu0 0.0
        %3276 = vmatpush1.msra.mxu0 0.0
        %3277 = vmatprep.subr.mxu0 0.0
        %3278 = vmatpush1.msra.mxu0 0.0
        %3279 = vmatprep.subr.mxu0 0.0
        %3280 = vmatpush1.msra.mxu0 0.0
        %3281 = vmatprep.subr.mxu0 0.0
        %3282 = vmatpush1.msra.mxu0 0.0
        %3283 = vmatprep.subr.mxu0 0.0
        %3284 = vmatpush1.msra.mxu0 0.0
        %3285 = vmatprep.subr.mxu0 0.0
        %3286 = vmatpush1.msra.mxu0 0.0
        %3287 = vmatprep.mubr.f32.mxu0 0.0
        %3288 = vmatmul.mubr.f32.gmra.mrb[0].mxu0 %v3199
        %v3289 = vpop.f32.mrb[0].mxu0
        %v3290 = vadd.f32 %v3221, %v3289
        %v3291 = vpop.f32.mrb[0].mxu0
        %3292 = vdwg.mxu0
        %v3293 = vadd.f32 %v3077, %v3290
        %v3294 = vld [vmem:[#allocation34] sm:$0xff]
        %v3295 = vld [vmem:[#allocation34 + $0x8] sm:$0xff]
        %v3296 = vadd.f32 %v1988, %v3294
        %v3297 = vadd.f32 %v1989, %v3295
        %v3298 = vsel %vm1991, %v3296, 0.0
        %3299 = vadd.xlane.f32.xlu0 %v3298
        %v3300 = vpop.xlane.xlu0 %3299
        %v3301 = vsel %vm1991, %v3297, 0.0
        %3302 = vadd.xlane.f32.xlu0 %v3301
        %v3303 = vpop.xlane.xlu0 %3302
        %v3304 = vmul.f32 %v3300, %v1995
        %v3305 = vmul.f32 %v3303, %v1995
        %v3306 = vsub.f32 %v3296, %v3304
        %v3307 = vsub.f32 %v3297, %v3305
        %v3308 = vmul.f32 %v3306, %v3306
        %v3309 = vmul.f32 %v3307, %v3307
        %v3310 = vsel %vm1991, %v3308, 0.0
        %3311 = vadd.xlane.f32.xlu0 %v3310
        %v3312 = vpop.xlane.xlu0 %3311
        %v3313 = vsel %vm1991, %v3309, 0.0
        %3314 = vadd.xlane.f32.xlu0 %v3313
        %v3315 = vpop.xlane.xlu0 %3314
        %v3316 = vmul.f32 %v3312, %v1995
        %v3317 = vmul.f32 %v3315, %v1995
        %v3318 = vadd.f32 %v3316, 1e-05
        %v3319 = vadd.f32 %v3317, 1e-05
        %v3320 = vrsqrt.pop %v3318
        %v3321 = vrsqrt.pop %v3319
        %v3322 = vmul.f32 %v3306, %v3320
        %v3323 = vmul.f32 %v3307, %v3321
        %v3324 = vld [vmem:[#allocation35] sm:$0x1]
        %v3326 = vlaneseq
        %v3327 = vshrl.u32 %v3326, 7
        %v3328 = vsub.s32 0, %v3327
        %v3329 = vrot.slane %v3324, %v3328
        %v3331 = vmul.f32 %v3322, %v3329
        %v3332 = vmul.f32 %v3323, %v3329
        %v3333 = vld [vmem:[#allocation37] sm:$0x1]
        %v3335 = vlaneseq
        %v3336 = vshrl.u32 %v3335, 7
        %v3337 = vsub.s32 0, %v3336
        %v3338 = vrot.slane %v3333, %v3337
        %v3340 = vadd.f32 %v3331, %v3338
        %v3341 = vadd.f32 %v3332, %v3338
        %v3342 = vld [vmem:[%s67] sm:$0xff]
        %v3343 = vld [vmem:[%s67 + $0x8] sm:$0xff]
        %v3344 = vld [vmem:[%s67 + $0x10] sm:$0xff]
        %v3345 = vld [vmem:[%s67 + $0x18] sm:$0xff]
        %v3346 = vld [vmem:[#allocation38] sm:$0x1]
        %v3348 = vlaneseq
        %v3349 = vshrl.u32 %v3348, 7
        %v3350 = vsub.s32 0, %v3349
        %v3351 = vrot.slane %v3346, %v3350
        %v3354 = vsel %vm1991, %v3340, 0
        %v3357 = vsel %vm1991, %v3341, 0
        %3359 = vmatprep.subr.mxu0 0.0
        %3360 = vmatpush1.msra.mxu0 %v3342
        %3361 = vmatprep.subr.mxu0 0.0
        %3362 = vmatpush1.msra.mxu0 %v3343
        %3363 = vmatprep.subr.mxu0 0.0
        %3364 = vmatpush1.msra.mxu0 %v3344
        %3365 = vmatprep.subr.mxu0 0.0
        %3366 = vmatpush1.msra.mxu0 %v3345
        %3367 = vmatprep.subr.mxu0 0.0
        %3368 = vmatpush1.msra.mxu0 0.0
        %3369 = vmatprep.subr.mxu0 0.0
        %3370 = vmatpush1.msra.mxu0 0.0
        %3371 = vmatprep.subr.mxu0 0.0
        %3372 = vmatpush1.msra.mxu0 0.0
        %3373 = vmatprep.subr.mxu0 0.0
        %3374 = vmatpush1.msra.mxu0 0.0
        %3375 = vmatprep.subr.mxu0 0.0
        %3376 = vmatpush1.msra.mxu0 0.0
        %3377 = vmatprep.subr.mxu0 0.0
        %3378 = vmatpush1.msra.mxu0 0.0
        %3379 = vmatprep.subr.mxu0 0.0
        %3380 = vmatpush1.msra.mxu0 0.0
        %3381 = vmatprep.subr.mxu0 0.0
        %3382 = vmatpush1.msra.mxu0 0.0
        %3383 = vmatprep.subr.mxu0 0.0
        %3384 = vmatpush1.msra.mxu0 0.0
        %3385 = vmatprep.subr.mxu0 0.0
        %3386 = vmatpush1.msra.mxu0 0.0
        %3387 = vmatprep.subr.mxu0 0.0
        %3388 = vmatpush1.msra.mxu0 0.0
        %3389 = vmatprep.subr.mxu0 0.0
        %3390 = vmatpush1.msra.mxu0 0.0
        %3391 = vmatprep.subr.mxu0 0.0
        %3392 = vmatpush1.msra.mxu0 0.0
        %3393 = vmatprep.subr.mxu0 0.0
        %3394 = vmatpush1.msra.mxu0 0.0
        %3395 = vmatprep.subr.mxu0 0.0
        %3396 = vmatpush1.msra.mxu0 0.0
        %3397 = vmatprep.subr.mxu0 0.0
        %3398 = vmatpush1.msra.mxu0 0.0
        %3399 = vmatprep.subr.mxu0 0.0
        %3400 = vmatpush1.msra.mxu0 0.0
        %3401 = vmatprep.subr.mxu0 0.0
        %3402 = vmatpush1.msra.mxu0 0.0
        %3403 = vmatprep.subr.mxu0 0.0
        %3404 = vmatpush1.msra.mxu0 0.0
        %3405 = vmatprep.subr.mxu0 0.0
        %3406 = vmatpush1.msra.mxu0 0.0
        %3407 = vmatprep.subr.mxu0 0.0
        %3408 = vmatpush1.msra.mxu0 0.0
        %3409 = vmatprep.subr.mxu0 0.0
        %3410 = vmatpush1.msra.mxu0 0.0
        %3411 = vmatprep.subr.mxu0 0.0
        %3412 = vmatpush1.msra.mxu0 0.0
        %3413 = vmatprep.subr.mxu0 0.0
        %3414 = vmatpush1.msra.mxu0 0.0
        %3415 = vmatprep.subr.mxu0 0.0
        %3416 = vmatpush1.msra.mxu0 0.0
        %3417 = vmatprep.subr.mxu0 0.0
        %3418 = vmatpush1.msra.mxu0 0.0
        %3419 = vmatprep.subr.mxu0 0.0
        %3420 = vmatpush1.msra.mxu0 0.0
        %3421 = vmatprep.subr.mxu0 0.0
        %3422 = vmatpush1.msra.mxu0 0.0
        %3423 = vmatprep.mubr.f32.mxu0 0.0
        %3424 = vmatmul.mubr.f32.gmra.mrb[0].mxu0 %v3354
        %v3425 = vpop.f32.mrb[0].mxu0
        %v3426 = vadd.f32 %v3351, %v3425
        %v3427 = vpop.f32.mrb[0].mxu0
        %3428 = vmatprep.mubr.f32.mxu0 0.0
        %3429 = vmatmul.mubr.f32.gmra.mrb[0].mxu0 %v3357
        %v3430 = vpop.f32.mrb[0].mxu0
        %v3431 = vadd.f32 %v3351, %v3430
        %v3432 = vpop.f32.mrb[0].mxu0
        %3433 = vdwg.mxu0
        %3436 = vrot.lane.b32.xlu0 %v3426, 96
        %v3437 = vpop.permute.xlu0 %3436
        %3438 = vrot.lane.b32.xlu0 %v3431, 96
        %v3439 = vpop.permute.xlu0 %3438
        %v3440 = vsel %vm1991, %v3426, 0
        %v3442 = vsel %vm1991, %v3431, 0
        %v3444 = vsel %vm1991, %v3437, 0
        %v3446 = vsel %vm1991, %v3439, 0
        %3448 = vmatprep.subr.mxu0 0.0
        %3449 = vmatpush1.xpose.msra.mxu0 %v3444
        %3450 = vmatprep.subr.mxu0 0.0
        %3451 = vmatpush1.xpose.msra.mxu0 %v3446
        %3452 = vmatprep.subr.mxu0 0.0
        %3453 = vmatpush1.xpose.msra.mxu0 0.0
        %3454 = vmatprep.subr.mxu0 0.0
        %3455 = vmatpush1.xpose.msra.mxu0 0.0
        %3456 = vmatprep.subr.mxu0 0.0
        %3457 = vmatpush1.xpose.msra.mxu0 0.0
        %3458 = vmatprep.subr.mxu0 0.0
        %3459 = vmatpush1.xpose.msra.mxu0 0.0
        %3460 = vmatprep.subr.mxu0 0.0
        %3461 = vmatpush1.xpose.msra.mxu0 0.0
        %3462 = vmatprep.subr.mxu0 0.0
        %3463 = vmatpush1.xpose.msra.mxu0 0.0
        %3464 = vmatprep.subr.mxu0 0.0
        %3465 = vmatpush1.xpose.msra.mxu0 0.0
        %3466 = vmatprep.subr.mxu0 0.0
        %3467 = vmatpush1.xpose.msra.mxu0 0.0
        %3468 = vmatprep.subr.mxu0 0.0
        %3469 = vmatpush1.xpose.msra.mxu0 0.0
        %3470 = vmatprep.subr.mxu0 0.0
        %3471 = vmatpush1.xpose.msra.mxu0 0.0
        %3472 = vmatprep.subr.mxu0 0.0
        %3473 = vmatpush1.xpose.msra.mxu0 0.0
        %3474 = vmatprep.subr.mxu0 0.0
        %3475 = vmatpush1.xpose.msra.mxu0 0.0
        %3476 = vmatprep.subr.mxu0 0.0
        %3477 = vmatpush1.xpose.msra.mxu0 0.0
        %3478 = vmatprep.subr.mxu0 0.0
        %3479 = vmatpush1.xpose.msra.mxu0 0.0
        %3480 = vmatprep.subr.mxu0 0.0
        %3481 = vmatpush1.xpose.msra.mxu0 0.0
        %3482 = vmatprep.subr.mxu0 0.0
        %3483 = vmatpush1.xpose.msra.mxu0 0.0
        %3484 = vmatprep.subr.mxu0 0.0
        %3485 = vmatpush1.xpose.msra.mxu0 0.0
        %3486 = vmatprep.subr.mxu0 0.0
        %3487 = vmatpush1.xpose.msra.mxu0 0.0
        %3488 = vmatprep.subr.mxu0 0.0
        %3489 = vmatpush1.xpose.msra.mxu0 0.0
        %3490 = vmatprep.subr.mxu0 0.0
        %3491 = vmatpush1.xpose.msra.mxu0 0.0
        %3492 = vmatprep.subr.mxu0 0.0
        %3493 = vmatpush1.xpose.msra.mxu0 0.0
        %3494 = vmatprep.subr.mxu0 0.0
        %3495 = vmatpush1.xpose.msra.mxu0 0.0
        %3496 = vmatprep.subr.mxu0 0.0
        %3497 = vmatpush1.xpose.msra.mxu0 0.0
        %3498 = vmatprep.subr.mxu0 0.0
        %3499 = vmatpush1.xpose.msra.mxu0 0.0
        %3500 = vmatprep.subr.mxu0 0.0
        %3501 = vmatpush1.xpose.msra.mxu0 0.0
        %3502 = vmatprep.subr.mxu0 0.0
        %3503 = vmatpush1.xpose.msra.mxu0 0.0
        %3504 = vmatprep.subr.mxu0 0.0
        %3505 = vmatpush1.xpose.msra.mxu0 0.0
        %3506 = vmatprep.subr.mxu0 0.0
        %3507 = vmatpush1.xpose.msra.mxu0 0.0
        %3508 = vmatprep.subr.mxu0 0.0
        %3509 = vmatpush1.xpose.msra.mxu0 0.0
        %3510 = vmatprep.subr.mxu0 0.0
        %3511 = vmatpush1.xpose.msra.mxu0 0.0
        %3512 = vmatprep.mubr.f32.mxu0 0.0
        %3513 = vmatmul.mubr.f32.gmra.mrb[0].mxu0 %v3440
        %v3514 = vpop.f32.mrb[0].mxu0
        %v3515 = vadd.f32 0.0, %v3514
        %v3516 = vpop.f32.mrb[0].mxu0
        %3517 = vmatprep.mubr.f32.mxu0 0.0
        %3518 = vmatmul.mubr.f32.gmra.mrb[0].mxu0 %v3442
        %v3519 = vpop.f32.mrb[0].mxu0
        %v3520 = vadd.f32 0.0, %v3519
        %v3521 = vpop.f32.mrb[0].mxu0
        %3522 = vdwg.mxu0
        %v3523 = vmul.f32 %v3515, 0.17677669
        %v3524 = vmul.f32 %v3520, 0.17677669
        %v3525 = vsel %vm2322, %v3523, -inf
        %3526 = vmax.xlane.f32.xlu0 %v3525
        %v3527 = vpop.xlane.xlu0 %3526
        %v3528 = vsel %vm2322, %v3524, -inf
        %3529 = vmax.xlane.f32.xlu0 %v3528
        %v3530 = vpop.xlane.xlu0 %3529
        %v3531 = vsub.f32 %v3523, %v3527
        %v3532 = vsub.f32 %v3524, %v3530
        %v3533 = vmul.f32 %v3531, 1.442695
        %v3534 = vpow.pop %v3533
        %v3535 = vmul.f32 %v3532, 1.442695
        %v3536 = vpow.pop %v3535
        %v3537 = vsel %vm2322, %v3534, 0.0
        %3538 = vadd.xlane.f32.xlu0 %v3537
        %v3539 = vpop.xlane.xlu0 %3538
        %v3540 = vsel %vm2322, %v3536, 0.0
        %3541 = vadd.xlane.f32.xlu0 %v3540
        %v3542 = vpop.xlane.xlu0 %3541
        %3543 = vrot.lane.b32.xlu0 %v3426, 64
        %v3544 = vpop.permute.xlu0 %3543
        %3545 = vrot.lane.b32.xlu0 %v3431, 64
        %v3546 = vpop.permute.xlu0 %3545
        %v3550 = vsel %vm2322, %v3534, 0
        %v3553 = vsel %vm2322, %v3536, 0
        %3555 = vmatprep.subr.mxu0 0.0
        %3556 = vmatpush1.msra.mxu0 %v3544
        %3557 = vmatprep.subr.mxu0 0.0
        %3558 = vmatpush1.msra.mxu0 %v3546
        %3559 = vmatprep.subr.mxu0 0.0
        %3560 = vmatpush1.msra.mxu0 0.0
        %3561 = vmatprep.subr.mxu0 0.0
        %3562 = vmatpush1.msra.mxu0 0.0
        %3563 = vmatprep.subr.mxu0 0.0
        %3564 = vmatpush1.msra.mxu0 0.0
        %3565 = vmatprep.subr.mxu0 0.0
        %3566 = vmatpush1.msra.mxu0 0.0
        %3567 = vmatprep.subr.mxu0 0.0
        %3568 = vmatpush1.msra.mxu0 0.0
        %3569 = vmatprep.subr.mxu0 0.0
        %3570 = vmatpush1.msra.mxu0 0.0
        %3571 = vmatprep.subr.mxu0 0.0
        %3572 = vmatpush1.msra.mxu0 0.0
        %3573 = vmatprep.subr.mxu0 0.0
        %3574 = vmatpush1.msra.mxu0 0.0
        %3575 = vmatprep.subr.mxu0 0.0
        %3576 = vmatpush1.msra.mxu0 0.0
        %3577 = vmatprep.subr.mxu0 0.0
        %3578 = vmatpush1.msra.mxu0 0.0
        %3579 = vmatprep.subr.mxu0 0.0
        %3580 = vmatpush1.msra.mxu0 0.0
        %3581 = vmatprep.subr.mxu0 0.0
        %3582 = vmatpush1.msra.mxu0 0.0
        %3583 = vmatprep.subr.mxu0 0.0
        %3584 = vmatpush1.msra.mxu0 0.0
        %3585 = vmatprep.subr.mxu0 0.0
        %3586 = vmatpush1.msra.mxu0 0.0
        %3587 = vmatprep.subr.mxu0 0.0
        %3588 = vmatpush1.msra.mxu0 0.0
        %3589 = vmatprep.subr.mxu0 0.0
        %3590 = vmatpush1.msra.mxu0 0.0
        %3591 = vmatprep.subr.mxu0 0.0
        %3592 = vmatpush1.msra.mxu0 0.0
        %3593 = vmatprep.subr.mxu0 0.0
        %3594 = vmatpush1.msra.mxu0 0.0
        %3595 = vmatprep.subr.mxu0 0.0
        %3596 = vmatpush1.msra.mxu0 0.0
        %3597 = vmatprep.subr.mxu0 0.0
        %3598 = vmatpush1.msra.mxu0 0.0
        %3599 = vmatprep.subr.mxu0 0.0
        %3600 = vmatpush1.msra.mxu0 0.0
        %3601 = vmatprep.subr.mxu0 0.0
        %3602 = vmatpush1.msra.mxu0 0.0
        %3603 = vmatprep.subr.mxu0 0.0
        %3604 = vmatpush1.msra.mxu0 0.0
        %3605 = vmatprep.subr.mxu0 0.0
        %3606 = vmatpush1.msra.mxu0 0.0
        %3607 = vmatprep.subr.mxu0 0.0
        %3608 = vmatpush1.msra.mxu0 0.0
        %3609 = vmatprep.subr.mxu0 0.0
        %3610 = vmatpush1.msra.mxu0 0.0
        %3611 = vmatprep.subr.mxu0 0.0
        %3612 = vmatpush1.msra.mxu0 0.0
        %3613 = vmatprep.subr.mxu0 0.0
        %3614 = vmatpush1.msra.mxu0 0.0
        %3615 = vmatprep.subr.mxu0 0.0
        %3616 = vmatpush1.msra.mxu0 0.0
        %3617 = vmatprep.subr.mxu0 0.0
        %3618 = vmatpush1.msra.mxu0 0.0
        %3619 = vmatprep.mubr.f32.mxu0 0.0
        %3620 = vmatmul.mubr.f32.gmra.mrb[0].mxu0 %v3550
        %v3621 = vpop.f32.mrb[0].mxu0
        %v3622 = vadd.f32 0.0, %v3621
        %v3623 = vpop.f32.mrb[0].mxu0
        %3624 = vmatprep.mubr.f32.mxu0 0.0
        %3625 = vmatmul.mubr.f32.gmra.mrb[0].mxu0 %v3553
        %v3626 = vpop.f32.mrb[0].mxu0
        %v3627 = vadd.f32 0.0, %v3626
        %v3628 = vpop.f32.mrb[0].mxu0
        %3629 = vdwg.mxu0
        %v3630 = vrcp.pop %v3539
        %v3631 = vrcp.pop %v3542
        %v3632 = vmul.f32 %v3622, %v3630
        %v3633 = vmul.f32 %v3627, %v3631
        %v3634 = vld [vmem:[%s71] sm:$0xff]
        %v3635 = vld [vmem:[%s71 + $0x8] sm:$0xff]
        %v3636 = vld [vmem:[%s71 + $0x10] sm:$0xff]
        %v3637 = vld [vmem:[%s71 + $0x18] sm:$0xff]
        %v3638 = vld [vmem:[%s73] sm:$0x1]
        %v3640 = vlaneseq
        %v3641 = vshrl.u32 %v3640, 7
        %v3642 = vsub.s32 0, %v3641
        %v3643 = vrot.slane %v3638, %v3642
        %v3646 = vsel %vm1991, %v3632, 0
        %v3649 = vsel %vm1991, %v3633, 0
        %3651 = vmatprep.subr.mxu0 0.0
        %3652 = vmatpush1.msra.mxu0 %v3634
        %3653 = vmatprep.subr.mxu0 0.0
        %3654 = vmatpush1.msra.mxu0 %v3635
        %3655 = vmatprep.subr.mxu0 0.0
        %3656 = vmatpush1.msra.mxu0 %v3636
        %3657 = vmatprep.subr.mxu0 0.0
        %3658 = vmatpush1.msra.mxu0 %v3637
        %3659 = vmatprep.subr.mxu0 0.0
        %3660 = vmatpush1.msra.mxu0 0.0
        %3661 = vmatprep.subr.mxu0 0.0
        %3662 = vmatpush1.msra.mxu0 0.0
        %3663 = vmatprep.subr.mxu0 0.0
        %3664 = vmatpush1.msra.mxu0 0.0
        %3665 = vmatprep.subr.mxu0 0.0
        %3666 = vmatpush1.msra.mxu0 0.0
        %3667 = vmatprep.subr.mxu0 0.0
        %3668 = vmatpush1.msra.mxu0 0.0
        %3669 = vmatprep.subr.mxu0 0.0
        %3670 = vmatpush1.msra.mxu0 0.0
        %3671 = vmatprep.subr.mxu0 0.0
        %3672 = vmatpush1.msra.mxu0 0.0
        %3673 = vmatprep.subr.mxu0 0.0
        %3674 = vmatpush1.msra.mxu0 0.0
        %3675 = vmatprep.subr.mxu0 0.0
        %3676 = vmatpush1.msra.mxu0 0.0
        %3677 = vmatprep.subr.mxu0 0.0
        %3678 = vmatpush1.msra.mxu0 0.0
        %3679 = vmatprep.subr.mxu0 0.0
        %3680 = vmatpush1.msra.mxu0 0.0
        %3681 = vmatprep.subr.mxu0 0.0
        %3682 = vmatpush1.msra.mxu0 0.0
        %3683 = vmatprep.subr.mxu0 0.0
        %3684 = vmatpush1.msra.mxu0 0.0
        %3685 = vmatprep.subr.mxu0 0.0
        %3686 = vmatpush1.msra.mxu0 0.0
        %3687 = vmatprep.subr.mxu0 0.0
        %3688 = vmatpush1.msra.mxu0 0.0
        %3689 = vmatprep.subr.mxu0 0.0
        %3690 = vmatpush1.msra.mxu0 0.0
        %3691 = vmatprep.subr.mxu0 0.0
        %3692 = vmatpush1.msra.mxu0 0.0
        %3693 = vmatprep.subr.mxu0 0.0
        %3694 = vmatpush1.msra.mxu0 0.0
        %3695 = vmatprep.subr.mxu0 0.0
        %3696 = vmatpush1.msra.mxu0 0.0
        %3697 = vmatprep.subr.mxu0 0.0
        %3698 = vmatpush1.msra.mxu0 0.0
        %3699 = vmatprep.subr.mxu0 0.0
        %3700 = vmatpush1.msra.mxu0 0.0
        %3701 = vmatprep.subr.mxu0 0.0
        %3702 = vmatpush1.msra.mxu0 0.0
        %3703 = vmatprep.subr.mxu0 0.0
        %3704 = vmatpush1.msra.mxu0 0.0
        %3705 = vmatprep.subr.mxu0 0.0
        %3706 = vmatpush1.msra.mxu0 0.0
        %3707 = vmatprep.subr.mxu0 0.0
        %3708 = vmatpush1.msra.mxu0 0.0
        %3709 = vmatprep.subr.mxu0 0.0
        %3710 = vmatpush1.msra.mxu0 0.0
        %3711 = vmatprep.subr.mxu0 0.0
        %3712 = vmatpush1.msra.mxu0 0.0
        %3713 = vmatprep.subr.mxu0 0.0
        %3714 = vmatpush1.msra.mxu0 0.0
        %3715 = vmatprep.mubr.f32.mxu0 0.0
        %3716 = vmatmul.mubr.f32.gmra.mrb[0].mxu0 %v3646
        %v3717 = vpop.f32.mrb[0].mxu0
        %v3718 = vadd.f32 %v3643, %v3717
        %v3719 = vpop.f32.mrb[0].mxu0
        %3720 = vmatprep.mubr.f32.mxu0 0.0
        %3721 = vmatmul.mubr.f32.gmra.mrb[0].mxu0 %v3649
        %v3722 = vpop.f32.mrb[0].mxu0
        %v3723 = vadd.f32 %v3643, %v3722
        %v3724 = vpop.f32.mrb[0].mxu0
        %3725 = vdwg.mxu0
        %v3726 = vadd.f32 %v3296, %v3718
        %v3727 = vadd.f32 %v3297, %v3723
        %v3728 = vsel %vm1991, %v3726, 0.0
        %3729 = vadd.xlane.f32.xlu0 %v3728
        %v3730 = vpop.xlane.xlu0 %3729
        %v3731 = vsel %vm1991, %v3727, 0.0
        %3732 = vadd.xlane.f32.xlu0 %v3731
        %v3733 = vpop.xlane.xlu0 %3732
        %v3734 = vmul.f32 %v3730, %v1995
        %v3735 = vmul.f32 %v3733, %v1995
        %v3736 = vsub.f32 %v3726, %v3734
        %v3737 = vsub.f32 %v3727, %v3735
        %v3738 = vmul.f32 %v3736, %v3736
        %v3739 = vmul.f32 %v3737, %v3737
        %v3740 = vsel %vm1991, %v3738, 0.0
        %3741 = vadd.xlane.f32.xlu0 %v3740
        %v3742 = vpop.xlane.xlu0 %3741
        %v3743 = vsel %vm1991, %v3739, 0.0
        %3744 = vadd.xlane.f32.xlu0 %v3743
        %v3745 = vpop.xlane.xlu0 %3744
        %v3746 = vmul.f32 %v3742, %v1995
        %v3747 = vmul.f32 %v3745, %v1995
        %v3748 = vadd.f32 %v3746, 1e-05
        %v3749 = vadd.f32 %v3747, 1e-05
        %v3750 = vrsqrt.pop %v3748
        %v3751 = vrsqrt.pop %v3749
        %v3752 = vmul.f32 %v3736, %v3750
        %v3753 = vmul.f32 %v3737, %v3751
        %v3754 = vld [vmem:[%s75] sm:$0x1]
        %v3756 = vlaneseq
        %v3757 = vshrl.u32 %v3756, 7
        %v3758 = vsub.s32 0, %v3757
        %v3759 = vrot.slane %v3754, %v3758
        %v3761 = vmul.f32 %v3752, %v3759
        %v3762 = vmul.f32 %v3753, %v3759
        %v3763 = vld [vmem:[%s77] sm:$0x1]
        %v3765 = vlaneseq
        %v3766 = vshrl.u32 %v3765, 7
        %v3767 = vsub.s32 0, %v3766
        %v3768 = vrot.slane %v3763, %v3767
        %v3770 = vadd.f32 %v3761, %v3768
        %v3771 = vadd.f32 %v3762, %v3768
        %v3772 = vld [vmem:[%s79] sm:$0xff]
        %v3773 = vld [vmem:[%s79 + $0x8] sm:$0xff]
        %v3774 = vld [vmem:[%s79 + $0x10] sm:$0xff]
        %v3775 = vld [vmem:[%s79 + $0x18] sm:$0xff]
        %v3776 = vld [vmem:[%s81] sm:$0x1]
        %v3778 = vlaneseq
        %v3779 = vshrl.u32 %v3778, 7
        %v3780 = vsub.s32 0, %v3779
        %v3781 = vrot.slane %v3776, %v3780
        %v3784 = vsel %vm1991, %v3770, 0
        %v3787 = vsel %vm1991, %v3771, 0
        %3789 = vmatprep.subr.mxu0 0.0
        %3790 = vmatpush1.msra.mxu0 %v3772
        %3791 = vmatprep.subr.mxu0 0.0
        %3792 = vmatpush1.msra.mxu0 %v3773
        %3793 = vmatprep.subr.mxu0 0.0
        %3794 = vmatpush1.msra.mxu0 %v3774
        %3795 = vmatprep.subr.mxu0 0.0
        %3796 = vmatpush1.msra.mxu0 %v3775
        %3797 = vmatprep.subr.mxu0 0.0
        %3798 = vmatpush1.msra.mxu0 0.0
        %3799 = vmatprep.subr.mxu0 0.0
        %3800 = vmatpush1.msra.mxu0 0.0
        %3801 = vmatprep.subr.mxu0 0.0
        %3802 = vmatpush1.msra.mxu0 0.0
        %3803 = vmatprep.subr.mxu0 0.0
        %3804 = vmatpush1.msra.mxu0 0.0
        %3805 = vmatprep.subr.mxu0 0.0
        %3806 = vmatpush1.msra.mxu0 0.0
        %3807 = vmatprep.subr.mxu0 0.0
        %3808 = vmatpush1.msra.mxu0 0.0
        %3809 = vmatprep.subr.mxu0 0.0
        %3810 = vmatpush1.msra.mxu0 0.0
        %3811 = vmatprep.subr.mxu0 0.0
        %3812 = vmatpush1.msra.mxu0 0.0
        %3813 = vmatprep.subr.mxu0 0.0
        %3814 = vmatpush1.msra.mxu0 0.0
        %3815 = vmatprep.subr.mxu0 0.0
        %3816 = vmatpush1.msra.mxu0 0.0
        %3817 = vmatprep.subr.mxu0 0.0
        %3818 = vmatpush1.msra.mxu0 0.0
        %3819 = vmatprep.subr.mxu0 0.0
        %3820 = vmatpush1.msra.mxu0 0.0
        %3821 = vmatprep.subr.mxu0 0.0
        %3822 = vmatpush1.msra.mxu0 0.0
        %3823 = vmatprep.subr.mxu0 0.0
        %3824 = vmatpush1.msra.mxu0 0.0
        %3825 = vmatprep.subr.mxu0 0.0
        %3826 = vmatpush1.msra.mxu0 0.0
        %3827 = vmatprep.subr.mxu0 0.0
        %3828 = vmatpush1.msra.mxu0 0.0
        %3829 = vmatprep.subr.mxu0 0.0
        %3830 = vmatpush1.msra.mxu0 0.0
        %3831 = vmatprep.subr.mxu0 0.0
        %3832 = vmatpush1.msra.mxu0 0.0
        %3833 = vmatprep.subr.mxu0 0.0
        %3834 = vmatpush1.msra.mxu0 0.0
        %3835 = vmatprep.subr.mxu0 0.0
        %3836 = vmatpush1.msra.mxu0 0.0
        %3837 = vmatprep.subr.mxu0 0.0
        %3838 = vmatpush1.msra.mxu0 0.0
        %3839 = vmatprep.subr.mxu0 0.0
        %3840 = vmatpush1.msra.mxu0 0.0
        %3841 = vmatprep.subr.mxu0 0.0
        %3842 = vmatpush1.msra.mxu0 0.0
        %3843 = vmatprep.subr.mxu0 0.0
        %3844 = vmatpush1.msra.mxu0 0.0
        %3845 = vmatprep.subr.mxu0 0.0
        %3846 = vmatpush1.msra.mxu0 0.0
        %3847 = vmatprep.subr.mxu0 0.0
        %3848 = vmatpush1.msra.mxu0 0.0
        %3849 = vmatprep.subr.mxu0 0.0
        %3850 = vmatpush1.msra.mxu0 0.0
        %3851 = vmatprep.subr.mxu0 0.0
        %3852 = vmatpush1.msra.mxu0 0.0
        %3853 = vmatprep.mubr.f32.mxu0 0.0
        %3854 = vmatmul.mubr.f32.gmra.mrb[0].mxu0 %v3784
        %v3855 = vpop.f32.mrb[0].mxu0
        %v3856 = vadd.f32 %v3781, %v3855
        %v3857 = vpop.f32.mrb[0].mxu0
        %3858 = vmatprep.mubr.f32.mxu0 0.0
        %3859 = vmatmul.mubr.f32.gmra.mrb[0].mxu0 %v3787
        %v3860 = vpop.f32.mrb[0].mxu0
        %v3861 = vadd.f32 %v3781, %v3860
        %v3862 = vpop.f32.mrb[0].mxu0
        %3863 = vdwg.mxu0
        %v3864 = vmul.f32 %v3856, %v3856
        %v3865 = vmul.f32 %v3861, %v3861
        %v3866 = vmul.f32 %v3856, %v3864
        %v3867 = vmul.f32 %v3861, %v3865
        %v3868 = vmul.f32 %v3866, 0.044715
        %v3869 = vmul.f32 %v3867, 0.044715
        %v3870 = vadd.f32 %v3856, %v3868
        %v3871 = vadd.f32 %v3861, %v3869
        %v3872 = vmul.f32 %v3870, 0.7978846
        %v3873 = vmul.f32 %v3871, 0.7978846
        %v3874 = vtanh.pop %v3872
        %v3875 = vtanh.pop %v3873
        %v3876 = vadd.f32 %v3874, 1.0
        %v3877 = vadd.f32 %v3875, 1.0
        %v3878 = vmul.f32 %v3876, 0.5
        %v3879 = vmul.f32 %v3877, 0.5
        %v3880 = vmul.f32 %v3856, %v3878
        %v3881 = vmul.f32 %v3861, %v3879
        %v3882 = vld [vmem:[%s83] sm:$0xff]
        %v3883 = vld [vmem:[%s83 + $0x8] sm:$0xff]
        %v3884 = vld [vmem:[%s83 + $0x10] sm:$0xff]
        %v3885 = vld [vmem:[%s83 + $0x18] sm:$0xff]
        %v3886 = vld [vmem:[%s83 + $0x20] sm:$0xff]
        %v3887 = vld [vmem:[%s83 + $0x28] sm:$0xff]
        %v3888 = vld [vmem:[%s83 + $0x30] sm:$0xff]
        %v3889 = vld [vmem:[%s83 + $0x38] sm:$0xff]
        %v3890 = vld [vmem:[%s83 + $0x40] sm:$0xff]
        %v3891 = vld [vmem:[%s83 + $0x48] sm:$0xff]
        %v3892 = vld [vmem:[%s83 + $0x50] sm:$0xff]
        %v3893 = vld [vmem:[%s83 + $0x58] sm:$0xff]
        %v3894 = vld [vmem:[%s83 + $0x60] sm:$0xff]
        %v3895 = vld [vmem:[%s83 + $0x68] sm:$0xff]
        %v3896 = vld [vmem:[%s83 + $0x70] sm:$0xff]
        %v3897 = vld [vmem:[%s83 + $0x78] sm:$0xff]
        %v3898 = vld [vmem:[%s85] sm:$0x1]
        %v3900 = vlaneseq
        %v3901 = vshrl.u32 %v3900, 7
        %v3902 = vsub.s32 0, %v3901
        %v3903 = vrot.slane %v3898, %v3902
        %3905 = vmatprep.subr.mxu0 0.0
        %3906 = vmatpush1.msra.mxu0 %v3882
        %3907 = vmatprep.subr.mxu0 0.0
        %3908 = vmatpush1.msra.mxu0 %v3883
        %3909 = vmatprep.subr.mxu0 0.0
        %3910 = vmatpush1.msra.mxu0 %v3884
        %3911 = vmatprep.subr.mxu0 0.0
        %3912 = vmatpush1.msra.mxu0 %v3885
        %3913 = vmatprep.subr.mxu0 0.0
        %3914 = vmatpush1.msra.mxu0 %v3886
        %3915 = vmatprep.subr.mxu0 0.0
        %3916 = vmatpush1.msra.mxu0 %v3887
        %3917 = vmatprep.subr.mxu0 0.0
        %3918 = vmatpush1.msra.mxu0 %v3888
        %3919 = vmatprep.subr.mxu0 0.0
        %3920 = vmatpush1.msra.mxu0 %v3889
        %3921 = vmatprep.subr.mxu0 0.0
        %3922 = vmatpush1.msra.mxu0 %v3890
        %3923 = vmatprep.subr.mxu0 0.0
        %3924 = vmatpush1.msra.mxu0 %v3891
        %3925 = vmatprep.subr.mxu0 0.0
        %3926 = vmatpush1.msra.mxu0 %v3892
        %3927 = vmatprep.subr.mxu0 0.0
        %3928 = vmatpush1.msra.mxu0 %v3893
        %3929 = vmatprep.subr.mxu0 0.0
        %3930 = vmatpush1.msra.mxu0 %v3894
        %3931 = vmatprep.subr.mxu0 0.0
        %3932 = vmatpush1.msra.mxu0 %v3895
        %3933 = vmatprep.subr.mxu0 0.0
        %3934 = vmatpush1.msra.mxu0 %v3896
        %3935 = vmatprep.subr.mxu0 0.0
        %3936 = vmatpush1.msra.mxu0 %v3897
        %3937 = vmatprep.subr.mxu0 0.0
        %3938 = vmatpush1.msra.mxu0 0.0
        %3939 = vmatprep.subr.mxu0 0.0
        %3940 = vmatpush1.msra.mxu0 0.0
        %3941 = vmatprep.subr.mxu0 0.0
        %3942 = vmatpush1.msra.mxu0 0.0
        %3943 = vmatprep.subr.mxu0 0.0
        %3944 = vmatpush1.msra.mxu0 0.0
        %3945 = vmatprep.subr.mxu0 0.0
        %3946 = vmatpush1.msra.mxu0 0.0
        %3947 = vmatprep.subr.mxu0 0.0
        %3948 = vmatpush1.msra.mxu0 0.0
        %3949 = vmatprep.subr.mxu0 0.0
        %3950 = vmatpush1.msra.mxu0 0.0
        %3951 = vmatprep.subr.mxu0 0.0
        %3952 = vmatpush1.msra.mxu0 0.0
        %3953 = vmatprep.subr.mxu0 0.0
        %3954 = vmatpush1.msra.mxu0 0.0
        %3955 = vmatprep.subr.mxu0 0.0
        %3956 = vmatpush1.msra.mxu0 0.0
        %3957 = vmatprep.subr.mxu0 0.0
        %3958 = vmatpush1.msra.mxu0 0.0
        %3959 = vmatprep.subr.mxu0 0.0
        %3960 = vmatpush1.msra.mxu0 0.0
        %3961 = vmatprep.subr.mxu0 0.0
        %3962 = vmatpush1.msra.mxu0 0.0
        %3963 = vmatprep.subr.mxu0 0.0
        %3964 = vmatpush1.msra.mxu0 0.0
        %3965 = vmatprep.subr.mxu0 0.0
        %3966 = vmatpush1.msra.mxu0 0.0
        %3967 = vmatprep.subr.mxu0 0.0
        %3968 = vmatpush1.msra.mxu0 0.0
        %3969 = vmatprep.mubr.f32.mxu0 0.0
        %3970 = vmatmul.mubr.f32.gmra.mrb[0].mxu0 %v3880
        %v3971 = vpop.f32.mrb[0].mxu0
        %v3972 = vadd.f32 %v3903, %v3971
        %v3973 = vpop.f32.mrb[0].mxu0
        %3974 = vmatprep.mubr.f32.mxu0 0.0
        %3975 = vmatmul.mubr.f32.gmra.mrb[0].mxu0 %v3881
        %v3976 = vpop.f32.mrb[0].mxu0
        %v3977 = vadd.f32 %v3903, %v3976
        %v3978 = vpop.f32.mrb[0].mxu0
        %3979 = vdwg.mxu0
        %v3980 = vadd.f32 %v3726, %v3972
        %v3981 = vadd.f32 %v3727, %v3977
        %v3982 = vld [vmem:[%s87] sm:$0xff]
        %v3983 = vld [vmem:[%s87 + $0x8] sm:$0xff]
        %v3984 = vld [vmem:[%s87 + $0x10] sm:$0xff]
        %v3985 = vld [vmem:[%s87 + $0x18] sm:$0xff]
        %v3986 = vld [vmem:[%s89] sm:$0x1]
        %v3988 = vlaneseq
        %v3989 = vshrl.u32 %v3988, 7
        %v3990 = vsub.s32 0, %v3989
        %v3991 = vrot.slane %v3986, %v3990
        %v3994 = vsel %vm1991, %v3980, 0
        %v3997 = vsel %vm1991, %v3981, 0
        %3999 = vmatprep.subr.mxu0 0.0
        %4000 = vmatpush1.msra.mxu0 %v3982
        %4001 = vmatprep.subr.mxu0 0.0
        %4002 = vmatpush1.msra.mxu0 %v3983
        %4003 = vmatprep.subr.mxu0 0.0
        %4004 = vmatpush1.msra.mxu0 %v3984
        %4005 = vmatprep.subr.mxu0 0.0
        %4006 = vmatpush1.msra.mxu0 %v3985
        %4007 = vmatprep.subr.mxu0 0.0
        %4008 = vmatpush1.msra.mxu0 0.0
        %4009 = vmatprep.subr.mxu0 0.0
        %4010 = vmatpush1.msra.mxu0 0.0
        %4011 = vmatprep.subr.mxu0 0.0
        %4012 = vmatpush1.msra.mxu0 0.0
        %4013 = vmatprep.subr.mxu0 0.0
        %4014 = vmatpush1.msra.mxu0 0.0
        %4015 = vmatprep.subr.mxu0 0.0
        %4016 = vmatpush1.msra.mxu0 0.0
        %4017 = vmatprep.subr.mxu0 0.0
        %4018 = vmatpush1.msra.mxu0 0.0
        %4019 = vmatprep.subr.mxu0 0.0
        %4020 = vmatpush1.msra.mxu0 0.0
        %4021 = vmatprep.subr.mxu0 0.0
        %4022 = vmatpush1.msra.mxu0 0.0
        %4023 = vmatprep.subr.mxu0 0.0
        %4024 = vmatpush1.msra.mxu0 0.0
        %4025 = vmatprep.subr.mxu0 0.0
        %4026 = vmatpush1.msra.mxu0 0.0
        %4027 = vmatprep.subr.mxu0 0.0
        %4028 = vmatpush1.msra.mxu0 0.0
        %4029 = vmatprep.subr.mxu0 0.0
        %4030 = vmatpush1.msra.mxu0 0.0
        %4031 = vmatprep.subr.mxu0 0.0
        %4032 = vmatpush1.msra.mxu0 0.0
        %4033 = vmatprep.subr.mxu0 0.0
        %4034 = vmatpush1.msra.mxu0 0.0
        %4035 = vmatprep.subr.mxu0 0.0
        %4036 = vmatpush1.msra.mxu0 0.0
        %4037 = vmatprep.subr.mxu0 0.0
        %4038 = vmatpush1.msra.mxu0 0.0
        %4039 = vmatprep.subr.mxu0 0.0
        %4040 = vmatpush1.msra.mxu0 0.0
        %4041 = vmatprep.subr.mxu0 0.0
        %4042 = vmatpush1.msra.mxu0 0.0
        %4043 = vmatprep.subr.mxu0 0.0
        %4044 = vmatpush1.msra.mxu0 0.0
        %4045 = vmatprep.subr.mxu0 0.0
        %4046 = vmatpush1.msra.mxu0 0.0
        %4047 = vmatprep.subr.mxu0 0.0
        %4048 = vmatpush1.msra.mxu0 0.0
        %4049 = vmatprep.subr.mxu0 0.0
        %4050 = vmatpush1.msra.mxu0 0.0
        %4051 = vmatprep.subr.mxu0 0.0
        %4052 = vmatpush1.msra.mxu0 0.0
        %4053 = vmatprep.subr.mxu0 0.0
        %4054 = vmatpush1.msra.mxu0 0.0
        %4055 = vmatprep.subr.mxu0 0.0
        %4056 = vmatpush1.msra.mxu0 0.0
        %4057 = vmatprep.subr.mxu0 0.0
        %4058 = vmatpush1.msra.mxu0 0.0
        %4059 = vmatprep.subr.mxu0 0.0
        %4060 = vmatpush1.msra.mxu0 0.0
        %4061 = vmatprep.subr.mxu0 0.0
        %4062 = vmatpush1.msra.mxu0 0.0
        %4063 = vmatprep.mubr.f32.mxu0 0.0
        %4064 = vmatmul.mubr.f32.gmra.mrb[0].mxu0 %v3994
        %v4065 = vpop.f32.mrb[0].mxu0
        %v4066 = vadd.f32 %v3991, %v4065
        %v4067 = vpop.f32.mrb[0].mxu0
        %4068 = vmatprep.mubr.f32.mxu0 0.0
        %4069 = vmatmul.mubr.f32.gmra.mrb[0].mxu0 %v3997
        %v4070 = vpop.f32.mrb[0].mxu0
        %v4071 = vadd.f32 %v3991, %v4070
        %v4072 = vpop.f32.mrb[0].mxu0
        %4073 = vdwg.mxu0
        %v4074 = vsel %vm1991, %v4066, 0.0
        %4075 = vadd.xlane.f32.xlu0 %v4074
        %v4076 = vpop.xlane.xlu0 %4075
        %v4077 = vsel %vm1991, %v4071, 0.0
        %4078 = vadd.xlane.f32.xlu0 %v4077
        %v4079 = vpop.xlane.xlu0 %4078
        %v4080 = vmul.f32 %v4076, %v1995
        %v4081 = vmul.f32 %v4079, %v1995
        %v4082 = vsub.f32 %v4066, %v4080
        %v4083 = vsub.f32 %v4071, %v4081
        %v4084 = vmul.f32 %v4082, %v4082
        %v4085 = vmul.f32 %v4083, %v4083
        %v4086 = vsel %vm1991, %v4084, 0.0
        %4087 = vadd.xlane.f32.xlu0 %v4086
        %v4088 = vpop.xlane.xlu0 %4087
        %v4089 = vsel %vm1991, %v4085, 0.0
        %4090 = vadd.xlane.f32.xlu0 %v4089
        %v4091 = vpop.xlane.xlu0 %4090
        %v4092 = vmul.f32 %v4088, %v1995
        %v4093 = vmul.f32 %v4091, %v1995
        %v4094 = vadd.f32 %v4092, 1e-05
        %v4095 = vadd.f32 %v4093, 1e-05
        %v4096 = vrsqrt.pop %v4094
        %v4097 = vrsqrt.pop %v4095
        %v4098 = vmul.f32 %v4082, %v4096
        %v4099 = vmul.f32 %v4083, %v4097
        %v4100 = vld [vmem:[%s91] sm:$0x1]
        %v4102 = vlaneseq
        %v4103 = vshrl.u32 %v4102, 7
        %v4104 = vsub.s32 0, %v4103
        %v4105 = vrot.slane %v4100, %v4104
        %v4107 = vmul.f32 %v4098, %v4105
        %v4108 = vmul.f32 %v4099, %v4105
        %v4109 = vld [vmem:[%s93] sm:$0x1]
        %v4111 = vlaneseq
        %v4112 = vshrl.u32 %v4111, 7
        %v4113 = vsub.s32 0, %v4112
        %v4114 = vrot.slane %v4109, %v4113
        %v4116 = vadd.f32 %v4107, %v4114
        %v4117 = vadd.f32 %v4108, %v4114
        %v4118 = vsel %vm1991, %v3293, 0.0
        %4119 = vadd.xlane.f32.xlu0 %v4118
        %v4120 = vpop.xlane.xlu0 %4119
        %v4121 = vmul.f32 %v4120, %v1995
        %v4122 = vsub.f32 %v3293, %v4121
        %v4123 = vmul.f32 %v4122, %v4122
        %v4124 = vsel %vm1991, %v4123, 0.0
        %4125 = vadd.xlane.f32.xlu0 %v4124
        %v4126 = vpop.xlane.xlu0 %4125
        %v4127 = vmul.f32 %v4126, %v1995
        %v4128 = vadd.f32 %v4127, 1e-05
        %v4129 = vrsqrt.pop %v4128
        %v4130 = vmul.f32 %v4122, %v4129
        %v4131 = vld [vmem:[%s95] sm:$0x1]
        %v4133 = vlaneseq
        %v4134 = vshrl.u32 %v4133, 7
        %v4135 = vsub.s32 0, %v4134
        %v4136 = vrot.slane %v4131, %v4135
        %v4138 = vmul.f32 %v4130, %v4136
        %v4139 = vld [vmem:[%s97] sm:$0x1]
        %v4141 = vlaneseq
        %v4142 = vshrl.u32 %v4141, 7
        %v4143 = vsub.s32 0, %v4142
        %v4144 = vrot.slane %v4139, %v4143
        %v4146 = vadd.f32 %v4138, %v4144
        %v4147 = vld [vmem:[%s99] sm:$0xff]
        %v4148 = vld [vmem:[%s99 + $0x8] sm:$0xff]
        %v4149 = vld [vmem:[%s99 + $0x10] sm:$0xff]
        %v4150 = vld [vmem:[%s99 + $0x18] sm:$0xff]
        %v4151 = vld [vmem:[%s101] sm:$0x1]
        %v4153 = vlaneseq
        %v4154 = vshrl.u32 %v4153, 7
        %v4155 = vsub.s32 0, %v4154
        %v4156 = vrot.slane %v4151, %v4155
        %v4159 = vsel %vm1991, %v4116, 0
        %v4162 = vsel %vm1991, %v4117, 0
        %4164 = vmatprep.subr.mxu0 0.0
        %4165 = vmatpush1.msra.mxu0 %v4147
        %4166 = vmatprep.subr.mxu0 0.0
        %4167 = vmatpush1.msra.mxu0 %v4148
        %4168 = vmatprep.subr.mxu0 0.0
        %4169 = vmatpush1.msra.mxu0 %v4149
        %4170 = vmatprep.subr.mxu0 0.0
        %4171 = vmatpush1.msra.mxu0 %v4150
        %4172 = vmatprep.subr.mxu0 0.0
        %4173 = vmatpush1.msra.mxu0 0.0
        %4174 = vmatprep.subr.mxu0 0.0
        %4175 = vmatpush1.msra.mxu0 0.0
        %4176 = vmatprep.subr.mxu0 0.0
        %4177 = vmatpush1.msra.mxu0 0.0
        %4178 = vmatprep.subr.mxu0 0.0
        %4179 = vmatpush1.msra.mxu0 0.0
        %4180 = vmatprep.subr.mxu0 0.0
        %4181 = vmatpush1.msra.mxu0 0.0
        %4182 = vmatprep.subr.mxu0 0.0
        %4183 = vmatpush1.msra.mxu0 0.0
        %4184 = vmatprep.subr.mxu0 0.0
        %4185 = vmatpush1.msra.mxu0 0.0
        %4186 = vmatprep.subr.mxu0 0.0
        %4187 = vmatpush1.msra.mxu0 0.0
        %4188 = vmatprep.subr.mxu0 0.0
        %4189 = vmatpush1.msra.mxu0 0.0
        %4190 = vmatprep.subr.mxu0 0.0
        %4191 = vmatpush1.msra.mxu0 0.0
        %4192 = vmatprep.subr.mxu0 0.0
        %4193 = vmatpush1.msra.mxu0 0.0
        %4194 = vmatprep.subr.mxu0 0.0
        %4195 = vmatpush1.msra.mxu0 0.0
        %4196 = vmatprep.subr.mxu0 0.0
        %4197 = vmatpush1.msra.mxu0 0.0
        %4198 = vmatprep.subr.mxu0 0.0
        %4199 = vmatpush1.msra.mxu0 0.0
        %4200 = vmatprep.subr.mxu0 0.0
        %4201 = vmatpush1.msra.mxu0 0.0
        %4202 = vmatprep.subr.mxu0 0.0
        %4203 = vmatpush1.msra.mxu0 0.0
        %4204 = vmatprep.subr.mxu0 0.0
        %4205 = vmatpush1.msra.mxu0 0.0
        %4206 = vmatprep.subr.mxu0 0.0
        %4207 = vmatpush1.msra.mxu0 0.0
        %4208 = vmatprep.subr.mxu0 0.0
        %4209 = vmatpush1.msra.mxu0 0.0
        %4210 = vmatprep.subr.mxu0 0.0
        %4211 = vmatpush1.msra.mxu0 0.0
        %4212 = vmatprep.subr.mxu0 0.0
        %4213 = vmatpush1.msra.mxu0 0.0
        %4214 = vmatprep.subr.mxu0 0.0
        %4215 = vmatpush1.msra.mxu0 0.0
        %4216 = vmatprep.subr.mxu0 0.0
        %4217 = vmatpush1.msra.mxu0 0.0
        %4218 = vmatprep.subr.mxu0 0.0
        %4219 = vmatpush1.msra.mxu0 0.0
        %4220 = vmatprep.subr.mxu0 0.0
        %4221 = vmatpush1.msra.mxu0 0.0
        %4222 = vmatprep.subr.mxu0 0.0
        %4223 = vmatpush1.msra.mxu0 0.0
        %4224 = vmatprep.subr.mxu0 0.0
        %4225 = vmatpush1.msra.mxu0 0.0
        %4226 = vmatprep.subr.mxu0 0.0
        %4227 = vmatpush1.msra.mxu0 0.0
        %4228 = vmatprep.mubr.f32.mxu0 0.0
        %4229 = vmatmul.mubr.f32.gmra.mrb[0].mxu0 %v4159
        %v4230 = vpop.f32.mrb[0].mxu0
        %v4231 = vadd.f32 %v4156, %v4230
        %v4232 = vpop.f32.mrb[0].mxu0
        %4233 = vmatprep.mubr.f32.mxu0 0.0
        %4234 = vmatmul.mubr.f32.gmra.mrb[0].mxu0 %v4162
        %v4235 = vpop.f32.mrb[0].mxu0
        %v4236 = vadd.f32 %v4156, %v4235
        %v4237 = vpop.f32.mrb[0].mxu0
        %4238 = vdwg.mxu0
        %v4239 = vld [vmem:[%s103] sm:$0xff]
        %v4240 = vld [vmem:[%s103 + $0x8] sm:$0xff]
        %v4241 = vld [vmem:[%s103 + $0x10] sm:$0xff]
        %v4242 = vld [vmem:[%s103 + $0x18] sm:$0xff]
        %v4243 = vld [vmem:[%s105] sm:$0x1]
        %v4245 = vlaneseq
        %v4246 = vshrl.u32 %v4245, 7
        %v4247 = vsub.s32 0, %v4246
        %v4248 = vrot.slane %v4243, %v4247
        %v4251 = vsel %vm1991, %v4146, 0
        %4253 = vmatprep.subr.mxu0 0.0
        %4254 = vmatpush1.msra.mxu0 %v4239
        %4255 = vmatprep.subr.mxu0 0.0
        %4256 = vmatpush1.msra.mxu0 %v4240
        %4257 = vmatprep.subr.mxu0 0.0
        %4258 = vmatpush1.msra.mxu0 %v4241
        %4259 = vmatprep.subr.mxu0 0.0
        %4260 = vmatpush1.msra.mxu0 %v4242
        %4261 = vmatprep.subr.mxu0 0.0
        %4262 = vmatpush1.msra.mxu0 0.0
        %4263 = vmatprep.subr.mxu0 0.0
        %4264 = vmatpush1.msra.mxu0 0.0
        %4265 = vmatprep.subr.mxu0 0.0
        %4266 = vmatpush1.msra.mxu0 0.0
        %4267 = vmatprep.subr.mxu0 0.0
        %4268 = vmatpush1.msra.mxu0 0.0
        %4269 = vmatprep.subr.mxu0 0.0
        %4270 = vmatpush1.msra.mxu0 0.0
        %4271 = vmatprep.subr.mxu0 0.0
        %4272 = vmatpush1.msra.mxu0 0.0
        %4273 = vmatprep.subr.mxu0 0.0
        %4274 = vmatpush1.msra.mxu0 0.0
        %4275 = vmatprep.subr.mxu0 0.0
        %4276 = vmatpush1.msra.mxu0 0.0
        %4277 = vmatprep.subr.mxu0 0.0
        %4278 = vmatpush1.msra.mxu0 0.0
        %4279 = vmatprep.subr.mxu0 0.0
        %4280 = vmatpush1.msra.mxu0 0.0
        %4281 = vmatprep.subr.mxu0 0.0
        %4282 = vmatpush1.msra.mxu0 0.0
        %4283 = vmatprep.subr.mxu0 0.0
        %4284 = vmatpush1.msra.mxu0 0.0
        %4285 = vmatprep.subr.mxu0 0.0
        %4286 = vmatpush1.msra.mxu0 0.0
        %4287 = vmatprep.subr.mxu0 0.0
        %4288 = vmatpush1.msra.mxu0 0.0
        %4289 = vmatprep.subr.mxu0 0.0
        %4290 = vmatpush1.msra.mxu0 0.0
        %4291 = vmatprep.subr.mxu0 0.0
        %4292 = vmatpush1.msra.mxu0 0.0
        %4293 = vmatprep.subr.mxu0 0.0
        %4294 = vmatpush1.msra.mxu0 0.0
        %4295 = vmatprep.subr.mxu0 0.0
        %4296 = vmatpush1.msra.mxu0 0.0
        %4297 = vmatprep.subr.mxu0 0.0
        %4298 = vmatpush1.msra.mxu0 0.0
        %4299 = vmatprep.subr.mxu0 0.0
        %4300 = vmatpush1.msra.mxu0 0.0
        %4301 = vmatprep.subr.mxu0 0.0
        %4302 = vmatpush1.msra.mxu0 0.0
        %4303 = vmatprep.subr.mxu0 0.0
        %4304 = vmatpush1.msra.mxu0 0.0
        %4305 = vmatprep.subr.mxu0 0.0
        %4306 = vmatpush1.msra.mxu0 0.0
        %4307 = vmatprep.subr.mxu0 0.0
        %4308 = vmatpush1.msra.mxu0 0.0
        %4309 = vmatprep.subr.mxu0 0.0
        %4310 = vmatpush1.msra.mxu0 0.0
        %4311 = vmatprep.subr.mxu0 0.0
        %4312 = vmatpush1.msra.mxu0 0.0
        %4313 = vmatprep.subr.mxu0 0.0
        %4314 = vmatpush1.msra.mxu0 0.0
        %4315 = vmatprep.subr.mxu0 0.0
        %4316 = vmatpush1.msra.mxu0 0.0
        %4317 = vmatprep.mubr.f32.mxu0 0.0
        %4318 = vmatmul.mubr.f32.gmra.mrb[0].mxu0 %v4251
        %v4319 = vpop.f32.mrb[0].mxu0
        %v4320 = vadd.f32 %v4248, %v4319
        %v4321 = vpop.f32.mrb[0].mxu0
        %4322 = vdwg.mxu0
        %v4324 = vsel %vm1991, %v4231, 0
        %v4327 = vsel %vm1991, %v4236, 0
        %v4330 = vsel %vm1991, %v4320, 0
        %4332 = vmatprep.subr.mxu0 0.0
        %4333 = vmatpush1.xpose.msra.mxu0 %v4330
        %4334 = vmatprep.subr.mxu0 0.0
        %4335 = vmatpush1.xpose.msra.mxu0 0.0
        %4336 = vmatprep.subr.mxu0 0.0
        %4337 = vmatpush1.xpose.msra.mxu0 0.0
        %4338 = vmatprep.subr.mxu0 0.0
        %4339 = vmatpush1.xpose.msra.mxu0 0.0
        %4340 = vmatprep.subr.mxu0 0.0
        %4341 = vmatpush1.xpose.msra.mxu0 0.0
        %4342 = vmatprep.subr.mxu0 0.0
        %4343 = vmatpush1.xpose.msra.mxu0 0.0
        %4344 = vmatprep.subr.mxu0 0.0
        %4345 = vmatpush1.xpose.msra.mxu0 0.0
        %4346 = vmatprep.subr.mxu0 0.0
        %4347 = vmatpush1.xpose.msra.mxu0 0.0
        %4348 = vmatprep.subr.mxu0 0.0
        %4349 = vmatpush1.xpose.msra.mxu0 0.0
        %4350 = vmatprep.subr.mxu0 0.0
        %4351 = vmatpush1.xpose.msra.mxu0 0.0
        %4352 = vmatprep.subr.mxu0 0.0
        %4353 = vmatpush1.xpose.msra.mxu0 0.0
        %4354 = vmatprep.subr.mxu0 0.0
        %4355 = vmatpush1.xpose.msra.mxu0 0.0
        %4356 = vmatprep.subr.mxu0 0.0
        %4357 = vmatpush1.xpose.msra.mxu0 0.0
        %4358 = vmatprep.subr.mxu0 0.0
        %4359 = vmatpush1.xpose.msra.mxu0 0.0
        %4360 = vmatprep.subr.mxu0 0.0
        %4361 = vmatpush1.xpose.msra.mxu0 0.0
        %4362 = vmatprep.subr.mxu0 0.0
        %4363 = vmatpush1.xpose.msra.mxu0 0.0
        %4364 = vmatprep.subr.mxu0 0.0
        %4365 = vmatpush1.xpose.msra.mxu0 0.0
        %4366 = vmatprep.subr.mxu0 0.0
        %4367 = vmatpush1.xpose.msra.mxu0 0.0
        %4368 = vmatprep.subr.mxu0 0.0
        %4369 = vmatpush1.xpose.msra.mxu0 0.0
        %4370 = vmatprep.subr.mxu0 0.0
        %4371 = vmatpush1.xpose.msra.mxu0 0.0
        %4372 = vmatprep.subr.mxu0 0.0
        %4373 = vmatpush1.xpose.msra.mxu0 0.0
        %4374 = vmatprep.subr.mxu0 0.0
        %4375 = vmatpush1.xpose.msra.mxu0 0.0
        %4376 = vmatprep.subr.mxu0 0.0
        %4377 = vmatpush1.xpose.msra.mxu0 0.0
        %4378 = vmatprep.subr.mxu0 0.0
        %4379 = vmatpush1.xpose.msra.mxu0 0.0
        %4380 = vmatprep.subr.mxu0 0.0
        %4381 = vmatpush1.xpose.msra.mxu0 0.0
        %4382 = vmatprep.subr.mxu0 0.0
        %4383 = vmatpush1.xpose.msra.mxu0 0.0
        %4384 = vmatprep.subr.mxu0 0.0
        %4385 = vmatpush1.xpose.msra.mxu0 0.0
        %4386 = vmatprep.subr.mxu0 0.0
        %4387 = vmatpush1.xpose.msra.mxu0 0.0
        %4388 = vmatprep.subr.mxu0 0.0
        %4389 = vmatpush1.xpose.msra.mxu0 0.0
        %4390 = vmatprep.subr.mxu0 0.0
        %4391 = vmatpush1.xpose.msra.mxu0 0.0
        %4392 = vmatprep.subr.mxu0 0.0
        %4393 = vmatpush1.xpose.msra.mxu0 0.0
        %4394 = vmatprep.subr.mxu0 0.0
        %4395 = vmatpush1.xpose.msra.mxu0 0.0
        %4396 = vmatprep.mubr.f32.mxu0 0.0
        %4397 = vmatmul.mubr.f32.gmra.mrb[0].mxu0 %v4324
        %v4398 = vpop.f32.mrb[0].mxu0
        %v4399 = vadd.f32 0.0, %v4398
        %v4400 = vpop.f32.mrb[0].mxu0
        %4401 = vmatprep.mubr.f32.mxu0 0.0
        %4402 = vmatmul.mubr.f32.gmra.mrb[0].mxu0 %v4327
        %v4403 = vpop.f32.mrb[0].mxu0
        %v4404 = vadd.f32 0.0, %v4403
        %v4405 = vpop.f32.mrb[0].mxu0
        %4406 = vdwg.mxu0
        %v4407 = vmul.f32 %v4399, 0.17677669
        %v4408 = vmul.f32 %v4404, 0.17677669
        %v4409 = vsel %vm2905, %v4407, -inf
        %4410 = vmax.xlane.f32.xlu0 %v4409
        %v4411 = vpop.xlane.xlu0 %4410
        %v4412 = vsel %vm2905, %v4408, -inf
        %4413 = vmax.xlane.f32.xlu0 %v4412
        %v4414 = vpop.xlane.xlu0 %4413
        %v4415 = vsub.f32 %v4407, %v4411
        %v4416 = vsub.f32 %v4408, %v4414
        %v4417 = vmul.f32 %v4415, 1.442695
        %v4418 = vpow.pop %v4417
        %v4419 = vmul.f32 %v4416, 1.442695
        %v4420 = vpow.pop %v4419
        %v4421 = vsel %vm2905, %v4418, 0.0
        %4422 = vadd.xlane.f32.xlu0 %v4421
        %v4423 = vpop.xlane.xlu0 %4422
        %v4424 = vsel %vm2905, %v4420, 0.0
        %4425 = vadd.xlane.f32.xlu0 %v4424
        %v4426 = vpop.xlane.xlu0 %4425
        %4427 = vrot.lane.b32.xlu0 %v4320, 96
        %v4428 = vpop.permute.xlu0 %4427
        %v4431 = vsel %vm2905, %v4418, 0
        %v4434 = vsel %vm2905, %v4420, 0
        %4436 = vmatprep.subr.mxu0 0.0
        %4437 = vmatpush1.msra.mxu0 %v4428
        %4438 = vmatprep.subr.mxu0 0.0
        %4439 = vmatpush1.msra.mxu0 0.0
        %4440 = vmatprep.subr.mxu0 0.0
        %4441 = vmatpush1.msra.mxu0 0.0
        %4442 = vmatprep.subr.mxu0 0.0
        %4443 = vmatpush1.msra.mxu0 0.0
        %4444 = vmatprep.subr.mxu0 0.0
        %4445 = vmatpush1.msra.mxu0 0.0
        %4446 = vmatprep.subr.mxu0 0.0
        %4447 = vmatpush1.msra.mxu0 0.0
        %4448 = vmatprep.subr.mxu0 0.0
        %4449 = vmatpush1.msra.mxu0 0.0
        %4450 = vmatprep.subr.mxu0 0.0
        %4451 = vmatpush1.msra.mxu0 0.0
        %4452 = vmatprep.subr.mxu0 0.0
        %4453 = vmatpush1.msra.mxu0 0.0
        %4454 = vmatprep.subr.mxu0 0.0
        %4455 = vmatpush1.msra.mxu0 0.0
        %4456 = vmatprep.subr.mxu0 0.0
        %4457 = vmatpush1.msra.mxu0 0.0
        %4458 = vmatprep.subr.mxu0 0.0
        %4459 = vmatpush1.msra.mxu0 0.0
        %4460 = vmatprep.subr.mxu0 0.0
        %4461 = vmatpush1.msra.mxu0 0.0
        %4462 = vmatprep.subr.mxu0 0.0
        %4463 = vmatpush1.msra.mxu0 0.0
        %4464 = vmatprep.subr.mxu0 0.0
        %4465 = vmatpush1.msra.mxu0 0.0
        %4466 = vmatprep.subr.mxu0 0.0
        %4467 = vmatpush1.msra.mxu0 0.0
        %4468 = vmatprep.subr.mxu0 0.0
        %4469 = vmatpush1.msra.mxu0 0.0
        %4470 = vmatprep.subr.mxu0 0.0
        %4471 = vmatpush1.msra.mxu0 0.0
        %4472 = vmatprep.subr.mxu0 0.0
        %4473 = vmatpush1.msra.mxu0 0.0
        %4474 = vmatprep.subr.mxu0 0.0
        %4475 = vmatpush1.msra.mxu0 0.0
        %4476 = vmatprep.subr.mxu0 0.0
        %4477 = vmatpush1.msra.mxu0 0.0
        %4478 = vmatprep.subr.mxu0 0.0
        %4479 = vmatpush1.msra.mxu0 0.0
        %4480 = vmatprep.subr.mxu0 0.0
        %4481 = vmatpush1.msra.mxu0 0.0
        %4482 = vmatprep.subr.mxu0 0.0
        %4483 = vmatpush1.msra.mxu0 0.0
        %4484 = vmatprep.subr.mxu0 0.0
        %4485 = vmatpush1.msra.mxu0 0.0
        %4486 = vmatprep.subr.mxu0 0.0
        %4487 = vmatpush1.msra.mxu0 0.0
        %4488 = vmatprep.subr.mxu0 0.0
        %4489 = vmatpush1.msra.mxu0 0.0
        %4490 = vmatprep.subr.mxu0 0.0
        %4491 = vmatpush1.msra.mxu0 0.0
        %4492 = vmatprep.subr.mxu0 0.0
        %4493 = vmatpush1.msra.mxu0 0.0
        %4494 = vmatprep.subr.mxu0 0.0
        %4495 = vmatpush1.msra.mxu0 0.0
        %4496 = vmatprep.subr.mxu0 0.0
        %4497 = vmatpush1.msra.mxu0 0.0
        %4498 = vmatprep.subr.mxu0 0.0
        %4499 = vmatpush1.msra.mxu0 0.0
        %4500 = vmatprep.mubr.f32.mxu0 0.0
        %4501 = vmatmul.mubr.f32.gmra.mrb[0].mxu0 %v4431
        %v4502 = vpop.f32.mrb[0].mxu0
        %v4503 = vadd.f32 0.0, %v4502
        %v4504 = vpop.f32.mrb[0].mxu0
        %4505 = vmatprep.mubr.f32.mxu0 0.0
        %4506 = vmatmul.mubr.f32.gmra.mrb[0].mxu0 %v4434
        %v4507 = vpop.f32.mrb[0].mxu0
        %v4508 = vadd.f32 0.0, %v4507
        %v4509 = vpop.f32.mrb[0].mxu0
        %4510 = vdwg.mxu0
        %v4511 = vrcp.pop %v4423
        %v4512 = vrcp.pop %v4426
        %v4513 = vmul.f32 %v4503, %v4511
        %v4514 = vmul.f32 %v4508, %v4512
        %v4515 = vld [vmem:[%s107] sm:$0xff]
        %v4516 = vld [vmem:[%s107 + $0x8] sm:$0xff]
        %v4517 = vld [vmem:[%s107 + $0x10] sm:$0xff]
        %v4518 = vld [vmem:[%s107 + $0x18] sm:$0xff]
        %v4519 = vld [vmem:[%s109] sm:$0x1]
        %v4521 = vlaneseq
        %v4522 = vshrl.u32 %v4521, 7
        %v4523 = vsub.s32 0, %v4522
        %v4524 = vrot.slane %v4519, %v4523
        %v4527 = vsel %vm1991, %v4513, 0
        %v4530 = vsel %vm1991, %v4514, 0
        %4532 = vmatprep.subr.mxu0 0.0
        %4533 = vmatpush1.msra.mxu0 %v4515
        %4534 = vmatprep.subr.mxu0 0.0
        %4535 = vmatpush1.msra.mxu0 %v4516
        %4536 = vmatprep.subr.mxu0 0.0
        %4537 = vmatpush1.msra.mxu0 %v4517
        %4538 = vmatprep.subr.mxu0 0.0
        %4539 = vmatpush1.msra.mxu0 %v4518
        %4540 = vmatprep.subr.mxu0 0.0
        %4541 = vmatpush1.msra.mxu0 0.0
        %4542 = vmatprep.subr.mxu0 0.0
        %4543 = vmatpush1.msra.mxu0 0.0
        %4544 = vmatprep.subr.mxu0 0.0
        %4545 = vmatpush1.msra.mxu0 0.0
        %4546 = vmatprep.subr.mxu0 0.0
        %4547 = vmatpush1.msra.mxu0 0.0
        %4548 = vmatprep.subr.mxu0 0.0
        %4549 = vmatpush1.msra.mxu0 0.0
        %4550 = vmatprep.subr.mxu0 0.0
        %4551 = vmatpush1.msra.mxu0 0.0
        %4552 = vmatprep.subr.mxu0 0.0
        %4553 = vmatpush1.msra.mxu0 0.0
        %4554 = vmatprep.subr.mxu0 0.0
        %4555 = vmatpush1.msra.mxu0 0.0
        %4556 = vmatprep.subr.mxu0 0.0
        %4557 = vmatpush1.msra.mxu0 0.0
        %4558 = vmatprep.subr.mxu0 0.0
        %4559 = vmatpush1.msra.mxu0 0.0
        %4560 = vmatprep.subr.mxu0 0.0
        %4561 = vmatpush1.msra.mxu0 0.0
        %4562 = vmatprep.subr.mxu0 0.0
        %4563 = vmatpush1.msra.mxu0 0.0
        %4564 = vmatprep.subr.mxu0 0.0
        %4565 = vmatpush1.msra.mxu0 0.0
        %4566 = vmatprep.subr.mxu0 0.0
        %4567 = vmatpush1.msra.mxu0 0.0
        %4568 = vmatprep.subr.mxu0 0.0
        %4569 = vmatpush1.msra.mxu0 0.0
        %4570 = vmatprep.subr.mxu0 0.0
        %4571 = vmatpush1.msra.mxu0 0.0
        %4572 = vmatprep.subr.mxu0 0.0
        %4573 = vmatpush1.msra.mxu0 0.0
        %4574 = vmatprep.subr.mxu0 0.0
        %4575 = vmatpush1.msra.mxu0 0.0
        %4576 = vmatprep.subr.mxu0 0.0
        %4577 = vmatpush1.msra.mxu0 0.0
        %4578 = vmatprep.subr.mxu0 0.0
        %4579 = vmatpush1.msra.mxu0 0.0
        %4580 = vmatprep.subr.mxu0 0.0
        %4581 = vmatpush1.msra.mxu0 0.0
        %4582 = vmatprep.subr.mxu0 0.0
        %4583 = vmatpush1.msra.mxu0 0.0
        %4584 = vmatprep.subr.mxu0 0.0
        %4585 = vmatpush1.msra.mxu0 0.0
        %4586 = vmatprep.subr.mxu0 0.0
        %4587 = vmatpush1.msra.mxu0 0.0
        %4588 = vmatprep.subr.mxu0 0.0
        %4589 = vmatpush1.msra.mxu0 0.0
        %4590 = vmatprep.subr.mxu0 0.0
        %4591 = vmatpush1.msra.mxu0 0.0
        %4592 = vmatprep.subr.mxu0 0.0
        %4593 = vmatpush1.msra.mxu0 0.0
        %4594 = vmatprep.subr.mxu0 0.0
        %4595 = vmatpush1.msra.mxu0 0.0
        %4596 = vmatprep.mubr.f32.mxu0 0.0
        %4597 = vmatmul.mubr.f32.gmra.mrb[0].mxu0 %v4527
        %v4598 = vpop.f32.mrb[0].mxu0
        %v4599 = vadd.f32 %v4524, %v4598
        %v4600 = vpop.f32.mrb[0].mxu0
        %4601 = vmatprep.mubr.f32.mxu0 0.0
        %4602 = vmatmul.mubr.f32.gmra.mrb[0].mxu0 %v4530
        %v4603 = vpop.f32.mrb[0].mxu0
        %v4604 = vadd.f32 %v4524, %v4603
        %v4605 = vpop.f32.mrb[0].mxu0
        %4606 = vdwg.mxu0
        %v4607 = vadd.f32 %v4066, %v4599
        %v4608 = vadd.f32 %v4071, %v4604
        %v4609 = vld [vmem:[%s111] sm:$0xff]
        %v4610 = vld [vmem:[%s111 + $0x8] sm:$0xff]
        %v4611 = vld [vmem:[%s111 + $0x10] sm:$0xff]
        %v4612 = vld [vmem:[%s111 + $0x18] sm:$0xff]
        %v4613 = vld [vmem:[%s113] sm:$0x1]
        %v4615 = vlaneseq
        %v4616 = vshrl.u32 %v4615, 7
        %v4617 = vsub.s32 0, %v4616
        %v4618 = vrot.slane %v4613, %v4617
        %v4621 = vsel %vm1991, %v4607, 0
        %v4624 = vsel %vm1991, %v4608, 0
        %4626 = vmatprep.subr.mxu0 0.0
        %4627 = vmatpush1.msra.mxu0 %v4609
        %4628 = vmatprep.subr.mxu0 0.0
        %4629 = vmatpush1.msra.mxu0 %v4610
        %4630 = vmatprep.subr.mxu0 0.0
        %4631 = vmatpush1.msra.mxu0 %v4611
        %4632 = vmatprep.subr.mxu0 0.0
        %4633 = vmatpush1.msra.mxu0 %v4612
        %4634 = vmatprep.subr.mxu0 0.0
        %4635 = vmatpush1.msra.mxu0 0.0
        %4636 = vmatprep.subr.mxu0 0.0
        %4637 = vmatpush1.msra.mxu0 0.0
        %4638 = vmatprep.subr.mxu0 0.0
        %4639 = vmatpush1.msra.mxu0 0.0
        %4640 = vmatprep.subr.mxu0 0.0
        %4641 = vmatpush1.msra.mxu0 0.0
        %4642 = vmatprep.subr.mxu0 0.0
        %4643 = vmatpush1.msra.mxu0 0.0
        %4644 = vmatprep.subr.mxu0 0.0
        %4645 = vmatpush1.msra.mxu0 0.0
        %4646 = vmatprep.subr.mxu0 0.0
        %4647 = vmatpush1.msra.mxu0 0.0
        %4648 = vmatprep.subr.mxu0 0.0
        %4649 = vmatpush1.msra.mxu0 0.0
        %4650 = vmatprep.subr.mxu0 0.0
        %4651 = vmatpush1.msra.mxu0 0.0
        %4652 = vmatprep.subr.mxu0 0.0
        %4653 = vmatpush1.msra.mxu0 0.0
        %4654 = vmatprep.subr.mxu0 0.0
        %4655 = vmatpush1.msra.mxu0 0.0
        %4656 = vmatprep.subr.mxu0 0.0
        %4657 = vmatpush1.msra.mxu0 0.0
        %4658 = vmatprep.subr.mxu0 0.0
        %4659 = vmatpush1.msra.mxu0 0.0
        %4660 = vmatprep.subr.mxu0 0.0
        %4661 = vmatpush1.msra.mxu0 0.0
        %4662 = vmatprep.subr.mxu0 0.0
        %4663 = vmatpush1.msra.mxu0 0.0
        %4664 = vmatprep.subr.mxu0 0.0
        %4665 = vmatpush1.msra.mxu0 0.0
        %4666 = vmatprep.subr.mxu0 0.0
        %4667 = vmatpush1.msra.mxu0 0.0
        %4668 = vmatprep.subr.mxu0 0.0
        %4669 = vmatpush1.msra.mxu0 0.0
        %4670 = vmatprep.subr.mxu0 0.0
        %4671 = vmatpush1.msra.mxu0 0.0
        %4672 = vmatprep.subr.mxu0 0.0
        %4673 = vmatpush1.msra.mxu0 0.0
        %4674 = vmatprep.subr.mxu0 0.0
        %4675 = vmatpush1.msra.mxu0 0.0
        %4676 = vmatprep.subr.mxu0 0.0
        %4677 = vmatpush1.msra.mxu0 0.0
        %4678 = vmatprep.subr.mxu0 0.0
        %4679 = vmatpush1.msra.mxu0 0.0
        %4680 = vmatprep.subr.mxu0 0.0
        %4681 = vmatpush1.msra.mxu0 0.0
        %4682 = vmatprep.subr.mxu0 0.0
        %4683 = vmatpush1.msra.mxu0 0.0
        %4684 = vmatprep.subr.mxu0 0.0
        %4685 = vmatpush1.msra.mxu0 0.0
        %4686 = vmatprep.subr.mxu0 0.0
        %4687 = vmatpush1.msra.mxu0 0.0
        %4688 = vmatprep.subr.mxu0 0.0
        %4689 = vmatpush1.msra.mxu0 0.0
        %4690 = vmatprep.mubr.f32.mxu0 0.0
        %4691 = vmatmul.mubr.f32.gmra.mrb[0].mxu0 %v4621
        %v4692 = vpop.f32.mrb[0].mxu0
        %v4693 = vadd.f32 %v4618, %v4692
        %v4694 = vpop.f32.mrb[0].mxu0
        %4695 = vmatprep.mubr.f32.mxu0 0.0
        %4696 = vmatmul.mubr.f32.gmra.mrb[0].mxu0 %v4624
        %v4697 = vpop.f32.mrb[0].mxu0
        %v4698 = vadd.f32 %v4618, %v4697
        %v4699 = vpop.f32.mrb[0].mxu0
        %4700 = vdwg.mxu0
        %4701 = vst.msk [vmem:[%s1982] sm:$0xff] %vm1991, %v4693
        %4702 = vst.msk [vmem:[%s1982 + $0x8] sm:$0xff] %vm1991, %v4698
        %s4703 = sand.u32 %s1352, 1
        %s4704 = scalar_lea.sflag [#allocation4], %s4703
        %s4705 = sand.u32 %s1352, 1
        %s4706 = smul.addr %s4705, 16
        %s4707 = scalar_lea.vmem [#allocation40], %s4706
        // Predicated region
        $region345: #{forward.1} parent=247 // pred_check
          %p4708 = pneg %p1362
        $region346: #{forward.1} parent=247 // pred_check_branch
          %4710 = sbr.rel (%p4708) target = $region348
        $region347: #{forward.1} parent=247 // pred_region
          %s4712 = ssub.s32 256, 256
          %4713 = vsyncadd %s4704, %s4712
          %s4714 = smul.addr %s142, 2
          %s4715 = smul.addr %s4714, 128
          %s4716 = scalar_lea.hbm %s115, %s4715
          %s4717 = sshll.u32 %s4707, 4
          %s4718 = int_to_ptr.vmem [resolvable:$true] %s4717
          %4723 = dma.vmem_to_hbm [thread:$0]  %s4718, 256, %s4716, %s4704, 128, 128, 8
        $region348: #{forward.1} parent=247 // pred_fallthru
          _
      $region248: #{forward.1} parent=5 // pred_fallthru
        _
      %p4724 = scmp.le.s32.totalorder 2, %s137
      // Predicated region
      $region349: #{forward.1} parent=5 // pred_check
        %p4725 = pneg %p4724
      $region350: #{forward.1} parent=5 // pred_check_branch
        %4727 = sbr.rel (%p4725) target = $region352
      $region351: #{forward.1} parent=5 // pred_region
        %s4728 = ssub.s32 %s137, 2
        // Predicated region
        $region353: #{forward.1} parent=351 // pred_check
          %p4729 = pneg %p1368
        $region354: #{forward.1} parent=351 // pred_check_branch
          %4731 = sbr.rel (%p4729) target = $region356
        $region355: #{forward.1} parent=351 // pred_region
          %s4732 = sand.u32 %s1353, 1
          %s4733 = scalar_lea.sflag [#allocation4], %s4732
          %s4734 = sand.u32 %s1353, 1
          %s4735 = smul.addr %s4734, 16
          %s4736 = scalar_lea.vmem [#allocation40], %s4735
          %4737 = dma.done %s4733, 256
        $region356: #{forward.1} parent=351 // pred_fallthru
          _
      $region352: #{forward.1} parent=5 // pred_fallthru
        _
    $region6: #{forward.1} parent=1 // loop_footer
      %s141 = sadd.s32 1, %s137
    $region7: #{forward.1} parent=1 // loop_footer_branch
      %136 = sbr.rel target = $region3
    $region8: #{forward.1} parent=1 // loop_exit
      _
    %4738 = vsyncpa [#allocation3], 1
    %s4739 = scalar_lea.sflag [#allocation3], 1
    %4740 = vsyncpa %s4739, 1
    %4741 = vsyncpa [#allocation6], 1
    %4742 = vsyncpa [#allocation9], 1
    %4743 = vsyncpa [#allocation12], 1
    %4744 = vsyncpa [#allocation15], 1
    %4745 = vsyncpa [#allocation18], 1
    %4746 = vsyncpa [#allocation21], 1
    %4747 = vsyncpa [#allocation24], 1
    %4748 = vsyncpa [#allocation27], 1
    %4749 = vsyncpa [#allocation30], 1
    %4750 = vsyncpa [#allocation33], 1
    %4751 = vsyncpa [#allocation36], 1
    %4752 = vsyncpa [#allocation39], 1
    %4753 = vsyncpa [#allocation4], 1
    %s4754 = scalar_lea.sflag [#allocation4], 1
    %4755 = vsyncpa %s4754, 1

</llo_original>
